<compile_context>
chip_gen: v6e
topology: v6e:2x2x1
jax: 0.10.0
libtpu: 0.0.40
codegen_flags: <defaults>
</compile_context>

<pallas_src>
import jax
import jax.numpy as jnp
from jax.experimental import pallas as pl
from jax.experimental.pallas import tpu as pltpu

# ---------------- small synthetic KoBERT config ----------------
VOCAB_SIZE = 64      # classifier / word-embedding vocab
VOCAB_PAD = 128      # lane-dense classifier output width (>=128)
HIDDEN = 32          # bert.config.hidden_size
N_LAYERS = 2
N_HEADS = 2
HEAD_DIM = HIDDEN // N_HEADS
INTERMEDIATE = 64
MAX_POS = 16
TYPE_VOCAB = 2
BATCH = 2
SEQ = 8
LN_EPS = 1e-12


# ---------------- fused whole-model Pallas kernel (one batch per grid step) ----------------
def _kobert_kernel(x_ref, mask_ref, emb_g_ref, emb_b_ref,
                   wqkv_ref, bqkv_ref, wo_ref, bo_ref, ln1g_ref, ln1b_ref,
                   w1_ref, b1_ref, w2_ref, b2_ref, ln2g_ref, ln2b_ref,
                   pw_ref, pb_ref, cw_ref, cb_ref,
                   o_ref):
    f32 = jnp.float32
    bf16 = jnp.bfloat16

    def layer_norm(x, g, b):
        # single-pass variance: mean(x*x) - mu*mu (one cross-lane reduction saved)
        mu = jnp.mean(x, axis=-1, keepdims=True)
        var = jnp.maximum(jnp.mean(x * x, axis=-1, keepdims=True) - mu * mu, 0.0)
        return (x - mu) * jax.lax.rsqrt(var + LN_EPS) * g + b

    # ---- embedding LayerNorm for this batch element ----
    x = layer_norm(x_ref[0].astype(f32), emb_g_ref[...], emb_b_ref[...])       # (S, H)

    # ---- additive attention mask, computed once, broadcast over (head, q, k) ----
    bias = ((1.0 - mask_ref[0].astype(f32)) * -10000.0)[None, :, :]            # (1, 1, S)

    for l in range(N_LAYERS):
        # ---- fused QKV projection (1/sqrt(Dh) folded into the Q block) ----
        qkv = jnp.dot(x.astype(bf16), wqkv_ref[l],
                      preferred_element_type=f32) + bqkv_ref[l]                # (S, 3H) f32
        qkv = qkv.astype(bf16)

        # ---- batched multi-head attention (one einsum per matmul, all heads) ----
        q = jnp.swapaxes(qkv[:, 0 * HIDDEN:1 * HIDDEN].reshape(SEQ, N_HEADS, HEAD_DIM), 0, 1)
        k = jnp.swapaxes(qkv[:, 1 * HIDDEN:2 * HIDDEN].reshape(SEQ, N_HEADS, HEAD_DIM), 0, 1)
        v = jnp.swapaxes(qkv[:, 2 * HIDDEN:3 * HIDDEN].reshape(SEQ, N_HEADS, HEAD_DIM), 0, 1)
        scores = jnp.einsum("hqd,hkd->hqk", q, k,
                            preferred_element_type=f32)                        # (NH, S, S)
        scores = scores + bias
        scores = scores - jnp.max(scores, axis=-1, keepdims=True)
        p = jnp.exp(scores)
        p = p * pl.reciprocal(jnp.sum(p, axis=-1, keepdims=True), approx=True)
        ctx = jnp.einsum("hqk,hkd->hqd", p.astype(bf16), v,
                         preferred_element_type=f32)                           # (NH, S, Dh)
        ctx = jnp.swapaxes(ctx, 0, 1).reshape(SEQ, HIDDEN)                     # (S, H)

        # ---- output projection + residual + LayerNorm (fused epilogue) ----
        attn_out = jnp.dot(ctx.astype(bf16), wo_ref[l],
                           preferred_element_type=f32) + bo_ref[l]
        x = layer_norm(x + attn_out, ln1g_ref[l], ln1b_ref[l])

        # ---- feed forward + residual + LayerNorm (fused) ----
        # TODO(synk): HF KoBERT uses exact erf-GELU; tanh-approx used here.
        h1 = jnp.dot(x.astype(bf16), w1_ref[l],
                     preferred_element_type=f32) + b1_ref[l]
        h1 = jax.nn.gelu(h1, approximate=True)
        ffn_out = jnp.dot(h1.astype(bf16), w2_ref[l],
                          preferred_element_type=f32) + b2_ref[l]
        x = layer_norm(x + ffn_out, ln2g_ref[l], ln2b_ref[l])

    # ---- pooler: tanh(W @ hidden[CLS] + b) == outputs[1] ----
    cls = x[0:1, :]                                                            # (1, H)
    pooled = jnp.tanh(jnp.dot(cls.astype(bf16), pw_ref[...],
                              preferred_element_type=f32) + pb_ref[...])

    # ---- classifier (lane-dense: vocab zero-padded to 128) ----
    logits = jnp.dot(pooled.astype(bf16), cw_ref[...],
                     preferred_element_type=f32) + cb_ref[...]                 # (1, VOCAB_PAD)
    o_ref[0] = logits.astype(o_ref.dtype)


# ---------------- deterministic parameter init ----------------
def init_params(key):
    def dense(key, fan_in, fan_out):
        kw, _ = jax.random.split(key)
        w = jax.random.normal(kw, (fan_in, fan_out), jnp.float32) * 0.02
        b = jnp.zeros((fan_out,), jnp.float32)
        return w, b

    keys = jax.random.split(key, 8 + N_LAYERS)
    params = {}
    params["word_emb"] = jax.random.normal(keys[0], (VOCAB_SIZE, HIDDEN), jnp.float32) * 0.02
    params["pos_emb"] = jax.random.normal(keys[1], (MAX_POS, HIDDEN), jnp.float32) * 0.02
    params["type_emb"] = jax.random.normal(keys[2], (TYPE_VOCAB, HIDDEN), jnp.float32) * 0.02
    params["emb_ln_g"] = jnp.ones((HIDDEN,), jnp.float32)
    params["emb_ln_b"] = jnp.zeros((HIDDEN,), jnp.float32)

    layers = []
    for l in range(N_LAYERS):
        lkeys = jax.random.split(keys[3 + l], 8)
        layer = {
            "wq": dense(lkeys[0], HIDDEN, HIDDEN),
            "wk": dense(lkeys[1], HIDDEN, HIDDEN),
            "wv": dense(lkeys[2], HIDDEN, HIDDEN),
            "wo": dense(lkeys[3], HIDDEN, HIDDEN),
            "attn_ln_g": jnp.ones((HIDDEN,), jnp.float32),
            "attn_ln_b": jnp.zeros((HIDDEN,), jnp.float32),
            "ffn_in": dense(lkeys[4], HIDDEN, INTERMEDIATE),
            "ffn_out": dense(lkeys[5], INTERMEDIATE, HIDDEN),
            "ffn_ln_g": jnp.ones((HIDDEN,), jnp.float32),
            "ffn_ln_b": jnp.zeros((HIDDEN,), jnp.float32),
        }
        layers.append(layer)
    params["layers"] = layers

    params["pooler"] = dense(keys[3 + N_LAYERS], HIDDEN, HIDDEN)
    params["classifier"] = dense(keys[4 + N_LAYERS], HIDDEN, VOCAB_SIZE)
    return params


# ---------------- one-time weight prep: stack layers, fuse QKV, fold scale, bf16 ----------------
def prepare_params(params):
    layers = params["layers"]
    scale = 1.0 / (HEAD_DIM ** 0.5)
    bf16 = jnp.bfloat16

    def stack_w(name):
        return jnp.stack([l[name][0] for l in layers]).astype(bf16)        # (L, K, N)

    def stack_b(name):
        return jnp.stack([l[name][1][None, :] for l in layers])            # (L, 1, N) f32

    wqkv = jnp.stack([
        jnp.concatenate([l["wq"][0] * scale, l["wk"][0], l["wv"][0]], axis=1)
        for l in layers]).astype(bf16)                                      # (L, H, 3H)
    bqkv = jnp.stack([
        jnp.concatenate([l["wq"][1] * scale, l["wk"][1], l["wv"][1]], axis=0)[None, :]
        for l in layers])                                                   # (L, 1, 3H)

    # lane-dense classifier: zero-pad vocab columns to VOCAB_PAD
    cls_w = jnp.zeros((HIDDEN, VOCAB_PAD), jnp.float32)
    cls_w = cls_w.at[:, :VOCAB_SIZE].set(params["classifier"][0]).astype(bf16)
    cls_b = jnp.zeros((1, VOCAB_PAD), jnp.float32)
    cls_b = cls_b.at[0, :VOCAB_SIZE].set(params["classifier"][1])

    return {
        "word_emb": params["word_emb"],
        "pos_emb": params["pos_emb"],
        "type_emb": params["type_emb"],
        "emb_ln_g": params["emb_ln_g"][None, :],
        "emb_ln_b": params["emb_ln_b"][None, :],
        "wqkv": wqkv, "bqkv": bqkv,
        "wo": stack_w("wo"), "bo": stack_b("wo"),
        "ln1_g": jnp.stack([l["attn_ln_g"][None, :] for l in layers]),
        "ln1_b": jnp.stack([l["attn_ln_b"][None, :] for l in layers]),
        "w1": stack_w("ffn_in"), "b1": stack_b("ffn_in"),
        "w2": stack_w("ffn_out"), "b2": stack_b("ffn_out"),
        "ln2_g": jnp.stack([l["ffn_ln_g"][None, :] for l in layers]),
        "ln2_b": jnp.stack([l["ffn_ln_b"][None, :] for l in layers]),
        "pooler_w": params["pooler"][0].astype(bf16),
        "pooler_b": params["pooler"][1][None, :],
        "cls_w": cls_w,
        "cls_b": cls_b,
    }


# ---------------- model forward (BERT + classifier) ----------------
def kobert_forward(prep, input_ids, attention_mask, token_type_ids):
    B, S = input_ids.shape

    # ---- embeddings (table gathers stay as plain-JAX glue) ----
    word = jnp.take(prep["word_emb"], input_ids, axis=0)            # (B, S, H)
    pos = prep["pos_emb"][:S][None, :, :]                           # (1, S, H)
    typ = jnp.take(prep["type_emb"], token_type_ids, axis=0)        # (B, S, H)
    x = word + pos + typ                                            # (B, S, H)

    mask = attention_mask.astype(jnp.float32).reshape(B, 1, S)      # (B, 1, S)

    weights = [
        prep["emb_ln_g"], prep["emb_ln_b"],
        prep["wqkv"], prep["bqkv"],
        prep["wo"], prep["bo"], prep["ln1_g"], prep["ln1_b"],
        prep["w1"], prep["b1"], prep["w2"], prep["b2"],
        prep["ln2_g"], prep["ln2_b"],
        prep["pooler_w"], prep["pooler_b"],
        prep["cls_w"], prep["cls_b"],
    ]

    def resident_spec(a):
        # full-array block, same block index every grid step -> stays resident in VMEM
        nd = a.ndim
        return pl.BlockSpec(a.shape, lambda b, nd=nd: (0,) * nd)

    out = pl.pallas_call(
        _kobert_kernel,
        out_shape=jax.ShapeDtypeStruct((B, 1, VOCAB_PAD), jnp.float32),
        grid=(B,),
        in_specs=[pl.BlockSpec((1, S, HIDDEN), lambda b: (b, 0, 0)),
                  pl.BlockSpec((1, 1, S), lambda b: (b, 0, 0))]
                 + [resident_spec(a) for a in weights],
        out_specs=pl.BlockSpec((1, 1, VOCAB_PAD), lambda b: (b, 0, 0)),
        compiler_params=pltpu.CompilerParams(
            dimension_semantics=("parallel",)),   # batch axis -> both TCs on v7x
    )(x, mask, *weights)

    return out[:, 0, :VOCAB_SIZE]


# ---------------- main ----------------
if __name__ == "__main__":
    key = jax.random.PRNGKey(0)
    pkey, ikey = jax.random.split(key)

    params = init_params(pkey)
    prep = prepare_params(params)   # one-time stacking / QKV fusion / scale folding / bf16 cast

    input_ids = jax.random.randint(ikey, (BATCH, SEQ), 0, VOCAB_SIZE, dtype=jnp.int32)
    attention_mask = jnp.ones((BATCH, SEQ), dtype=jnp.int32)
    token_type_ids = jnp.zeros((BATCH, SEQ), dtype=jnp.int32)

    logits = jax.jit(kobert_forward)(prep, input_ids, attention_mask, token_type_ids)
    jax.block_until_ready(logits)
    assert logits.shape == (BATCH, VOCAB_SIZE), logits.shape
    print("KERNEL_OK")
</pallas_src>

<mosaic_0001>
module attributes {stable_mosaic.version = 11 : i64} {
  func.func @_kobert_kernel(%arg0: i32, %arg1: memref<1x8x32xf32, #tpu.memory_space<vmem>>, %arg2: memref<1x1x8xf32, #tpu.memory_space<vmem>>, %arg3: memref<1x32xf32, #tpu.memory_space<vmem>>, %arg4: memref<1x32xf32, #tpu.memory_space<vmem>>, %arg5: memref<2x32x96xbf16, #tpu.memory_space<vmem>>, %arg6: memref<2x1x96xf32, #tpu.memory_space<vmem>>, %arg7: memref<2x32x32xbf16, #tpu.memory_space<vmem>>, %arg8: memref<2x1x32xf32, #tpu.memory_space<vmem>>, %arg9: memref<2x1x32xf32, #tpu.memory_space<vmem>>, %arg10: memref<2x1x32xf32, #tpu.memory_space<vmem>>, %arg11: memref<2x32x64xbf16, #tpu.memory_space<vmem>>, %arg12: memref<2x1x64xf32, #tpu.memory_space<vmem>>, %arg13: memref<2x64x32xbf16, #tpu.memory_space<vmem>>, %arg14: memref<2x1x32xf32, #tpu.memory_space<vmem>>, %arg15: memref<2x1x32xf32, #tpu.memory_space<vmem>>, %arg16: memref<2x1x32xf32, #tpu.memory_space<vmem>>, %arg17: memref<32x32xbf16, #tpu.memory_space<vmem>>, %arg18: memref<1x32xf32, #tpu.memory_space<vmem>>, %arg19: memref<32x128xbf16, #tpu.memory_space<vmem>>, %arg20: memref<1x128xf32, #tpu.memory_space<vmem>>, %arg21: memref<1x1x128xf32, #tpu.memory_space<vmem>>) attributes {dimension_semantics = [#tpu.dimension_semantics<parallel>], iteration_bounds = array<i64: 2>, scalar_prefetch = 0 : i64, scratch_operands = 0 : i64, tpu.core_type = #tpu.core_type<tc>, window_params = [{transform_indices = @transform_0, window_bounds = array<i64: 1, 8, 32>}, {transform_indices = @transform_1, window_bounds = array<i64: 1, 1, 8>}, {pipeline_mode = #tpu.pipeline_mode<synchronous>, transform_indices = @transform_2, window_bounds = array<i64: 1, 32>}, {pipeline_mode = #tpu.pipeline_mode<synchronous>, transform_indices = @transform_3, window_bounds = array<i64: 1, 32>}, {pipeline_mode = #tpu.pipeline_mode<synchronous>, transform_indices = @transform_4, window_bounds = array<i64: 2, 32, 96>}, {pipeline_mode = #tpu.pipeline_mode<synchronous>, transform_indices = @transform_5, window_bounds = array<i64: 2, 1, 96>}, {pipeline_mode = #tpu.pipeline_mode<synchronous>, transform_indices = @transform_6, window_bounds = array<i64: 2, 32, 32>}, {pipeline_mode = #tpu.pipeline_mode<synchronous>, transform_indices = @transform_7, window_bounds = array<i64: 2, 1, 32>}, {pipeline_mode = #tpu.pipeline_mode<synchronous>, transform_indices = @transform_8, window_bounds = array<i64: 2, 1, 32>}, {pipeline_mode = #tpu.pipeline_mode<synchronous>, transform_indices = @transform_9, window_bounds = array<i64: 2, 1, 32>}, {pipeline_mode = #tpu.pipeline_mode<synchronous>, transform_indices = @transform_10, window_bounds = array<i64: 2, 32, 64>}, {pipeline_mode = #tpu.pipeline_mode<synchronous>, transform_indices = @transform_11, window_bounds = array<i64: 2, 1, 64>}, {pipeline_mode = #tpu.pipeline_mode<synchronous>, transform_indices = @transform_12, window_bounds = array<i64: 2, 64, 32>}, {pipeline_mode = #tpu.pipeline_mode<synchronous>, transform_indices = @transform_13, window_bounds = array<i64: 2, 1, 32>}, {pipeline_mode = #tpu.pipeline_mode<synchronous>, transform_indices = @transform_14, window_bounds = array<i64: 2, 1, 32>}, {pipeline_mode = #tpu.pipeline_mode<synchronous>, transform_indices = @transform_15, window_bounds = array<i64: 2, 1, 32>}, {pipeline_mode = #tpu.pipeline_mode<synchronous>, transform_indices = @transform_16, window_bounds = array<i64: 32, 32>}, {pipeline_mode = #tpu.pipeline_mode<synchronous>, transform_indices = @transform_17, window_bounds = array<i64: 1, 32>}, {pipeline_mode = #tpu.pipeline_mode<synchronous>, transform_indices = @transform_18, window_bounds = array<i64: 32, 128>}, {pipeline_mode = #tpu.pipeline_mode<synchronous>, transform_indices = @transform_19, window_bounds = array<i64: 1, 128>}, {transform_indices = @transform_20, window_bounds = array<i64: 1, 1, 128>}]} {
    %c0 = arith.constant 0 : index
    %c0_0 = arith.constant 0 : index
    %c0_1 = arith.constant 0 : index
    %0 = vector.load %arg1[%c0, %c0_0, %c0_1] : memref<1x8x32xf32, #tpu.memory_space<vmem>>, vector<1x8x32xf32>
    %1 = vector.shape_cast %0 : vector<1x8x32xf32> to vector<8x32xf32>
    %c0_2 = arith.constant 0 : index
    %c0_3 = arith.constant 0 : index
    %2 = vector.load %arg3[%c0_2, %c0_3] : memref<1x32xf32, #tpu.memory_space<vmem>>, vector<1x32xf32>
    %c0_4 = arith.constant 0 : index
    %c0_5 = arith.constant 0 : index
    %3 = vector.load %arg4[%c0_4, %c0_5] : memref<1x32xf32, #tpu.memory_space<vmem>>, vector<1x32xf32>
    %cst = arith.constant dense<0.000000e+00> : vector<8xf32>
    %4 = vector.multi_reduction <add>, %1, %cst [1] : vector<8x32xf32> to vector<8xf32>
    %5 = vector.shape_cast %4 : vector<8xf32> to vector<8x1xf32>
    %cst_6 = arith.constant 3.200000e+01 : f32
    %6 = vector.broadcast %cst_6 : f32 to vector<8x1xf32>
    %7 = arith.divf %5, %6 : vector<8x1xf32>
    %8 = arith.mulf %1, %1 : vector<8x32xf32>
    %cst_7 = arith.constant dense<0.000000e+00> : vector<8xf32>
    %9 = vector.multi_reduction <add>, %8, %cst_7 [1] : vector<8x32xf32> to vector<8xf32>
    %10 = vector.shape_cast %9 : vector<8xf32> to vector<8x1xf32>
    %cst_8 = arith.constant 3.200000e+01 : f32
    %11 = vector.broadcast %cst_8 : f32 to vector<8x1xf32>
    %12 = arith.divf %10, %11 : vector<8x1xf32>
    %13 = arith.mulf %7, %7 : vector<8x1xf32>
    %14 = arith.subf %12, %13 : vector<8x1xf32>
    %cst_9 = arith.constant 0.000000e+00 : f32
    %15 = vector.broadcast %cst_9 : f32 to vector<8x1xf32>
    %16 = arith.maximumf %14, %15 : vector<8x1xf32>
    %17 = vector.broadcast %7 : vector<8x1xf32> to vector<8x32xf32>
    %18 = arith.subf %1, %17 : vector<8x32xf32>
    %cst_10 = arith.constant 9.99999996E-13 : f32
    %19 = vector.broadcast %cst_10 : f32 to vector<8x1xf32>
    %20 = arith.addf %16, %19 : vector<8x1xf32>
    %21 = math.rsqrt %20 : vector<8x1xf32>
    %22 = vector.broadcast %21 : vector<8x1xf32> to vector<8x32xf32>
    %23 = arith.mulf %18, %22 : vector<8x32xf32>
    %24 = vector.broadcast %2 : vector<1x32xf32> to vector<8x32xf32>
    %25 = arith.mulf %23, %24 : vector<8x32xf32>
    %26 = vector.broadcast %3 : vector<1x32xf32> to vector<8x32xf32>
    %27 = arith.addf %25, %26 : vector<8x32xf32>
    %c0_11 = arith.constant 0 : index
    %c0_12 = arith.constant 0 : index
    %c0_13 = arith.constant 0 : index
    %28 = vector.load %arg2[%c0_11, %c0_12, %c0_13] : memref<1x1x8xf32, #tpu.memory_space<vmem>>, vector<1x1x8xf32>
    %29 = vector.shape_cast %28 : vector<1x1x8xf32> to vector<1x8xf32>
    %cst_14 = arith.constant 1.000000e+00 : f32
    %30 = vector.broadcast %cst_14 : f32 to vector<1x8xf32>
    %31 = arith.subf %30, %29 : vector<1x8xf32>
    %cst_15 = arith.constant -1.000000e+04 : f32
    %32 = vector.broadcast %cst_15 : f32 to vector<1x8xf32>
    %33 = arith.mulf %31, %32 : vector<1x8xf32>
    %34 = vector.shape_cast %33 : vector<1x8xf32> to vector<1x1x8xf32>
    %35 = arith.truncf %27 : vector<8x32xf32> to vector<8x32xbf16>
    %c0_16 = arith.constant 0 : index
    %c0_17 = arith.constant 0 : index
    %c0_18 = arith.constant 0 : index
    %36 = vector.load %arg5[%c0_16, %c0_17, %c0_18] : memref<2x32x96xbf16, #tpu.memory_space<vmem>>, vector<1x32x96xbf16>
    %37 = vector.shape_cast %36 : vector<1x32x96xbf16> to vector<32x96xbf16>
    %cst_19 = arith.constant dense<0.000000e+00> : vector<8x96xf32>
    %38 = tpu.matmul %35, %37, %cst_19 {dimension_numbers = #tpu.dot_dimension_numbers<[1], [0], [0], [1], [0, 0, 1, 1], [], []>} : vector<8x32xbf16>, vector<32x96xbf16>, vector<8x96xf32> -> vector<8x96xf32>
    %c0_20 = arith.constant 0 : index
    %c0_21 = arith.constant 0 : index
    %c0_22 = arith.constant 0 : index
    %39 = vector.load %arg6[%c0_20, %c0_21, %c0_22] : memref<2x1x96xf32, #tpu.memory_space<vmem>>, vector<1x1x96xf32>
    %40 = vector.shape_cast %39 : vector<1x1x96xf32> to vector<1x96xf32>
    %41 = vector.broadcast %40 : vector<1x96xf32> to vector<8x96xf32>
    %42 = arith.addf %38, %41 : vector<8x96xf32>
    %43 = arith.truncf %42 : vector<8x96xf32> to vector<8x96xbf16>
    %44 = vector.extract_strided_slice %43 {offsets = [0, 0], sizes = [8, 32], strides = [1, 1]} : vector<8x96xbf16> to vector<8x32xbf16>
    %45 = vector.shape_cast %44 : vector<8x32xbf16> to vector<8x2x16xbf16>
    %46 = tpu.transpose %45, [1, 0, 2] : vector<8x2x16xbf16> -> vector<2x8x16xbf16>
    %47 = vector.extract_strided_slice %43 {offsets = [0, 32], sizes = [8, 32], strides = [1, 1]} : vector<8x96xbf16> to vector<8x32xbf16>
    %48 = vector.shape_cast %47 : vector<8x32xbf16> to vector<8x2x16xbf16>
    %49 = tpu.transpose %48, [1, 0, 2] : vector<8x2x16xbf16> -> vector<2x8x16xbf16>
    %50 = vector.extract_strided_slice %43 {offsets = [0, 64], sizes = [8, 32], strides = [1, 1]} : vector<8x96xbf16> to vector<8x32xbf16>
    %51 = vector.shape_cast %50 : vector<8x32xbf16> to vector<8x2x16xbf16>
    %52 = tpu.transpose %51, [1, 0, 2] : vector<8x2x16xbf16> -> vector<2x8x16xbf16>
    "tpu.trace_start"() <{level = 10 : i32, message = "hqd,hkd->hqk"}> : () -> ()
    %cst_23 = arith.constant dense<0.000000e+00> : vector<2x8x8xf32>
    %53 = tpu.matmul %46, %49, %cst_23 {dimension_numbers = #tpu.dot_dimension_numbers<[2], [2], [1], [1], [0, 0, 0, 1, 1, 1], [0], [0]>} : vector<2x8x16xbf16>, vector<2x8x16xbf16>, vector<2x8x8xf32> -> vector<2x8x8xf32>
    "tpu.trace_stop"() : () -> ()
    %54 = vector.broadcast %34 : vector<1x1x8xf32> to vector<2x8x8xf32>
    %55 = arith.addf %53, %54 : vector<2x8x8xf32>
    %cst_24 = arith.constant dense<0xFF800000> : vector<2x8xf32>
    %56 = vector.multi_reduction <maximumf>, %55, %cst_24 [2] : vector<2x8x8xf32> to vector<2x8xf32>
    %57 = vector.shape_cast %56 : vector<2x8xf32> to vector<2x8x1xf32>
    %58 = vector.broadcast %57 : vector<2x8x1xf32> to vector<2x8x8xf32>
    %59 = arith.subf %55, %58 : vector<2x8x8xf32>
    %60 = math.exp %59 : vector<2x8x8xf32>
    %cst_25 = arith.constant dense<0.000000e+00> : vector<2x8xf32>
    %61 = vector.multi_reduction <add>, %60, %cst_25 [2] : vector<2x8x8xf32> to vector<2x8xf32>
    %62 = vector.shape_cast %61 : vector<2x8xf32> to vector<2x8x1xf32>
    %63 = tpu.reciprocal %62 {approx = true} : vector<2x8x1xf32> -> vector<2x8x1xf32>
    %64 = vector.broadcast %63 : vector<2x8x1xf32> to vector<2x8x8xf32>
    %65 = arith.mulf %60, %64 : vector<2x8x8xf32>
    %66 = arith.truncf %65 : vector<2x8x8xf32> to vector<2x8x8xbf16>
    "tpu.trace_start"() <{level = 10 : i32, message = "hqk,hkd->hqd"}> : () -> ()
    %cst_26 = arith.constant dense<0.000000e+00> : vector<2x8x16xf32>
    %67 = tpu.matmul %66, %52, %cst_26 {dimension_numbers = #tpu.dot_dimension_numbers<[2], [1], [1], [2], [0, 0, 0, 1, 1, 2], [0], [0]>} : vector<2x8x8xbf16>, vector<2x8x16xbf16>, vector<2x8x16xf32> -> vector<2x8x16xf32>
    "tpu.trace_stop"() : () -> ()
    %68 = tpu.transpose %67, [1, 0, 2] : vector<2x8x16xf32> -> vector<8x2x16xf32>
    %69 = vector.shape_cast %68 : vector<8x2x16xf32> to vector<8x32xf32>
    %70 = arith.truncf %69 : vector<8x32xf32> to vector<8x32xbf16>
    %c0_27 = arith.constant 0 : index
    %c0_28 = arith.constant 0 : index
    %c0_29 = arith.constant 0 : index
    %71 = vector.load %arg7[%c0_27, %c0_28, %c0_29] : memref<2x32x32xbf16, #tpu.memory_space<vmem>>, vector<1x32x32xbf16>
    %72 = vector.shape_cast %71 : vector<1x32x32xbf16> to vector<32x32xbf16>
    %cst_30 = arith.constant dense<0.000000e+00> : vector<8x32xf32>
    %73 = tpu.matmul %70, %72, %cst_30 {dimension_numbers = #tpu.dot_dimension_numbers<[1], [0], [0], [1], [0, 0, 1, 1], [], []>} : vector<8x32xbf16>, vector<32x32xbf16>, vector<8x32xf32> -> vector<8x32xf32>
    %c0_31 = arith.constant 0 : index
    %c0_32 = arith.constant 0 : index
    %c0_33 = arith.constant 0 : index
    %74 = vector.load %arg8[%c0_31, %c0_32, %c0_33] : memref<2x1x32xf32, #tpu.memory_space<vmem>>, vector<1x1x32xf32>
    %75 = vector.shape_cast %74 : vector<1x1x32xf32> to vector<1x32xf32>
    %76 = vector.broadcast %75 : vector<1x32xf32> to vector<8x32xf32>
    %77 = arith.addf %73, %76 : vector<8x32xf32>
    %78 = arith.addf %27, %77 : vector<8x32xf32>
    %c0_34 = arith.constant 0 : index
    %c0_35 = arith.constant 0 : index
    %c0_36 = arith.constant 0 : index
    %79 = vector.load %arg9[%c0_34, %c0_35, %c0_36] : memref<2x1x32xf32, #tpu.memory_space<vmem>>, vector<1x1x32xf32>
    %80 = vector.shape_cast %79 : vector<1x1x32xf32> to vector<1x32xf32>
    %c0_37 = arith.constant 0 : index
    %c0_38 = arith.constant 0 : index
    %c0_39 = arith.constant 0 : index
    %81 = vector.load %arg10[%c0_37, %c0_38, %c0_39] : memref<2x1x32xf32, #tpu.memory_space<vmem>>, vector<1x1x32xf32>
    %82 = vector.shape_cast %81 : vector<1x1x32xf32> to vector<1x32xf32>
    %cst_40 = arith.constant dense<0.000000e+00> : vector<8xf32>
    %83 = vector.multi_reduction <add>, %78, %cst_40 [1] : vector<8x32xf32> to vector<8xf32>
    %84 = vector.shape_cast %83 : vector<8xf32> to vector<8x1xf32>
    %cst_41 = arith.constant 3.200000e+01 : f32
    %85 = vector.broadcast %cst_41 : f32 to vector<8x1xf32>
    %86 = arith.divf %84, %85 : vector<8x1xf32>
    %87 = arith.mulf %78, %78 : vector<8x32xf32>
    %cst_42 = arith.constant dense<0.000000e+00> : vector<8xf32>
    %88 = vector.multi_reduction <add>, %87, %cst_42 [1] : vector<8x32xf32> to vector<8xf32>
    %89 = vector.shape_cast %88 : vector<8xf32> to vector<8x1xf32>
    %cst_43 = arith.constant 3.200000e+01 : f32
    %90 = vector.broadcast %cst_43 : f32 to vector<8x1xf32>
    %91 = arith.divf %89, %90 : vector<8x1xf32>
    %92 = arith.mulf %86, %86 : vector<8x1xf32>
    %93 = arith.subf %91, %92 : vector<8x1xf32>
    %cst_44 = arith.constant 0.000000e+00 : f32
    %94 = vector.broadcast %cst_44 : f32 to vector<8x1xf32>
    %95 = arith.maximumf %93, %94 : vector<8x1xf32>
    %96 = vector.broadcast %86 : vector<8x1xf32> to vector<8x32xf32>
    %97 = arith.subf %78, %96 : vector<8x32xf32>
    %cst_45 = arith.constant 9.99999996E-13 : f32
    %98 = vector.broadcast %cst_45 : f32 to vector<8x1xf32>
    %99 = arith.addf %95, %98 : vector<8x1xf32>
    %100 = math.rsqrt %99 : vector<8x1xf32>
    %101 = vector.broadcast %100 : vector<8x1xf32> to vector<8x32xf32>
    %102 = arith.mulf %97, %101 : vector<8x32xf32>
    %103 = vector.broadcast %80 : vector<1x32xf32> to vector<8x32xf32>
    %104 = arith.mulf %102, %103 : vector<8x32xf32>
    %105 = vector.broadcast %82 : vector<1x32xf32> to vector<8x32xf32>
    %106 = arith.addf %104, %105 : vector<8x32xf32>
    %107 = arith.truncf %106 : vector<8x32xf32> to vector<8x32xbf16>
    %c0_46 = arith.constant 0 : index
    %c0_47 = arith.constant 0 : index
    %c0_48 = arith.constant 0 : index
    %108 = vector.load %arg11[%c0_46, %c0_47, %c0_48] : memref<2x32x64xbf16, #tpu.memory_space<vmem>>, vector<1x32x64xbf16>
    %109 = vector.shape_cast %108 : vector<1x32x64xbf16> to vector<32x64xbf16>
    %cst_49 = arith.constant dense<0.000000e+00> : vector<8x64xf32>
    %110 = tpu.matmul %107, %109, %cst_49 {dimension_numbers = #tpu.dot_dimension_numbers<[1], [0], [0], [1], [0, 0, 1, 1], [], []>} : vector<8x32xbf16>, vector<32x64xbf16>, vector<8x64xf32> -> vector<8x64xf32>
    %c0_50 = arith.constant 0 : index
    %c0_51 = arith.constant 0 : index
    %c0_52 = arith.constant 0 : index
    %111 = vector.load %arg12[%c0_50, %c0_51, %c0_52] : memref<2x1x64xf32, #tpu.memory_space<vmem>>, vector<1x1x64xf32>
    %112 = vector.shape_cast %111 : vector<1x1x64xf32> to vector<1x64xf32>
    %113 = vector.broadcast %112 : vector<1x64xf32> to vector<8x64xf32>
    %114 = arith.addf %110, %113 : vector<8x64xf32>
    %115 = arith.mulf %114, %114 : vector<8x64xf32>
    %116 = arith.mulf %114, %115 : vector<8x64xf32>
    %cst_53 = arith.constant 4.471500e-02 : f32
    %117 = vector.broadcast %cst_53 : f32 to vector<8x64xf32>
    %118 = arith.mulf %117, %116 : vector<8x64xf32>
    %119 = arith.addf %114, %118 : vector<8x64xf32>
    %cst_54 = arith.constant 0.797884583 : f32
    %120 = vector.broadcast %cst_54 : f32 to vector<8x64xf32>
    %121 = arith.mulf %120, %119 : vector<8x64xf32>
    %122 = math.tanh %121 : vector<8x64xf32>
    %cst_55 = arith.constant 1.000000e+00 : f32
    %123 = vector.broadcast %cst_55 : f32 to vector<8x64xf32>
    %124 = arith.addf %123, %122 : vector<8x64xf32>
    %cst_56 = arith.constant 5.000000e-01 : f32
    %125 = vector.broadcast %cst_56 : f32 to vector<8x64xf32>
    %126 = arith.mulf %125, %124 : vector<8x64xf32>
    %127 = arith.mulf %114, %126 : vector<8x64xf32>
    %128 = arith.truncf %127 : vector<8x64xf32> to vector<8x64xbf16>
    %c0_57 = arith.constant 0 : index
    %c0_58 = arith.constant 0 : index
    %c0_59 = arith.constant 0 : index
    %129 = vector.load %arg13[%c0_57, %c0_58, %c0_59] : memref<2x64x32xbf16, #tpu.memory_space<vmem>>, vector<1x64x32xbf16>
    %130 = vector.shape_cast %129 : vector<1x64x32xbf16> to vector<64x32xbf16>
    %cst_60 = arith.constant dense<0.000000e+00> : vector<8x32xf32>
    %131 = tpu.matmul %128, %130, %cst_60 {dimension_numbers = #tpu.dot_dimension_numbers<[1], [0], [0], [1], [0, 0, 1, 1], [], []>} : vector<8x64xbf16>, vector<64x32xbf16>, vector<8x32xf32> -> vector<8x32xf32>
    %c0_61 = arith.constant 0 : index
    %c0_62 = arith.constant 0 : index
    %c0_63 = arith.constant 0 : index
    %132 = vector.load %arg14[%c0_61, %c0_62, %c0_63] : memref<2x1x32xf32, #tpu.memory_space<vmem>>, vector<1x1x32xf32>
    %133 = vector.shape_cast %132 : vector<1x1x32xf32> to vector<1x32xf32>
    %134 = vector.broadcast %133 : vector<1x32xf32> to vector<8x32xf32>
    %135 = arith.addf %131, %134 : vector<8x32xf32>
    %136 = arith.addf %106, %135 : vector<8x32xf32>
    %c0_64 = arith.constant 0 : index
    %c0_65 = arith.constant 0 : index
    %c0_66 = arith.constant 0 : index
    %137 = vector.load %arg15[%c0_64, %c0_65, %c0_66] : memref<2x1x32xf32, #tpu.memory_space<vmem>>, vector<1x1x32xf32>
    %138 = vector.shape_cast %137 : vector<1x1x32xf32> to vector<1x32xf32>
    %c0_67 = arith.constant 0 : index
    %c0_68 = arith.constant 0 : index
    %c0_69 = arith.constant 0 : index
    %139 = vector.load %arg16[%c0_67, %c0_68, %c0_69] : memref<2x1x32xf32, #tpu.memory_space<vmem>>, vector<1x1x32xf32>
    %140 = vector.shape_cast %139 : vector<1x1x32xf32> to vector<1x32xf32>
    %cst_70 = arith.constant dense<0.000000e+00> : vector<8xf32>
    %141 = vector.multi_reduction <add>, %136, %cst_70 [1] : vector<8x32xf32> to vector<8xf32>
    %142 = vector.shape_cast %141 : vector<8xf32> to vector<8x1xf32>
    %cst_71 = arith.constant 3.200000e+01 : f32
    %143 = vector.broadcast %cst_71 : f32 to vector<8x1xf32>
    %144 = arith.divf %142, %143 : vector<8x1xf32>
    %145 = arith.mulf %136, %136 : vector<8x32xf32>
    %cst_72 = arith.constant dense<0.000000e+00> : vector<8xf32>
    %146 = vector.multi_reduction <add>, %145, %cst_72 [1] : vector<8x32xf32> to vector<8xf32>
    %147 = vector.shape_cast %146 : vector<8xf32> to vector<8x1xf32>
    %cst_73 = arith.constant 3.200000e+01 : f32
    %148 = vector.broadcast %cst_73 : f32 to vector<8x1xf32>
    %149 = arith.divf %147, %148 : vector<8x1xf32>
    %150 = arith.mulf %144, %144 : vector<8x1xf32>
    %151 = arith.subf %149, %150 : vector<8x1xf32>
    %cst_74 = arith.constant 0.000000e+00 : f32
    %152 = vector.broadcast %cst_74 : f32 to vector<8x1xf32>
    %153 = arith.maximumf %151, %152 : vector<8x1xf32>
    %154 = vector.broadcast %144 : vector<8x1xf32> to vector<8x32xf32>
    %155 = arith.subf %136, %154 : vector<8x32xf32>
    %cst_75 = arith.constant 9.99999996E-13 : f32
    %156 = vector.broadcast %cst_75 : f32 to vector<8x1xf32>
    %157 = arith.addf %153, %156 : vector<8x1xf32>
    %158 = math.rsqrt %157 : vector<8x1xf32>
    %159 = vector.broadcast %158 : vector<8x1xf32> to vector<8x32xf32>
    %160 = arith.mulf %155, %159 : vector<8x32xf32>
    %161 = vector.broadcast %138 : vector<1x32xf32> to vector<8x32xf32>
    %162 = arith.mulf %160, %161 : vector<8x32xf32>
    %163 = vector.broadcast %140 : vector<1x32xf32> to vector<8x32xf32>
    %164 = arith.addf %162, %163 : vector<8x32xf32>
    %165 = arith.truncf %164 : vector<8x32xf32> to vector<8x32xbf16>
    %c1 = arith.constant 1 : index
    %c0_76 = arith.constant 0 : index
    %c0_77 = arith.constant 0 : index
    %166 = vector.load %arg5[%c1, %c0_76, %c0_77] : memref<2x32x96xbf16, #tpu.memory_space<vmem>>, vector<1x32x96xbf16>
    %167 = vector.shape_cast %166 : vector<1x32x96xbf16> to vector<32x96xbf16>
    %cst_78 = arith.constant dense<0.000000e+00> : vector<8x96xf32>
    %168 = tpu.matmul %165, %167, %cst_78 {dimension_numbers = #tpu.dot_dimension_numbers<[1], [0], [0], [1], [0, 0, 1, 1], [], []>} : vector<8x32xbf16>, vector<32x96xbf16>, vector<8x96xf32> -> vector<8x96xf32>
    %c1_79 = arith.constant 1 : index
    %c0_80 = arith.constant 0 : index
    %c0_81 = arith.constant 0 : index
    %169 = vector.load %arg6[%c1_79, %c0_80, %c0_81] : memref<2x1x96xf32, #tpu.memory_space<vmem>>, vector<1x1x96xf32>
    %170 = vector.shape_cast %169 : vector<1x1x96xf32> to vector<1x96xf32>
    %171 = vector.broadcast %170 : vector<1x96xf32> to vector<8x96xf32>
    %172 = arith.addf %168, %171 : vector<8x96xf32>
    %173 = arith.truncf %172 : vector<8x96xf32> to vector<8x96xbf16>
    %174 = vector.extract_strided_slice %173 {offsets = [0, 0], sizes = [8, 32], strides = [1, 1]} : vector<8x96xbf16> to vector<8x32xbf16>
    %175 = vector.shape_cast %174 : vector<8x32xbf16> to vector<8x2x16xbf16>
    %176 = tpu.transpose %175, [1, 0, 2] : vector<8x2x16xbf16> -> vector<2x8x16xbf16>
    %177 = vector.extract_strided_slice %173 {offsets = [0, 32], sizes = [8, 32], strides = [1, 1]} : vector<8x96xbf16> to vector<8x32xbf16>
    %178 = vector.shape_cast %177 : vector<8x32xbf16> to vector<8x2x16xbf16>
    %179 = tpu.transpose %178, [1, 0, 2] : vector<8x2x16xbf16> -> vector<2x8x16xbf16>
    %180 = vector.extract_strided_slice %173 {offsets = [0, 64], sizes = [8, 32], strides = [1, 1]} : vector<8x96xbf16> to vector<8x32xbf16>
    %181 = vector.shape_cast %180 : vector<8x32xbf16> to vector<8x2x16xbf16>
    %182 = tpu.transpose %181, [1, 0, 2] : vector<8x2x16xbf16> -> vector<2x8x16xbf16>
    "tpu.trace_start"() <{level = 10 : i32, message = "hqd,hkd->hqk"}> : () -> ()
    %cst_82 = arith.constant dense<0.000000e+00> : vector<2x8x8xf32>
    %183 = tpu.matmul %176, %179, %cst_82 {dimension_numbers = #tpu.dot_dimension_numbers<[2], [2], [1], [1], [0, 0, 0, 1, 1, 1], [0], [0]>} : vector<2x8x16xbf16>, vector<2x8x16xbf16>, vector<2x8x8xf32> -> vector<2x8x8xf32>
    "tpu.trace_stop"() : () -> ()
    %184 = vector.broadcast %34 : vector<1x1x8xf32> to vector<2x8x8xf32>
    %185 = arith.addf %183, %184 : vector<2x8x8xf32>
    %cst_83 = arith.constant dense<0xFF800000> : vector<2x8xf32>
    %186 = vector.multi_reduction <maximumf>, %185, %cst_83 [2] : vector<2x8x8xf32> to vector<2x8xf32>
    %187 = vector.shape_cast %186 : vector<2x8xf32> to vector<2x8x1xf32>
    %188 = vector.broadcast %187 : vector<2x8x1xf32> to vector<2x8x8xf32>
    %189 = arith.subf %185, %188 : vector<2x8x8xf32>
    %190 = math.exp %189 : vector<2x8x8xf32>
    %cst_84 = arith.constant dense<0.000000e+00> : vector<2x8xf32>
    %191 = vector.multi_reduction <add>, %190, %cst_84 [2] : vector<2x8x8xf32> to vector<2x8xf32>
    %192 = vector.shape_cast %191 : vector<2x8xf32> to vector<2x8x1xf32>
    %193 = tpu.reciprocal %192 {approx = true} : vector<2x8x1xf32> -> vector<2x8x1xf32>
    %194 = vector.broadcast %193 : vector<2x8x1xf32> to vector<2x8x8xf32>
    %195 = arith.mulf %190, %194 : vector<2x8x8xf32>
    %196 = arith.truncf %195 : vector<2x8x8xf32> to vector<2x8x8xbf16>
    "tpu.trace_start"() <{level = 10 : i32, message = "hqk,hkd->hqd"}> : () -> ()
    %cst_85 = arith.constant dense<0.000000e+00> : vector<2x8x16xf32>
    %197 = tpu.matmul %196, %182, %cst_85 {dimension_numbers = #tpu.dot_dimension_numbers<[2], [1], [1], [2], [0, 0, 0, 1, 1, 2], [0], [0]>} : vector<2x8x8xbf16>, vector<2x8x16xbf16>, vector<2x8x16xf32> -> vector<2x8x16xf32>
    "tpu.trace_stop"() : () -> ()
    %198 = tpu.transpose %197, [1, 0, 2] : vector<2x8x16xf32> -> vector<8x2x16xf32>
    %199 = vector.shape_cast %198 : vector<8x2x16xf32> to vector<8x32xf32>
    %200 = arith.truncf %199 : vector<8x32xf32> to vector<8x32xbf16>
    %c1_86 = arith.constant 1 : index
    %c0_87 = arith.constant 0 : index
    %c0_88 = arith.constant 0 : index
    %201 = vector.load %arg7[%c1_86, %c0_87, %c0_88] : memref<2x32x32xbf16, #tpu.memory_space<vmem>>, vector<1x32x32xbf16>
    %202 = vector.shape_cast %201 : vector<1x32x32xbf16> to vector<32x32xbf16>
    %cst_89 = arith.constant dense<0.000000e+00> : vector<8x32xf32>
    %203 = tpu.matmul %200, %202, %cst_89 {dimension_numbers = #tpu.dot_dimension_numbers<[1], [0], [0], [1], [0, 0, 1, 1], [], []>} : vector<8x32xbf16>, vector<32x32xbf16>, vector<8x32xf32> -> vector<8x32xf32>
    %c1_90 = arith.constant 1 : index
    %c0_91 = arith.constant 0 : index
    %c0_92 = arith.constant 0 : index
    %204 = vector.load %arg8[%c1_90, %c0_91, %c0_92] : memref<2x1x32xf32, #tpu.memory_space<vmem>>, vector<1x1x32xf32>
    %205 = vector.shape_cast %204 : vector<1x1x32xf32> to vector<1x32xf32>
    %206 = vector.broadcast %205 : vector<1x32xf32> to vector<8x32xf32>
    %207 = arith.addf %203, %206 : vector<8x32xf32>
    %208 = arith.addf %164, %207 : vector<8x32xf32>
    %c1_93 = arith.constant 1 : index
    %c0_94 = arith.constant 0 : index
    %c0_95 = arith.constant 0 : index
    %209 = vector.load %arg9[%c1_93, %c0_94, %c0_95] : memref<2x1x32xf32, #tpu.memory_space<vmem>>, vector<1x1x32xf32>
    %210 = vector.shape_cast %209 : vector<1x1x32xf32> to vector<1x32xf32>
    %c1_96 = arith.constant 1 : index
    %c0_97 = arith.constant 0 : index
    %c0_98 = arith.constant 0 : index
    %211 = vector.load %arg10[%c1_96, %c0_97, %c0_98] : memref<2x1x32xf32, #tpu.memory_space<vmem>>, vector<1x1x32xf32>
    %212 = vector.shape_cast %211 : vector<1x1x32xf32> to vector<1x32xf32>
    %cst_99 = arith.constant dense<0.000000e+00> : vector<8xf32>
    %213 = vector.multi_reduction <add>, %208, %cst_99 [1] : vector<8x32xf32> to vector<8xf32>
    %214 = vector.shape_cast %213 : vector<8xf32> to vector<8x1xf32>
    %cst_100 = arith.constant 3.200000e+01 : f32
    %215 = vector.broadcast %cst_100 : f32 to vector<8x1xf32>
    %216 = arith.divf %214, %215 : vector<8x1xf32>
    %217 = arith.mulf %208, %208 : vector<8x32xf32>
    %cst_101 = arith.constant dense<0.000000e+00> : vector<8xf32>
    %218 = vector.multi_reduction <add>, %217, %cst_101 [1] : vector<8x32xf32> to vector<8xf32>
    %219 = vector.shape_cast %218 : vector<8xf32> to vector<8x1xf32>
    %cst_102 = arith.constant 3.200000e+01 : f32
    %220 = vector.broadcast %cst_102 : f32 to vector<8x1xf32>
    %221 = arith.divf %219, %220 : vector<8x1xf32>
    %222 = arith.mulf %216, %216 : vector<8x1xf32>
    %223 = arith.subf %221, %222 : vector<8x1xf32>
    %cst_103 = arith.constant 0.000000e+00 : f32
    %224 = vector.broadcast %cst_103 : f32 to vector<8x1xf32>
    %225 = arith.maximumf %223, %224 : vector<8x1xf32>
    %226 = vector.broadcast %216 : vector<8x1xf32> to vector<8x32xf32>
    %227 = arith.subf %208, %226 : vector<8x32xf32>
    %cst_104 = arith.constant 9.99999996E-13 : f32
    %228 = vector.broadcast %cst_104 : f32 to vector<8x1xf32>
    %229 = arith.addf %225, %228 : vector<8x1xf32>
    %230 = math.rsqrt %229 : vector<8x1xf32>
    %231 = vector.broadcast %230 : vector<8x1xf32> to vector<8x32xf32>
    %232 = arith.mulf %227, %231 : vector<8x32xf32>
    %233 = vector.broadcast %210 : vector<1x32xf32> to vector<8x32xf32>
    %234 = arith.mulf %232, %233 : vector<8x32xf32>
    %235 = vector.broadcast %212 : vector<1x32xf32> to vector<8x32xf32>
    %236 = arith.addf %234, %235 : vector<8x32xf32>
    %237 = arith.truncf %236 : vector<8x32xf32> to vector<8x32xbf16>
    %c1_105 = arith.constant 1 : index
    %c0_106 = arith.constant 0 : index
    %c0_107 = arith.constant 0 : index
    %238 = vector.load %arg11[%c1_105, %c0_106, %c0_107] : memref<2x32x64xbf16, #tpu.memory_space<vmem>>, vector<1x32x64xbf16>
    %239 = vector.shape_cast %238 : vector<1x32x64xbf16> to vector<32x64xbf16>
    %cst_108 = arith.constant dense<0.000000e+00> : vector<8x64xf32>
    %240 = tpu.matmul %237, %239, %cst_108 {dimension_numbers = #tpu.dot_dimension_numbers<[1], [0], [0], [1], [0, 0, 1, 1], [], []>} : vector<8x32xbf16>, vector<32x64xbf16>, vector<8x64xf32> -> vector<8x64xf32>
    %c1_109 = arith.constant 1 : index
    %c0_110 = arith.constant 0 : index
    %c0_111 = arith.constant 0 : index
    %241 = vector.load %arg12[%c1_109, %c0_110, %c0_111] : memref<2x1x64xf32, #tpu.memory_space<vmem>>, vector<1x1x64xf32>
    %242 = vector.shape_cast %241 : vector<1x1x64xf32> to vector<1x64xf32>
    %243 = vector.broadcast %242 : vector<1x64xf32> to vector<8x64xf32>
    %244 = arith.addf %240, %243 : vector<8x64xf32>
    %245 = arith.mulf %244, %244 : vector<8x64xf32>
    %246 = arith.mulf %244, %245 : vector<8x64xf32>
    %cst_112 = arith.constant 4.471500e-02 : f32
    %247 = vector.broadcast %cst_112 : f32 to vector<8x64xf32>
    %248 = arith.mulf %247, %246 : vector<8x64xf32>
    %249 = arith.addf %244, %248 : vector<8x64xf32>
    %cst_113 = arith.constant 0.797884583 : f32
    %250 = vector.broadcast %cst_113 : f32 to vector<8x64xf32>
    %251 = arith.mulf %250, %249 : vector<8x64xf32>
    %252 = math.tanh %251 : vector<8x64xf32>
    %cst_114 = arith.constant 1.000000e+00 : f32
    %253 = vector.broadcast %cst_114 : f32 to vector<8x64xf32>
    %254 = arith.addf %253, %252 : vector<8x64xf32>
    %cst_115 = arith.constant 5.000000e-01 : f32
    %255 = vector.broadcast %cst_115 : f32 to vector<8x64xf32>
    %256 = arith.mulf %255, %254 : vector<8x64xf32>
    %257 = arith.mulf %244, %256 : vector<8x64xf32>
    %258 = arith.truncf %257 : vector<8x64xf32> to vector<8x64xbf16>
    %c1_116 = arith.constant 1 : index
    %c0_117 = arith.constant 0 : index
    %c0_118 = arith.constant 0 : index
    %259 = vector.load %arg13[%c1_116, %c0_117, %c0_118] : memref<2x64x32xbf16, #tpu.memory_space<vmem>>, vector<1x64x32xbf16>
    %260 = vector.shape_cast %259 : vector<1x64x32xbf16> to vector<64x32xbf16>
    %cst_119 = arith.constant dense<0.000000e+00> : vector<8x32xf32>
    %261 = tpu.matmul %258, %260, %cst_119 {dimension_numbers = #tpu.dot_dimension_numbers<[1], [0], [0], [1], [0, 0, 1, 1], [], []>} : vector<8x64xbf16>, vector<64x32xbf16>, vector<8x32xf32> -> vector<8x32xf32>
    %c1_120 = arith.constant 1 : index
    %c0_121 = arith.constant 0 : index
    %c0_122 = arith.constant 0 : index
    %262 = vector.load %arg14[%c1_120, %c0_121, %c0_122] : memref<2x1x32xf32, #tpu.memory_space<vmem>>, vector<1x1x32xf32>
    %263 = vector.shape_cast %262 : vector<1x1x32xf32> to vector<1x32xf32>
    %264 = vector.broadcast %263 : vector<1x32xf32> to vector<8x32xf32>
    %265 = arith.addf %261, %264 : vector<8x32xf32>
    %266 = arith.addf %236, %265 : vector<8x32xf32>
    %c1_123 = arith.constant 1 : index
    %c0_124 = arith.constant 0 : index
    %c0_125 = arith.constant 0 : index
    %267 = vector.load %arg15[%c1_123, %c0_124, %c0_125] : memref<2x1x32xf32, #tpu.memory_space<vmem>>, vector<1x1x32xf32>
    %268 = vector.shape_cast %267 : vector<1x1x32xf32> to vector<1x32xf32>
    %c1_126 = arith.constant 1 : index
    %c0_127 = arith.constant 0 : index
    %c0_128 = arith.constant 0 : index
    %269 = vector.load %arg16[%c1_126, %c0_127, %c0_128] : memref<2x1x32xf32, #tpu.memory_space<vmem>>, vector<1x1x32xf32>
    %270 = vector.shape_cast %269 : vector<1x1x32xf32> to vector<1x32xf32>
    %cst_129 = arith.constant dense<0.000000e+00> : vector<8xf32>
    %271 = vector.multi_reduction <add>, %266, %cst_129 [1] : vector<8x32xf32> to vector<8xf32>
    %272 = vector.shape_cast %271 : vector<8xf32> to vector<8x1xf32>
    %cst_130 = arith.constant 3.200000e+01 : f32
    %273 = vector.broadcast %cst_130 : f32 to vector<8x1xf32>
    %274 = arith.divf %272, %273 : vector<8x1xf32>
    %275 = arith.mulf %266, %266 : vector<8x32xf32>
    %cst_131 = arith.constant dense<0.000000e+00> : vector<8xf32>
    %276 = vector.multi_reduction <add>, %275, %cst_131 [1] : vector<8x32xf32> to vector<8xf32>
    %277 = vector.shape_cast %276 : vector<8xf32> to vector<8x1xf32>
    %cst_132 = arith.constant 3.200000e+01 : f32
    %278 = vector.broadcast %cst_132 : f32 to vector<8x1xf32>
    %279 = arith.divf %277, %278 : vector<8x1xf32>
    %280 = arith.mulf %274, %274 : vector<8x1xf32>
    %281 = arith.subf %279, %280 : vector<8x1xf32>
    %cst_133 = arith.constant 0.000000e+00 : f32
    %282 = vector.broadcast %cst_133 : f32 to vector<8x1xf32>
    %283 = arith.maximumf %281, %282 : vector<8x1xf32>
    %284 = vector.broadcast %274 : vector<8x1xf32> to vector<8x32xf32>
    %285 = arith.subf %266, %284 : vector<8x32xf32>
    %cst_134 = arith.constant 9.99999996E-13 : f32
    %286 = vector.broadcast %cst_134 : f32 to vector<8x1xf32>
    %287 = arith.addf %283, %286 : vector<8x1xf32>
    %288 = math.rsqrt %287 : vector<8x1xf32>
    %289 = vector.broadcast %288 : vector<8x1xf32> to vector<8x32xf32>
    %290 = arith.mulf %285, %289 : vector<8x32xf32>
    %291 = vector.broadcast %268 : vector<1x32xf32> to vector<8x32xf32>
    %292 = arith.mulf %290, %291 : vector<8x32xf32>
    %293 = vector.broadcast %270 : vector<1x32xf32> to vector<8x32xf32>
    %294 = arith.addf %292, %293 : vector<8x32xf32>
    %295 = vector.extract_strided_slice %294 {offsets = [0, 0], sizes = [1, 32], strides = [1, 1]} : vector<8x32xf32> to vector<1x32xf32>
    %296 = arith.truncf %295 : vector<1x32xf32> to vector<1x32xbf16>
    %c0_135 = arith.constant 0 : index
    %c0_136 = arith.constant 0 : index
    %297 = vector.load %arg17[%c0_135, %c0_136] : memref<32x32xbf16, #tpu.memory_space<vmem>>, vector<32x32xbf16>
    %cst_137 = arith.constant dense<0.000000e+00> : vector<1x32xf32>
    %298 = tpu.matmul %296, %297, %cst_137 {dimension_numbers = #tpu.dot_dimension_numbers<[1], [0], [0], [1], [0, 0, 1, 1], [], []>} : vector<1x32xbf16>, vector<32x32xbf16>, vector<1x32xf32> -> vector<1x32xf32>
    %c0_138 = arith.constant 0 : index
    %c0_139 = arith.constant 0 : index
    %299 = vector.load %arg18[%c0_138, %c0_139] : memref<1x32xf32, #tpu.memory_space<vmem>>, vector<1x32xf32>
    %300 = arith.addf %298, %299 : vector<1x32xf32>
    %301 = math.tanh %300 : vector<1x32xf32>
    %302 = arith.truncf %301 : vector<1x32xf32> to vector<1x32xbf16>
    %c0_140 = arith.constant 0 : index
    %c0_141 = arith.constant 0 : index
    %303 = vector.load %arg19[%c0_140, %c0_141] : memref<32x128xbf16, #tpu.memory_space<vmem>>, vector<32x128xbf16>
    %cst_142 = arith.constant dense<0.000000e+00> : vector<1x128xf32>
    %304 = tpu.matmul %302, %303, %cst_142 {dimension_numbers = #tpu.dot_dimension_numbers<[1], [0], [0], [1], [0, 0, 1, 1], [], []>} : vector<1x32xbf16>, vector<32x128xbf16>, vector<1x128xf32> -> vector<1x128xf32>
    %c0_143 = arith.constant 0 : index
    %c0_144 = arith.constant 0 : index
    %305 = vector.load %arg20[%c0_143, %c0_144] : memref<1x128xf32, #tpu.memory_space<vmem>>, vector<1x128xf32>
    %306 = arith.addf %304, %305 : vector<1x128xf32>
    %c0_145 = arith.constant 0 : index
    %c0_146 = arith.constant 0 : index
    %c0_147 = arith.constant 0 : index
    %307 = vector.load %arg21[%c0_145, %c0_146, %c0_147] : memref<1x1x128xf32, #tpu.memory_space<vmem>>, vector<1x1x128xf32>
    %308 = vector.shape_cast %307 : vector<1x1x128xf32> to vector<1x128xf32>
    %309 = vector.shape_cast %306 : vector<1x128xf32> to vector<1x1x128xf32>
    tpu.vector_store %arg21[%c0_145, %c0_146, %c0_147], %309 {strides = array<i32>} : memref<1x1x128xf32, #tpu.memory_space<vmem>>, vector<1x1x128xf32>,
    return
  }
  func.func @transform_0(%arg0: i32) -> (i32, i32, i32) {
    %c0_i32 = arith.constant 0 : i32
    %c0_i32_0 = arith.constant 0 : i32
    %c0_i32_1 = arith.constant 0 : i32
    return %arg0, %c0_i32, %c0_i32_0 : i32, i32, i32
  }
  func.func @transform_1(%arg0: i32) -> (i32, i32, i32) {
    %c0_i32 = arith.constant 0 : i32
    %c0_i32_0 = arith.constant 0 : i32
    %c0_i32_1 = arith.constant 0 : i32
    return %arg0, %c0_i32, %c0_i32_0 : i32, i32, i32
  }
  func.func @transform_2(%arg0: i32) -> (i32, i32) {
    %c0_i32 = arith.constant 0 : i32
    %c0_i32_0 = arith.constant 0 : i32
    %c0_i32_1 = arith.constant 0 : i32
    return %c0_i32, %c0_i32_0 : i32, i32
  }
  func.func @transform_3(%arg0: i32) -> (i32, i32) {
    %c0_i32 = arith.constant 0 : i32
    %c0_i32_0 = arith.constant 0 : i32
    %c0_i32_1 = arith.constant 0 : i32
    return %c0_i32, %c0_i32_0 : i32, i32
  }
  func.func @transform_4(%arg0: i32) -> (i32, i32, i32) {
    %c0_i32 = arith.constant 0 : i32
    %c0_i32_0 = arith.constant 0 : i32
    %c0_i32_1 = arith.constant 0 : i32
    %c0_i32_2 = arith.constant 0 : i32
    return %c0_i32, %c0_i32_0, %c0_i32_1 : i32, i32, i32
  }
  func.func @transform_5(%arg0: i32) -> (i32, i32, i32) {
    %c0_i32 = arith.constant 0 : i32
    %c0_i32_0 = arith.constant 0 : i32
    %c0_i32_1 = arith.constant 0 : i32
    %c0_i32_2 = arith.constant 0 : i32
    return %c0_i32, %c0_i32_0, %c0_i32_1 : i32, i32, i32
  }
  func.func @transform_6(%arg0: i32) -> (i32, i32, i32) {
    %c0_i32 = arith.constant 0 : i32
    %c0_i32_0 = arith.constant 0 : i32
    %c0_i32_1 = arith.constant 0 : i32
    %c0_i32_2 = arith.constant 0 : i32
    return %c0_i32, %c0_i32_0, %c0_i32_1 : i32, i32, i32
  }
  func.func @transform_7(%arg0: i32) -> (i32, i32, i32) {
    %c0_i32 = arith.constant 0 : i32
    %c0_i32_0 = arith.constant 0 : i32
    %c0_i32_1 = arith.constant 0 : i32
    %c0_i32_2 = arith.constant 0 : i32
    return %c0_i32, %c0_i32_0, %c0_i32_1 : i32, i32, i32
  }
  func.func @transform_8(%arg0: i32) -> (i32, i32, i32) {
    %c0_i32 = arith.constant 0 : i32
    %c0_i32_0 = arith.constant 0 : i32
    %c0_i32_1 = arith.constant 0 : i32
    %c0_i32_2 = arith.constant 0 : i32
    return %c0_i32, %c0_i32_0, %c0_i32_1 : i32, i32, i32
  }
  func.func @transform_9(%arg0: i32) -> (i32, i32, i32) {
    %c0_i32 = arith.constant 0 : i32
    %c0_i32_0 = arith.constant 0 : i32
    %c0_i32_1 = arith.constant 0 : i32
    %c0_i32_2 = arith.constant 0 : i32
    return %c0_i32, %c0_i32_0, %c0_i32_1 : i32, i32, i32
  }
  func.func @transform_10(%arg0: i32) -> (i32, i32, i32) {
    %c0_i32 = arith.constant 0 : i32
    %c0_i32_0 = arith.constant 0 : i32
    %c0_i32_1 = arith.constant 0 : i32
    %c0_i32_2 = arith.constant 0 : i32
    return %c0_i32, %c0_i32_0, %c0_i32_1 : i32, i32, i32
  }
  func.func @transform_11(%arg0: i32) -> (i32, i32, i32) {
    %c0_i32 = arith.constant 0 : i32
    %c0_i32_0 = arith.constant 0 : i32
    %c0_i32_1 = arith.constant 0 : i32
    %c0_i32_2 = arith.constant 0 : i32
    return %c0_i32, %c0_i32_0, %c0_i32_1 : i32, i32, i32
  }
  func.func @transform_12(%arg0: i32) -> (i32, i32, i32) {
    %c0_i32 = arith.constant 0 : i32
    %c0_i32_0 = arith.constant 0 : i32
    %c0_i32_1 = arith.constant 0 : i32
    %c0_i32_2 = arith.constant 0 : i32
    return %c0_i32, %c0_i32_0, %c0_i32_1 : i32, i32, i32
  }
  func.func @transform_13(%arg0: i32) -> (i32, i32, i32) {
    %c0_i32 = arith.constant 0 : i32
    %c0_i32_0 = arith.constant 0 : i32
    %c0_i32_1 = arith.constant 0 : i32
    %c0_i32_2 = arith.constant 0 : i32
    return %c0_i32, %c0_i32_0, %c0_i32_1 : i32, i32, i32
  }
  func.func @transform_14(%arg0: i32) -> (i32, i32, i32) {
    %c0_i32 = arith.constant 0 : i32
    %c0_i32_0 = arith.constant 0 : i32
    %c0_i32_1 = arith.constant 0 : i32
    %c0_i32_2 = arith.constant 0 : i32
    return %c0_i32, %c0_i32_0, %c0_i32_1 : i32, i32, i32
  }
  func.func @transform_15(%arg0: i32) -> (i32, i32, i32) {
    %c0_i32 = arith.constant 0 : i32
    %c0_i32_0 = arith.constant 0 : i32
    %c0_i32_1 = arith.constant 0 : i32
    %c0_i32_2 = arith.constant 0 : i32
    return %c0_i32, %c0_i32_0, %c0_i32_1 : i32, i32, i32
  }
  func.func @transform_16(%arg0: i32) -> (i32, i32) {
    %c0_i32 = arith.constant 0 : i32
    %c0_i32_0 = arith.constant 0 : i32
    %c0_i32_1 = arith.constant 0 : i32
    return %c0_i32, %c0_i32_0 : i32, i32
  }
  func.func @transform_17(%arg0: i32) -> (i32, i32) {
    %c0_i32 = arith.constant 0 : i32
    %c0_i32_0 = arith.constant 0 : i32
    %c0_i32_1 = arith.constant 0 : i32
    return %c0_i32, %c0_i32_0 : i32, i32
  }
  func.func @transform_18(%arg0: i32) -> (i32, i32) {
    %c0_i32 = arith.constant 0 : i32
    %c0_i32_0 = arith.constant 0 : i32
    %c0_i32_1 = arith.constant 0 : i32
    return %c0_i32, %c0_i32_0 : i32, i32
  }
  func.func @transform_19(%arg0: i32) -> (i32, i32) {
    %c0_i32 = arith.constant 0 : i32
    %c0_i32_0 = arith.constant 0 : i32
    %c0_i32_1 = arith.constant 0 : i32
    return %c0_i32, %c0_i32_0 : i32, i32
  }
  func.func @transform_20(%arg0: i32) -> (i32, i32, i32) {
    %c0_i32 = arith.constant 0 : i32
    %c0_i32_0 = arith.constant 0 : i32
    %c0_i32_1 = arith.constant 0 : i32
    return %arg0, %c0_i32, %c0_i32_0 : i32, i32, i32
  }
}

</mosaic_0001>

<llo_original>
// kernel: kobert_forward.1
$region0: #{kobert_forward.1}
  #allocation0 [shape = 'u32[]', space=smem, size = 0x4, offset = 0x4, fixed_abs, tag = 'smem constant byte address 0x4 - core index']
  #allocation1 [shape = 'u32[144,128]{1,0:T(1,128)}', space=vmem, size = 0x12000, scoped, tag = 'internal scratch']
  %s0 = inlined_call_operand.vmem [shape: f32[2,8,32], index: 0, kind: input, shape index: {}]
  %s1 = inlined_call_operand.vmem [shape: f32[2,1,8], index: 1, kind: input, shape index: {}]
  %s2 = inlined_call_operand.vmem [shape: f32[1,32], index: 2, kind: input, shape index: {}]
  %s3 = inlined_call_operand.vmem [shape: f32[1,32], index: 3, kind: input, shape index: {}]
  %s4 = inlined_call_operand.vmem [shape: bf16[2,32,96], index: 4, kind: input, shape index: {}]
  %s5 = inlined_call_operand.vmem [shape: f32[2,1,96], index: 5, kind: input, shape index: {}]
  %s6 = inlined_call_operand.vmem [shape: bf16[2,32,32], index: 6, kind: input, shape index: {}]
  %s7 = inlined_call_operand.vmem [shape: f32[2,1,32], index: 7, kind: input, shape index: {}]
  %s8 = inlined_call_operand.vmem [shape: f32[2,1,32], index: 8, kind: input, shape index: {}]
  %s9 = inlined_call_operand.vmem [shape: f32[2,1,32], index: 9, kind: input, shape index: {}]
  %s10 = inlined_call_operand.vmem [shape: bf16[2,32,64], index: 10, kind: input, shape index: {}]
  %s11 = inlined_call_operand.vmem [shape: f32[2,1,64], index: 11, kind: input, shape index: {}]
  %s12 = inlined_call_operand.vmem [shape: bf16[2,64,32], index: 12, kind: input, shape index: {}]
  %s13 = inlined_call_operand.vmem [shape: f32[2,1,32], index: 13, kind: input, shape index: {}]
  %s14 = inlined_call_operand.vmem [shape: f32[2,1,32], index: 14, kind: input, shape index: {}]
  %s15 = inlined_call_operand.vmem [shape: f32[2,1,32], index: 15, kind: input, shape index: {}]
  %s16 = inlined_call_operand.vmem [shape: bf16[32,32], index: 16, kind: input, shape index: {}]
  %s17 = inlined_call_operand.vmem [shape: f32[1,32], index: 17, kind: input, shape index: {}]
  %s18 = inlined_call_operand.vmem [shape: bf16[32,128], index: 18, kind: input, shape index: {}]
  %s19 = inlined_call_operand.vmem [shape: f32[1,128], index: 19, kind: input, shape index: {}]
  %s20 = inlined_call_operand.hbm [shape: f32[2,1,128], index: 20, kind: output, shape index: {}]
  %s21 = sld [smem:[#allocation0]]
  $region113: #{kobert_forward.1} parent=0
    _
  %s23 = ssub.s32 1, %s21
  %s24 = scalar_select 0, %s23, %s21
  $region1: #{kobert_forward.1} parent=0
    #allocation2 [shape = 'u8[1024]{0}', space=vmem, size = 0x400, scoped, tag = 'output window, operand 0']
    #allocation3 [shape = 's32[2]{0}', space=sflag, size = 0x8, scoped, tag = 'scoped memory for kobert_forward.1']
    %25 = vsyncpa [#allocation3], 0
    %s26 = scalar_lea.sflag [#allocation3], 1
    %27 = vsyncpa %s26, 0
    loop: start=0, step=1, limit=4
    $region2: #{kobert_forward.1} parent=1 // loop_pre_header
      _
    $region3: #{kobert_forward.1} parent=1 // loop_header
      %s29 = sphi 0, %s33
      %p30 = scmp.ge.s32.totalorder %s29, 4
      %s39 = sphi 0, %s41
      %s42 = sphi 0, %s39
      %s43 = sphi 0, %s42
      %s59 = sphi 0, %s43
      %s65 = sphi 0, %s67
      %s68 = sphi 0, %s65
      %s69 = sphi 0, %s68
      %s85 = sphi 0, %s69
      %s89 = sphi 0, %s89
      %s91 = sphi 0, %s89
      %s92 = sphi 0, %s91
      %s106 = sphi 0, %s92
      %s110 = sphi 0, %s110
      %s112 = sphi 0, %s110
      %s113 = sphi 0, %s112
      %s127 = sphi 0, %s113
      %s131 = sphi 0, %s131
      %s133 = sphi 0, %s131
      %s134 = sphi 0, %s133
      %s148 = sphi 0, %s134
      %s152 = sphi 0, %s152
      %s154 = sphi 0, %s152
      %s155 = sphi 0, %s154
      %s169 = sphi 0, %s155
      %s173 = sphi 0, %s173
      %s175 = sphi 0, %s173
      %s176 = sphi 0, %s175
      %s190 = sphi 0, %s176
      %s194 = sphi 0, %s194
      %s196 = sphi 0, %s194
      %s197 = sphi 0, %s196
      %s211 = sphi 0, %s197
      %s215 = sphi 0, %s215
      %s217 = sphi 0, %s215
      %s218 = sphi 0, %s217
      %s232 = sphi 0, %s218
      %s236 = sphi 0, %s236
      %s238 = sphi 0, %s236
      %s239 = sphi 0, %s238
      %s253 = sphi 0, %s239
      %s257 = sphi 0, %s257
      %s259 = sphi 0, %s257
      %s260 = sphi 0, %s259
      %s274 = sphi 0, %s260
      %s278 = sphi 0, %s278
      %s280 = sphi 0, %s278
      %s281 = sphi 0, %s280
      %s295 = sphi 0, %s281
      %s299 = sphi 0, %s299
      %s301 = sphi 0, %s299
      %s302 = sphi 0, %s301
      %s316 = sphi 0, %s302
      %s320 = sphi 0, %s320
      %s322 = sphi 0, %s320
      %s323 = sphi 0, %s322
      %s337 = sphi 0, %s323
      %s341 = sphi 0, %s341
      %s343 = sphi 0, %s341
      %s344 = sphi 0, %s343
      %s358 = sphi 0, %s344
      %s362 = sphi 0, %s362
      %s364 = sphi 0, %s362
      %s365 = sphi 0, %s364
      %s379 = sphi 0, %s365
      %s383 = sphi 0, %s383
      %s385 = sphi 0, %s383
      %s386 = sphi 0, %s385
      %s400 = sphi 0, %s386
      %s404 = sphi 0, %s404
      %s406 = sphi 0, %s404
      %s407 = sphi 0, %s406
      %s421 = sphi 0, %s407
      %s425 = sphi 0, %s425
      %s427 = sphi 0, %s425
      %s428 = sphi 0, %s427
      %s442 = sphi 0, %s428
      %s446 = sphi 0, %s446
      %s448 = sphi 0, %s446
      %s449 = sphi 0, %s448
      %s463 = sphi 0, %s449
      %s469 = sphi 0, %s471
      %s472 = sphi 0, %s469
      %s473 = sphi 0, %s472
      %s489 = sphi 0, %s473
    $region4: #{kobert_forward.1} parent=1 // loop_header_branch
      %32 = sbr.rel (%p30) target = $region8
    $region5: #{kobert_forward.1} parent=1 // loop_body
      %s34 = ssub.s32 %s29, 1
      %s35 = ssub.s32 %s29, 2
      %s36 = sadd.s32 %s29, 1
      %s37 = ssub.s32 %s29, %s36
      %p38 = scmp.eq.s32.totalorder %s37, 0
      %s40 = sadd.s32 %s39, 1
      %s41 = scalar_select %p38, %s39, %s40
      %p44 = pneg %p38
      %p45 = scmp.eq.s32.totalorder %s29, 1
      %p46 = por %p44, %p45
      %p47 = scmp.ne.s32.totalorder %s39, %s42
      %p48 = scmp.eq.s32.totalorder %s29, 0
      %p49 = por %p47, %p48
      %p50 = scmp.ne.s32.totalorder %s39, %s42
      %p51 = scmp.eq.s32.totalorder %s34, 1
      %p52 = por %p50, %p51
      %p53 = scmp.ne.s32.totalorder %s42, %s43
      %p54 = scmp.eq.s32.totalorder %s34, 0
      %p55 = por %p53, %p54
      %p56 = scmp.ne.s32.totalorder %s42, %s43
      %p57 = scmp.eq.s32.totalorder %s35, 1
      %p58 = por %p56, %p57
      %p60 = scmp.ne.s32.totalorder %s43, %s59
      %p61 = scmp.eq.s32.totalorder %s35, 0
      %p62 = por %p60, %p61
      %s63 = ssub.s32 %s29, %s36
      %p64 = scmp.eq.s32.totalorder %s63, 0
      %s66 = sadd.s32 %s65, 1
      %s67 = scalar_select %p64, %s65, %s66
      %p70 = pneg %p64
      %p71 = scmp.eq.s32.totalorder %s29, 1
      %p72 = por %p70, %p71
      %p73 = scmp.ne.s32.totalorder %s65, %s68
      %p74 = scmp.eq.s32.totalorder %s29, 0
      %p75 = por %p73, %p74
      %p76 = scmp.ne.s32.totalorder %s65, %s68
      %p77 = scmp.eq.s32.totalorder %s34, 1
      %p78 = por %p76, %p77
      %p79 = scmp.ne.s32.totalorder %s68, %s69
      %p80 = scmp.eq.s32.totalorder %s34, 0
      %p81 = por %p79, %p80
      %p82 = scmp.ne.s32.totalorder %s68, %s69
      %p83 = scmp.eq.s32.totalorder %s35, 1
      %p84 = por %p82, %p83
      %p86 = scmp.ne.s32.totalorder %s69, %s85
      %p87 = scmp.eq.s32.totalorder %s35, 0
      %p88 = por %p86, %p87
      %s90 = sadd.s32 %s89, 1
      %p93 = scmp.eq.s32.totalorder %s29, 1
      %p94 = scmp.ne.s32.totalorder %s89, %s91
      %p95 = scmp.eq.s32.totalorder %s29, 0
      %p96 = por %p94, %p95
      %p97 = scmp.ne.s32.totalorder %s89, %s91
      %p98 = scmp.eq.s32.totalorder %s34, 1
      %p99 = por %p97, %p98
      %p100 = scmp.ne.s32.totalorder %s91, %s92
      %p101 = scmp.eq.s32.totalorder %s34, 0
      %p102 = por %p100, %p101
      %p103 = scmp.ne.s32.totalorder %s91, %s92
      %p104 = scmp.eq.s32.totalorder %s35, 1
      %p105 = por %p103, %p104
      %p107 = scmp.ne.s32.totalorder %s92, %s106
      %p108 = scmp.eq.s32.totalorder %s35, 0
      %p109 = por %p107, %p108
      %s111 = sadd.s32 %s110, 1
      %p114 = scmp.eq.s32.totalorder %s29, 1
      %p115 = scmp.ne.s32.totalorder %s110, %s112
      %p116 = scmp.eq.s32.totalorder %s29, 0
      %p117 = por %p115, %p116
      %p118 = scmp.ne.s32.totalorder %s110, %s112
      %p119 = scmp.eq.s32.totalorder %s34, 1
      %p120 = por %p118, %p119
      %p121 = scmp.ne.s32.totalorder %s112, %s113
      %p122 = scmp.eq.s32.totalorder %s34, 0
      %p123 = por %p121, %p122
      %p124 = scmp.ne.s32.totalorder %s112, %s113
      %p125 = scmp.eq.s32.totalorder %s35, 1
      %p126 = por %p124, %p125
      %p128 = scmp.ne.s32.totalorder %s113, %s127
      %p129 = scmp.eq.s32.totalorder %s35, 0
      %p130 = por %p128, %p129
      %s132 = sadd.s32 %s131, 1
      %p135 = scmp.eq.s32.totalorder %s29, 1
      %p136 = scmp.ne.s32.totalorder %s131, %s133
      %p137 = scmp.eq.s32.totalorder %s29, 0
      %p138 = por %p136, %p137
      %p139 = scmp.ne.s32.totalorder %s131, %s133
      %p140 = scmp.eq.s32.totalorder %s34, 1
      %p141 = por %p139, %p140
      %p142 = scmp.ne.s32.totalorder %s133, %s134
      %p143 = scmp.eq.s32.totalorder %s34, 0
      %p144 = por %p142, %p143
      %p145 = scmp.ne.s32.totalorder %s133, %s134
      %p146 = scmp.eq.s32.totalorder %s35, 1
      %p147 = por %p145, %p146
      %p149 = scmp.ne.s32.totalorder %s134, %s148
      %p150 = scmp.eq.s32.totalorder %s35, 0
      %p151 = por %p149, %p150
      %s153 = sadd.s32 %s152, 1
      %p156 = scmp.eq.s32.totalorder %s29, 1
      %p157 = scmp.ne.s32.totalorder %s152, %s154
      %p158 = scmp.eq.s32.totalorder %s29, 0
      %p159 = por %p157, %p158
      %p160 = scmp.ne.s32.totalorder %s152, %s154
      %p161 = scmp.eq.s32.totalorder %s34, 1
      %p162 = por %p160, %p161
      %p163 = scmp.ne.s32.totalorder %s154, %s155
      %p164 = scmp.eq.s32.totalorder %s34, 0
      %p165 = por %p163, %p164
      %p166 = scmp.ne.s32.totalorder %s154, %s155
      %p167 = scmp.eq.s32.totalorder %s35, 1
      %p168 = por %p166, %p167
      %p170 = scmp.ne.s32.totalorder %s155, %s169
      %p171 = scmp.eq.s32.totalorder %s35, 0
      %p172 = por %p170, %p171
      %s174 = sadd.s32 %s173, 1
      %p177 = scmp.eq.s32.totalorder %s29, 1
      %p178 = scmp.ne.s32.totalorder %s173, %s175
      %p179 = scmp.eq.s32.totalorder %s29, 0
      %p180 = por %p178, %p179
      %p181 = scmp.ne.s32.totalorder %s173, %s175
      %p182 = scmp.eq.s32.totalorder %s34, 1
      %p183 = por %p181, %p182
      %p184 = scmp.ne.s32.totalorder %s175, %s176
      %p185 = scmp.eq.s32.totalorder %s34, 0
      %p186 = por %p184, %p185
      %p187 = scmp.ne.s32.totalorder %s175, %s176
      %p188 = scmp.eq.s32.totalorder %s35, 1
      %p189 = por %p187, %p188
      %p191 = scmp.ne.s32.totalorder %s176, %s190
      %p192 = scmp.eq.s32.totalorder %s35, 0
      %p193 = por %p191, %p192
      %s195 = sadd.s32 %s194, 1
      %p198 = scmp.eq.s32.totalorder %s29, 1
      %p199 = scmp.ne.s32.totalorder %s194, %s196
      %p200 = scmp.eq.s32.totalorder %s29, 0
      %p201 = por %p199, %p200
      %p202 = scmp.ne.s32.totalorder %s194, %s196
      %p203 = scmp.eq.s32.totalorder %s34, 1
      %p204 = por %p202, %p203
      %p205 = scmp.ne.s32.totalorder %s196, %s197
      %p206 = scmp.eq.s32.totalorder %s34, 0
      %p207 = por %p205, %p206
      %p208 = scmp.ne.s32.totalorder %s196, %s197
      %p209 = scmp.eq.s32.totalorder %s35, 1
      %p210 = por %p208, %p209
      %p212 = scmp.ne.s32.totalorder %s197, %s211
      %p213 = scmp.eq.s32.totalorder %s35, 0
      %p214 = por %p212, %p213
      %s216 = sadd.s32 %s215, 1
      %p219 = scmp.eq.s32.totalorder %s29, 1
      %p220 = scmp.ne.s32.totalorder %s215, %s217
      %p221 = scmp.eq.s32.totalorder %s29, 0
      %p222 = por %p220, %p221
      %p223 = scmp.ne.s32.totalorder %s215, %s217
      %p224 = scmp.eq.s32.totalorder %s34, 1
      %p225 = por %p223, %p224
      %p226 = scmp.ne.s32.totalorder %s217, %s218
      %p227 = scmp.eq.s32.totalorder %s34, 0
      %p228 = por %p226, %p227
      %p229 = scmp.ne.s32.totalorder %s217, %s218
      %p230 = scmp.eq.s32.totalorder %s35, 1
      %p231 = por %p229, %p230
      %p233 = scmp.ne.s32.totalorder %s218, %s232
      %p234 = scmp.eq.s32.totalorder %s35, 0
      %p235 = por %p233, %p234
      %s237 = sadd.s32 %s236, 1
      %p240 = scmp.eq.s32.totalorder %s29, 1
      %p241 = scmp.ne.s32.totalorder %s236, %s238
      %p242 = scmp.eq.s32.totalorder %s29, 0
      %p243 = por %p241, %p242
      %p244 = scmp.ne.s32.totalorder %s236, %s238
      %p245 = scmp.eq.s32.totalorder %s34, 1
      %p246 = por %p244, %p245
      %p247 = scmp.ne.s32.totalorder %s238, %s239
      %p248 = scmp.eq.s32.totalorder %s34, 0
      %p249 = por %p247, %p248
      %p250 = scmp.ne.s32.totalorder %s238, %s239
      %p251 = scmp.eq.s32.totalorder %s35, 1
      %p252 = por %p250, %p251
      %p254 = scmp.ne.s32.totalorder %s239, %s253
      %p255 = scmp.eq.s32.totalorder %s35, 0
      %p256 = por %p254, %p255
      %s258 = sadd.s32 %s257, 1
      %p261 = scmp.eq.s32.totalorder %s29, 1
      %p262 = scmp.ne.s32.totalorder %s257, %s259
      %p263 = scmp.eq.s32.totalorder %s29, 0
      %p264 = por %p262, %p263
      %p265 = scmp.ne.s32.totalorder %s257, %s259
      %p266 = scmp.eq.s32.totalorder %s34, 1
      %p267 = por %p265, %p266
      %p268 = scmp.ne.s32.totalorder %s259, %s260
      %p269 = scmp.eq.s32.totalorder %s34, 0
      %p270 = por %p268, %p269
      %p271 = scmp.ne.s32.totalorder %s259, %s260
      %p272 = scmp.eq.s32.totalorder %s35, 1
      %p273 = por %p271, %p272
      %p275 = scmp.ne.s32.totalorder %s260, %s274
      %p276 = scmp.eq.s32.totalorder %s35, 0
      %p277 = por %p275, %p276
      %s279 = sadd.s32 %s278, 1
      %p282 = scmp.eq.s32.totalorder %s29, 1
      %p283 = scmp.ne.s32.totalorder %s278, %s280
      %p284 = scmp.eq.s32.totalorder %s29, 0
      %p285 = por %p283, %p284
      %p286 = scmp.ne.s32.totalorder %s278, %s280
      %p287 = scmp.eq.s32.totalorder %s34, 1
      %p288 = por %p286, %p287
      %p289 = scmp.ne.s32.totalorder %s280, %s281
      %p290 = scmp.eq.s32.totalorder %s34, 0
      %p291 = por %p289, %p290
      %p292 = scmp.ne.s32.totalorder %s280, %s281
      %p293 = scmp.eq.s32.totalorder %s35, 1
      %p294 = por %p292, %p293
      %p296 = scmp.ne.s32.totalorder %s281, %s295
      %p297 = scmp.eq.s32.totalorder %s35, 0
      %p298 = por %p296, %p297
      %s300 = sadd.s32 %s299, 1
      %p303 = scmp.eq.s32.totalorder %s29, 1
      %p304 = scmp.ne.s32.totalorder %s299, %s301
      %p305 = scmp.eq.s32.totalorder %s29, 0
      %p306 = por %p304, %p305
      %p307 = scmp.ne.s32.totalorder %s299, %s301
      %p308 = scmp.eq.s32.totalorder %s34, 1
      %p309 = por %p307, %p308
      %p310 = scmp.ne.s32.totalorder %s301, %s302
      %p311 = scmp.eq.s32.totalorder %s34, 0
      %p312 = por %p310, %p311
      %p313 = scmp.ne.s32.totalorder %s301, %s302
      %p314 = scmp.eq.s32.totalorder %s35, 1
      %p315 = por %p313, %p314
      %p317 = scmp.ne.s32.totalorder %s302, %s316
      %p318 = scmp.eq.s32.totalorder %s35, 0
      %p319 = por %p317, %p318
      %s321 = sadd.s32 %s320, 1
      %p324 = scmp.eq.s32.totalorder %s29, 1
      %p325 = scmp.ne.s32.totalorder %s320, %s322
      %p326 = scmp.eq.s32.totalorder %s29, 0
      %p327 = por %p325, %p326
      %p328 = scmp.ne.s32.totalorder %s320, %s322
      %p329 = scmp.eq.s32.totalorder %s34, 1
      %p330 = por %p328, %p329
      %p331 = scmp.ne.s32.totalorder %s322, %s323
      %p332 = scmp.eq.s32.totalorder %s34, 0
      %p333 = por %p331, %p332
      %p334 = scmp.ne.s32.totalorder %s322, %s323
      %p335 = scmp.eq.s32.totalorder %s35, 1
      %p336 = por %p334, %p335
      %p338 = scmp.ne.s32.totalorder %s323, %s337
      %p339 = scmp.eq.s32.totalorder %s35, 0
      %p340 = por %p338, %p339
      %s342 = sadd.s32 %s341, 1
      %p345 = scmp.eq.s32.totalorder %s29, 1
      %p346 = scmp.ne.s32.totalorder %s341, %s343
      %p347 = scmp.eq.s32.totalorder %s29, 0
      %p348 = por %p346, %p347
      %p349 = scmp.ne.s32.totalorder %s341, %s343
      %p350 = scmp.eq.s32.totalorder %s34, 1
      %p351 = por %p349, %p350
      %p352 = scmp.ne.s32.totalorder %s343, %s344
      %p353 = scmp.eq.s32.totalorder %s34, 0
      %p354 = por %p352, %p353
      %p355 = scmp.ne.s32.totalorder %s343, %s344
      %p356 = scmp.eq.s32.totalorder %s35, 1
      %p357 = por %p355, %p356
      %p359 = scmp.ne.s32.totalorder %s344, %s358
      %p360 = scmp.eq.s32.totalorder %s35, 0
      %p361 = por %p359, %p360
      %s363 = sadd.s32 %s362, 1
      %p366 = scmp.eq.s32.totalorder %s29, 1
      %p367 = scmp.ne.s32.totalorder %s362, %s364
      %p368 = scmp.eq.s32.totalorder %s29, 0
      %p369 = por %p367, %p368
      %p370 = scmp.ne.s32.totalorder %s362, %s364
      %p371 = scmp.eq.s32.totalorder %s34, 1
      %p372 = por %p370, %p371
      %p373 = scmp.ne.s32.totalorder %s364, %s365
      %p374 = scmp.eq.s32.totalorder %s34, 0
      %p375 = por %p373, %p374
      %p376 = scmp.ne.s32.totalorder %s364, %s365
      %p377 = scmp.eq.s32.totalorder %s35, 1
      %p378 = por %p376, %p377
      %p380 = scmp.ne.s32.totalorder %s365, %s379
      %p381 = scmp.eq.s32.totalorder %s35, 0
      %p382 = por %p380, %p381
      %s384 = sadd.s32 %s383, 1
      %p387 = scmp.eq.s32.totalorder %s29, 1
      %p388 = scmp.ne.s32.totalorder %s383, %s385
      %p389 = scmp.eq.s32.totalorder %s29, 0
      %p390 = por %p388, %p389
      %p391 = scmp.ne.s32.totalorder %s383, %s385
      %p392 = scmp.eq.s32.totalorder %s34, 1
      %p393 = por %p391, %p392
      %p394 = scmp.ne.s32.totalorder %s385, %s386
      %p395 = scmp.eq.s32.totalorder %s34, 0
      %p396 = por %p394, %p395
      %p397 = scmp.ne.s32.totalorder %s385, %s386
      %p398 = scmp.eq.s32.totalorder %s35, 1
      %p399 = por %p397, %p398
      %p401 = scmp.ne.s32.totalorder %s386, %s400
      %p402 = scmp.eq.s32.totalorder %s35, 0
      %p403 = por %p401, %p402
      %s405 = sadd.s32 %s404, 1
      %p408 = scmp.eq.s32.totalorder %s29, 1
      %p409 = scmp.ne.s32.totalorder %s404, %s406
      %p410 = scmp.eq.s32.totalorder %s29, 0
      %p411 = por %p409, %p410
      %p412 = scmp.ne.s32.totalorder %s404, %s406
      %p413 = scmp.eq.s32.totalorder %s34, 1
      %p414 = por %p412, %p413
      %p415 = scmp.ne.s32.totalorder %s406, %s407
      %p416 = scmp.eq.s32.totalorder %s34, 0
      %p417 = por %p415, %p416
      %p418 = scmp.ne.s32.totalorder %s406, %s407
      %p419 = scmp.eq.s32.totalorder %s35, 1
      %p420 = por %p418, %p419
      %p422 = scmp.ne.s32.totalorder %s407, %s421
      %p423 = scmp.eq.s32.totalorder %s35, 0
      %p424 = por %p422, %p423
      %s426 = sadd.s32 %s425, 1
      %p429 = scmp.eq.s32.totalorder %s29, 1
      %p430 = scmp.ne.s32.totalorder %s425, %s427
      %p431 = scmp.eq.s32.totalorder %s29, 0
      %p432 = por %p430, %p431
      %p433 = scmp.ne.s32.totalorder %s425, %s427
      %p434 = scmp.eq.s32.totalorder %s34, 1
      %p435 = por %p433, %p434
      %p436 = scmp.ne.s32.totalorder %s427, %s428
      %p437 = scmp.eq.s32.totalorder %s34, 0
      %p438 = por %p436, %p437
      %p439 = scmp.ne.s32.totalorder %s427, %s428
      %p440 = scmp.eq.s32.totalorder %s35, 1
      %p441 = por %p439, %p440
      %p443 = scmp.ne.s32.totalorder %s428, %s442
      %p444 = scmp.eq.s32.totalorder %s35, 0
      %p445 = por %p443, %p444
      %s447 = sadd.s32 %s446, 1
      %p450 = scmp.eq.s32.totalorder %s29, 1
      %p451 = scmp.ne.s32.totalorder %s446, %s448
      %p452 = scmp.eq.s32.totalorder %s29, 0
      %p453 = por %p451, %p452
      %p454 = scmp.ne.s32.totalorder %s446, %s448
      %p455 = scmp.eq.s32.totalorder %s34, 1
      %p456 = por %p454, %p455
      %p457 = scmp.ne.s32.totalorder %s448, %s449
      %p458 = scmp.eq.s32.totalorder %s34, 0
      %p459 = por %p457, %p458
      %p460 = scmp.ne.s32.totalorder %s448, %s449
      %p461 = scmp.eq.s32.totalorder %s35, 1
      %p462 = por %p460, %p461
      %p464 = scmp.ne.s32.totalorder %s449, %s463
      %p465 = scmp.eq.s32.totalorder %s35, 0
      %p466 = por %p464, %p465
      %s467 = ssub.s32 %s29, %s36
      %p468 = scmp.eq.s32.totalorder %s467, 0
      %s470 = sadd.s32 %s469, 1
      %s471 = scalar_select %p468, %s469, %s470
      %p474 = pneg %p468
      %p475 = scmp.eq.s32.totalorder %s29, 1
      %p476 = por %p474, %p475
      %p477 = scmp.ne.s32.totalorder %s469, %s472
      %p478 = scmp.eq.s32.totalorder %s29, 0
      %p479 = por %p477, %p478
      %p480 = scmp.ne.s32.totalorder %s469, %s472
      %p481 = scmp.eq.s32.totalorder %s34, 1
      %p482 = por %p480, %p481
      %p483 = scmp.ne.s32.totalorder %s472, %s473
      %p484 = scmp.eq.s32.totalorder %s34, 0
      %p485 = por %p483, %p484
      %p486 = scmp.ne.s32.totalorder %s472, %s473
      %p487 = scmp.eq.s32.totalorder %s35, 1
      %p488 = por %p486, %p487
      %p490 = scmp.ne.s32.totalorder %s473, %s489
      %p491 = scmp.eq.s32.totalorder %s35, 0
      %p492 = por %p490, %p491
      %p493 = scmp.le.s32.totalorder 1, %s29
      %p494 = scmp.lt.s32.totalorder %s29, 3
      %p495 = pnand %p493, %p494
      %p496 = pneg %p495
      // Predicated region
      $region9: #{kobert_forward.1} parent=5 // pred_check
        _
      $region10: #{kobert_forward.1} parent=5 // pred_check_branch
        %498 = sbr.rel (%p495) target = $region12
      $region11: #{kobert_forward.1} parent=5 // pred_region
        %s499 = ssub.s32 %s29, 1
        // Predicated region
        $region13: #{kobert_forward.1} parent=11 // pred_check
          %p500 = pneg %p102
        $region14: #{kobert_forward.1} parent=11 // pred_check_branch
          %502 = sbr.rel (%p500) target = $region16
        $region15: #{kobert_forward.1} parent=11 // pred_region
          _
        $region16: #{kobert_forward.1} parent=11 // pred_fallthru
          _
        // Predicated region
        $region17: #{kobert_forward.1} parent=11 // pred_check
          %p503 = pneg %p123
        $region18: #{kobert_forward.1} parent=11 // pred_check_branch
          %505 = sbr.rel (%p503) target = $region20
        $region19: #{kobert_forward.1} parent=11 // pred_region
          _
        $region20: #{kobert_forward.1} parent=11 // pred_fallthru
          _
        // Predicated region
        $region21: #{kobert_forward.1} parent=11 // pred_check
          %p506 = pneg %p144
        $region22: #{kobert_forward.1} parent=11 // pred_check_branch
          %508 = sbr.rel (%p506) target = $region24
        $region23: #{kobert_forward.1} parent=11 // pred_region
          _
        $region24: #{kobert_forward.1} parent=11 // pred_fallthru
          _
        // Predicated region
        $region25: #{kobert_forward.1} parent=11 // pred_check
          %p509 = pneg %p165
        $region26: #{kobert_forward.1} parent=11 // pred_check_branch
          %511 = sbr.rel (%p509) target = $region28
        $region27: #{kobert_forward.1} parent=11 // pred_region
          _
        $region28: #{kobert_forward.1} parent=11 // pred_fallthru
          _
        // Predicated region
        $region29: #{kobert_forward.1} parent=11 // pred_check
          %p512 = pneg %p186
        $region30: #{kobert_forward.1} parent=11 // pred_check_branch
          %514 = sbr.rel (%p512) target = $region32
        $region31: #{kobert_forward.1} parent=11 // pred_region
          _
        $region32: #{kobert_forward.1} parent=11 // pred_fallthru
          _
        // Predicated region
        $region33: #{kobert_forward.1} parent=11 // pred_check
          %p515 = pneg %p207
        $region34: #{kobert_forward.1} parent=11 // pred_check_branch
          %517 = sbr.rel (%p515) target = $region36
        $region35: #{kobert_forward.1} parent=11 // pred_region
          _
        $region36: #{kobert_forward.1} parent=11 // pred_fallthru
          _
        // Predicated region
        $region37: #{kobert_forward.1} parent=11 // pred_check
          %p518 = pneg %p228
        $region38: #{kobert_forward.1} parent=11 // pred_check_branch
          %520 = sbr.rel (%p518) target = $region40
        $region39: #{kobert_forward.1} parent=11 // pred_region
          _
        $region40: #{kobert_forward.1} parent=11 // pred_fallthru
          _
        // Predicated region
        $region41: #{kobert_forward.1} parent=11 // pred_check
          %p521 = pneg %p249
        $region42: #{kobert_forward.1} parent=11 // pred_check_branch
          %523 = sbr.rel (%p521) target = $region44
        $region43: #{kobert_forward.1} parent=11 // pred_region
          _
        $region44: #{kobert_forward.1} parent=11 // pred_fallthru
          _
        // Predicated region
        $region45: #{kobert_forward.1} parent=11 // pred_check
          %p524 = pneg %p270
        $region46: #{kobert_forward.1} parent=11 // pred_check_branch
          %526 = sbr.rel (%p524) target = $region48
        $region47: #{kobert_forward.1} parent=11 // pred_region
          _
        $region48: #{kobert_forward.1} parent=11 // pred_fallthru
          _
        // Predicated region
        $region49: #{kobert_forward.1} parent=11 // pred_check
          %p527 = pneg %p291
        $region50: #{kobert_forward.1} parent=11 // pred_check_branch
          %529 = sbr.rel (%p527) target = $region52
        $region51: #{kobert_forward.1} parent=11 // pred_region
          _
        $region52: #{kobert_forward.1} parent=11 // pred_fallthru
          _
        // Predicated region
        $region53: #{kobert_forward.1} parent=11 // pred_check
          %p530 = pneg %p312
        $region54: #{kobert_forward.1} parent=11 // pred_check_branch
          %532 = sbr.rel (%p530) target = $region56
        $region55: #{kobert_forward.1} parent=11 // pred_region
          _
        $region56: #{kobert_forward.1} parent=11 // pred_fallthru
          _
        // Predicated region
        $region57: #{kobert_forward.1} parent=11 // pred_check
          %p533 = pneg %p333
        $region58: #{kobert_forward.1} parent=11 // pred_check_branch
          %535 = sbr.rel (%p533) target = $region60
        $region59: #{kobert_forward.1} parent=11 // pred_region
          _
        $region60: #{kobert_forward.1} parent=11 // pred_fallthru
          _
        // Predicated region
        $region61: #{kobert_forward.1} parent=11 // pred_check
          %p536 = pneg %p354
        $region62: #{kobert_forward.1} parent=11 // pred_check_branch
          %538 = sbr.rel (%p536) target = $region64
        $region63: #{kobert_forward.1} parent=11 // pred_region
          _
        $region64: #{kobert_forward.1} parent=11 // pred_fallthru
          _
        // Predicated region
        $region65: #{kobert_forward.1} parent=11 // pred_check
          %p539 = pneg %p375
        $region66: #{kobert_forward.1} parent=11 // pred_check_branch
          %541 = sbr.rel (%p539) target = $region68
        $region67: #{kobert_forward.1} parent=11 // pred_region
          _
        $region68: #{kobert_forward.1} parent=11 // pred_fallthru
          _
        // Predicated region
        $region69: #{kobert_forward.1} parent=11 // pred_check
          %p542 = pneg %p396
        $region70: #{kobert_forward.1} parent=11 // pred_check_branch
          %544 = sbr.rel (%p542) target = $region72
        $region71: #{kobert_forward.1} parent=11 // pred_region
          _
        $region72: #{kobert_forward.1} parent=11 // pred_fallthru
          _
        // Predicated region
        $region73: #{kobert_forward.1} parent=11 // pred_check
          %p545 = pneg %p417
        $region74: #{kobert_forward.1} parent=11 // pred_check_branch
          %547 = sbr.rel (%p545) target = $region76
        $region75: #{kobert_forward.1} parent=11 // pred_region
          _
        $region76: #{kobert_forward.1} parent=11 // pred_fallthru
          _
        // Predicated region
        $region77: #{kobert_forward.1} parent=11 // pred_check
          %p548 = pneg %p438
        $region78: #{kobert_forward.1} parent=11 // pred_check_branch
          %550 = sbr.rel (%p548) target = $region80
        $region79: #{kobert_forward.1} parent=11 // pred_region
          _
        $region80: #{kobert_forward.1} parent=11 // pred_fallthru
          _
        // Predicated region
        $region81: #{kobert_forward.1} parent=11 // pred_check
          %p551 = pneg %p459
        $region82: #{kobert_forward.1} parent=11 // pred_check_branch
          %553 = sbr.rel (%p551) target = $region84
        $region83: #{kobert_forward.1} parent=11 // pred_region
          _
        $region84: #{kobert_forward.1} parent=11 // pred_fallthru
          _
      $region12: #{kobert_forward.1} parent=5 // pred_fallthru
        _
      %p554 = scmp.lt.s32.totalorder %s29, 2
      // Predicated region
      $region85: #{kobert_forward.1} parent=5 // pred_check
        %p555 = pneg %p554
      $region86: #{kobert_forward.1} parent=5 // pred_check_branch
        %557 = sbr.rel (%p555) target = $region88
      $region87: #{kobert_forward.1} parent=5 // pred_region
        // Predicated region
        $region89: #{kobert_forward.1} parent=87 // pred_check
          %p558 = pneg %p49
        $region90: #{kobert_forward.1} parent=87 // pred_check_branch
          %560 = sbr.rel (%p558) target = $region92
        $region91: #{kobert_forward.1} parent=87 // pred_region
          %p561 = scmp.lt.s32.totalorder %s29, 1
          %s562 = scalar_select %p561, %s29, 1
          %s563 = smul.addr %s562, 8
          %s564 = scalar_lea.vmem %s0, %s563
        $region92: #{kobert_forward.1} parent=87 // pred_fallthru
          _
        // Predicated region
        $region93: #{kobert_forward.1} parent=87 // pred_check
          %p565 = pneg %p75
        $region94: #{kobert_forward.1} parent=87 // pred_check_branch
          %567 = sbr.rel (%p565) target = $region96
        $region95: #{kobert_forward.1} parent=87 // pred_region
          %p568 = scmp.lt.s32.totalorder %s29, 1
          %s569 = scalar_select %p568, %s29, 1
          %s570 = scalar_lea.vmem %s1, %s569
        $region96: #{kobert_forward.1} parent=87 // pred_fallthru
          _
      $region88: #{kobert_forward.1} parent=5 // pred_fallthru
        _
      %p571 = scmp.le.s32.totalorder 1, %s29
      %p572 = scmp.lt.s32.totalorder %s29, 3
      %p573 = pnand %p571, %p572
      %p574 = pneg %p573
      // Predicated region
      $region97: #{kobert_forward.1} parent=5 // pred_check
        _
      $region98: #{kobert_forward.1} parent=5 // pred_check_branch
        %576 = sbr.rel (%p573) target = $region100
      $region99: #{kobert_forward.1} parent=5 // pred_region
        %s577 = ssub.s32 %s29, 1
        %p578 = scmp.lt.s32.totalorder %s34, 1
        %s579 = scalar_select %p578, %s34, 1
        %s580 = smul.addr %s579, 8
        %s581 = scalar_lea.vmem %s0, %s580
        %p582 = pneg %p55
        %p583 = pneg %p52
        %p584 = scmp.lt.s32.totalorder %s34, 1
        %s585 = scalar_select %p584, %s34, 1
        %s586 = scalar_lea.vmem %s1, %s585
        %p587 = pneg %p81
        %p588 = pneg %p78
        %p589 = pneg %p102
        %p590 = pneg %p99
        %p591 = pneg %p123
        %p592 = pneg %p120
        %p593 = pneg %p144
        %p594 = pneg %p141
        %p595 = pneg %p165
        %p596 = pneg %p162
        %p597 = pneg %p186
        %p598 = pneg %p183
        %p599 = pneg %p207
        %p600 = pneg %p204
        %p601 = pneg %p228
        %p602 = pneg %p225
        %p603 = pneg %p249
        %p604 = pneg %p246
        %p605 = pneg %p270
        %p606 = pneg %p267
        %p607 = pneg %p291
        %p608 = pneg %p288
        %p609 = pneg %p312
        %p610 = pneg %p309
        %p611 = pneg %p333
        %p612 = pneg %p330
        %p613 = pneg %p354
        %p614 = pneg %p351
        %p615 = pneg %p375
        %p616 = pneg %p372
        %p617 = pneg %p396
        %p618 = pneg %p393
        %p619 = pneg %p417
        %p620 = pneg %p414
        %p621 = pneg %p438
        %p622 = pneg %p435
        %p623 = pneg %p459
        %p624 = pneg %p456
        %p625 = pneg %p485
        %p626 = pneg %p482
        %s627 = sand.u32 %s472, 1
        %s628 = scalar_lea.sflag [#allocation3], %s627
        %s629 = sand.u32 %s472, 1
        %s630 = scalar_lea.vmem [#allocation2], %s629
        %p631 = scmp.lt.s32.totalorder %s34, 1
        %s632 = scalar_select %p631, %s34, 1
        %s633 = smul.addr %s632, 8
        %s634 = scalar_lea.vmem %s0, %s633
        %p635 = scmp.lt.s32.totalorder %s34, 1
        %s636 = scalar_select %p635, %s34, 1
        %s637 = scalar_lea.vmem %s1, %s636
        %v639 = vld [vmem:[%s634] sm:$0xff]
        %v640 = vld [vmem:[%s2] sm:$0x1]
        %v641 = vld [vmem:[%s3] sm:$0x1]
        %vm642 = vcmask 261120
        %v643 = vsel %vm642, %v639, 0.0
        %644 = vadd.xlane.f32.xlu0 %v643
        %v645 = vpop.xlane.xlu0 %644
        %v646 = vrcp.pop 32.0
        %v647 = vmul.f32 %v645, %v646
        %v648 = vmul.f32 %v639, %v639
        %v649 = vsel %vm642, %v648, 0.0
        %650 = vadd.xlane.f32.xlu0 %v649
        %v651 = vpop.xlane.xlu0 %650
        %v652 = vmul.f32 %v651, %v646
        %v653 = vmul.f32 %v647, %v647
        %v654 = vsub.f32 %v652, %v653
        %v655 = vmax.f32 %v654, 0.0
        %v656 = vsub.f32 %v639, %v647
        %v657 = vadd.f32 %v655, 1e-12
        %v658 = vrsqrt.pop %v657
        %v659 = vmul.f32 %v656, %v658
        %v661 = vlaneseq
        %v662 = vshrl.u32 %v661, 7
        %v663 = vsub.s32 0, %v662
        %v664 = vrot.slane %v640, %v663
        %v666 = vmul.f32 %v659, %v664
        %v668 = vlaneseq
        %v669 = vshrl.u32 %v668, 7
        %v670 = vsub.s32 0, %v669
        %v671 = vrot.slane %v641, %v670
        %v673 = vadd.f32 %v666, %v671
        %v674 = vld [vmem:[%s637] sm:$0x1]
        %v675 = vsub.f32 1.0, %v674
        %v676 = vmul.f32 %v675, -10000.0
        %v677 = vpack.c.bf16 %v673, %v673
        %v678 = vld [vmem:[%s4] sm:$0xf]
        %v679 = vld [vmem:[%s4 + $0x4] sm:$0xf]
        %v680 = vld [vmem:[%s4 + $0x8] sm:$0xf]
        %v681 = vld [vmem:[%s4 + $0xc] sm:$0xf]
        %v682 = vld [vmem:[%s5] sm:$0x1]
        %v684 = vlaneseq
        %v685 = vshrl.u32 %v684, 7
        %v686 = vsub.s32 0, %v685
        %v687 = vrot.slane %v682, %v686
        %v693 = vunpack.c.l.b16 %v678
        %v694 = vunpack.c.l.b16 %v679
        %v695 = vunpack.c.l.b16 %v680
        %v696 = vunpack.c.l.b16 %v681
        %v697 = vpack.c.b16 %v694, %v693
        %v698 = vpack.c.b16 %v696, %v695
        %v702 = vsel %vm642, %v677, 0
        %704 = vmatprep.subr.bf16.mxu0 0
        %705 = vmatpush1.bf16.msra.mxu0 0
        %706 = vmatprep.subr.bf16.mxu0 0
        %707 = vmatpush1.bf16.msra.mxu0 0
        %708 = vmatprep.subr.bf16.mxu0 0
        %709 = vmatpush1.bf16.msra.mxu0 0
        %710 = vmatprep.subr.bf16.mxu0 0
        %711 = vmatpush1.bf16.msra.mxu0 0
        %712 = vmatprep.subr.bf16.mxu0 0
        %713 = vmatpush1.bf16.msra.mxu0 0
        %714 = vmatprep.subr.bf16.mxu0 0
        %715 = vmatpush1.bf16.msra.mxu0 0
        %716 = vmatprep.subr.bf16.mxu0 0
        %717 = vmatpush1.bf16.msra.mxu0 %v698
        %718 = vmatprep.subr.bf16.mxu0 0
        %719 = vmatpush1.bf16.msra.mxu0 %v697
        %720 = vmatprep.subr.bf16.mxu0 0
        %721 = vmatpush2.bf16.msra.mxu0 0
        %722 = vmatprep.subr.bf16.mxu0 0
        %723 = vmatpush2.bf16.msra.mxu0 0
        %724 = vmatprep.subr.bf16.mxu0 0
        %725 = vmatpush2.bf16.msra.mxu0 0
        %726 = vmatprep.subr.bf16.mxu0 0
        %727 = vmatpush2.bf16.msra.mxu0 0
        %728 = vmatprep.subr.bf16.mxu0 0
        %729 = vmatpush2.bf16.msra.mxu0 0
        %730 = vmatprep.subr.bf16.mxu0 0
        %731 = vmatpush2.bf16.msra.mxu0 0
        %732 = vmatprep.subr.bf16.mxu0 0
        %733 = vmatpush2.bf16.msra.mxu0 0
        %734 = vmatprep.subr.bf16.mxu0 0
        %735 = vmatpush2.bf16.msra.mxu0 0
        %736 = vmatprep.mubr.bf16.mxu0 0
        %737 = vmatmul.mubr.bf16.gmra.mxu0 %v702
        %v738 = vpop.f32.mrf.mxu0
        %v739 = vadd.f32 %v687, %v738
        %v740 = vpop.f32.mrf.mxu0
        %v741 = vpop.f32.mrf.mxu0
        %v742 = vpop.f32.mrf.mxu0
        %743 = vdwg.mxu0
        %v744 = vpack.c.bf16 %v739, %v739
        %746 = vrot.lane.b32.xlu0 %v744, 112
        %v747 = vpop.permute.xlu0 %746
        %v749 = vunpack.c.l.s4 1983009808
        %v750 = vunpack.c.0.s8 %v749
        %v751 = vlaneseq
        %v752 = vshrl.u32 %v751, 7
        %v753 = vsub.s32 %v750, %v752
        %v754 = vrot.slane %v744, %v753
        %v755 = vcombine.high %v754, 0
        %v757 = vunpack.c.l.s4 1934713408
        %v758 = vunpack.c.0.s8 %v757
        %v759 = vlaneseq
        %v760 = vshrl.u32 %v759, 7
        %v761 = vsub.s32 %v758, %v760
        %v762 = vrot.slane %v754, %v761
        %v764 = vunpack.c.l.s4 1934713408
        %v765 = vunpack.c.0.s8 %v764
        %v766 = vlaneseq
        %v767 = vshrl.u32 %v766, 7
        %v768 = vsub.s32 %v765, %v767
        %v769 = vrot.slane %v755, %v768
        %v770 = vcombine.high %v762, 0
        %v771 = vcombine.high %v769, 0
        %v774 = vunpack.c.l.s4 1983009808
        %v775 = vunpack.c.0.s8 %v774
        %v776 = vlaneseq
        %v777 = vshrl.u32 %v776, 7
        %v778 = vsub.s32 %v775, %v777
        %v779 = vrot.slane %v747, %v778
        %v780 = vcombine.high %v779, 0
        %v782 = vunpack.c.l.s4 1934713408
        %v783 = vunpack.c.0.s8 %v782
        %v784 = vlaneseq
        %v785 = vshrl.u32 %v784, 7
        %v786 = vsub.s32 %v783, %v785
        %v787 = vrot.slane %v779, %v786
        %v789 = vunpack.c.l.s4 1934713408
        %v790 = vunpack.c.0.s8 %v789
        %v791 = vlaneseq
        %v792 = vshrl.u32 %v791, 7
        %v793 = vsub.s32 %v790, %v792
        %v794 = vrot.slane %v780, %v793
        %v795 = vcombine.high %v787, 0
        %v796 = vcombine.high %v794, 0
        %v799 = vpack.i.b16 %v787, %v762
        %v801 = vshrl.u32 %v762, 16
        %v802 = vshrl.u32 %v787, 16
        %v803 = vpack.i.b16 %v802, %v801
        %v807 = vpack.i.b16 %v795, %v770
        %v809 = vshrl.u32 %v770, 16
        %v810 = vshrl.u32 %v795, 16
        %v811 = vpack.i.b16 %v810, %v809
        %v815 = vpack.i.b16 %v794, %v769
        %v817 = vshrl.u32 %v769, 16
        %v818 = vshrl.u32 %v794, 16
        %v819 = vpack.i.b16 %v818, %v817
        %v823 = vpack.i.b16 %v796, %v771
        %v825 = vshrl.u32 %v771, 16
        %v826 = vshrl.u32 %v796, 16
        %v827 = vpack.i.b16 %v826, %v825
        %v829 = vcombine.low %v799, %v815
        %v831 = vunpack.c.l.s4 1983009808
        %v832 = vunpack.c.0.s8 %v831
        %v833 = vlaneseq
        %v834 = vshrl.u32 %v833, 7
        %v835 = vsub.s32 %v832, %v834
        %v836 = vrot.slane %v829, %v835
        %v837 = vcombine.low %v807, %v823
        %v839 = vunpack.c.l.s4 1983009808
        %v840 = vunpack.c.0.s8 %v839
        %v841 = vlaneseq
        %v842 = vshrl.u32 %v841, 7
        %v843 = vsub.s32 %v840, %v842
        %v844 = vrot.slane %v837, %v843
        %v845 = vcombine.low %v836, %v844
        %v847 = vunpack.c.l.s4 1934713408
        %v848 = vunpack.c.0.s8 %v847
        %v849 = vlaneseq
        %v850 = vshrl.u32 %v849, 7
        %v851 = vsub.s32 %v848, %v850
        %v852 = vrot.slane %v845, %v851
        %v853 = vcombine.low %v803, %v819
        %v855 = vunpack.c.l.s4 1983009808
        %v856 = vunpack.c.0.s8 %v855
        %v857 = vlaneseq
        %v858 = vshrl.u32 %v857, 7
        %v859 = vsub.s32 %v856, %v858
        %v860 = vrot.slane %v853, %v859
        %v861 = vcombine.low %v811, %v827
        %v863 = vunpack.c.l.s4 1983009808
        %v864 = vunpack.c.0.s8 %v863
        %v865 = vlaneseq
        %v866 = vshrl.u32 %v865, 7
        %v867 = vsub.s32 %v864, %v866
        %v868 = vrot.slane %v861, %v867
        %v869 = vcombine.low %v860, %v868
        %v871 = vunpack.c.l.s4 1934713408
        %v872 = vunpack.c.0.s8 %v871
        %v873 = vlaneseq
        %v874 = vshrl.u32 %v873, 7
        %v875 = vsub.s32 %v872, %v874
        %v876 = vrot.slane %v869, %v875
        %v879 = vpack.i.b16 %v876, %v852
        %v880 = vshrl.u32 %v852, 16
        %v881 = vshrl.u32 %v876, 16
        %v882 = vpack.i.b16 %v881, %v880
        %883 = vrot.lane.b32.xlu0 %v744, 96
        %v884 = vpop.permute.xlu0 %883
        %885 = vrot.lane.b32.xlu0 %v747, 96
        %v886 = vpop.permute.xlu0 %885
        %v889 = vunpack.c.l.s4 1983009808
        %v890 = vunpack.c.0.s8 %v889
        %v891 = vlaneseq
        %v892 = vshrl.u32 %v891, 7
        %v893 = vsub.s32 %v890, %v892
        %v894 = vrot.slane %v884, %v893
        %v895 = vcombine.high %v894, 0
        %v897 = vunpack.c.l.s4 1934713408
        %v898 = vunpack.c.0.s8 %v897
        %v899 = vlaneseq
        %v900 = vshrl.u32 %v899, 7
        %v901 = vsub.s32 %v898, %v900
        %v902 = vrot.slane %v894, %v901
        %v904 = vunpack.c.l.s4 1934713408
        %v905 = vunpack.c.0.s8 %v904
        %v906 = vlaneseq
        %v907 = vshrl.u32 %v906, 7
        %v908 = vsub.s32 %v905, %v907
        %v909 = vrot.slane %v895, %v908
        %v910 = vcombine.high %v902, 0
        %v911 = vcombine.high %v909, 0
        %v914 = vunpack.c.l.s4 1983009808
        %v915 = vunpack.c.0.s8 %v914
        %v916 = vlaneseq
        %v917 = vshrl.u32 %v916, 7
        %v918 = vsub.s32 %v915, %v917
        %v919 = vrot.slane %v886, %v918
        %v920 = vcombine.high %v919, 0
        %v922 = vunpack.c.l.s4 1934713408
        %v923 = vunpack.c.0.s8 %v922
        %v924 = vlaneseq
        %v925 = vshrl.u32 %v924, 7
        %v926 = vsub.s32 %v923, %v925
        %v927 = vrot.slane %v919, %v926
        %v929 = vunpack.c.l.s4 1934713408
        %v930 = vunpack.c.0.s8 %v929
        %v931 = vlaneseq
        %v932 = vshrl.u32 %v931, 7
        %v933 = vsub.s32 %v930, %v932
        %v934 = vrot.slane %v920, %v933
        %v935 = vcombine.high %v927, 0
        %v936 = vcombine.high %v934, 0
        %v939 = vpack.i.b16 %v927, %v902
        %v941 = vshrl.u32 %v902, 16
        %v942 = vshrl.u32 %v927, 16
        %v943 = vpack.i.b16 %v942, %v941
        %v947 = vpack.i.b16 %v935, %v910
        %v949 = vshrl.u32 %v910, 16
        %v950 = vshrl.u32 %v935, 16
        %v951 = vpack.i.b16 %v950, %v949
        %v955 = vpack.i.b16 %v934, %v909
        %v957 = vshrl.u32 %v909, 16
        %v958 = vshrl.u32 %v934, 16
        %v959 = vpack.i.b16 %v958, %v957
        %v963 = vpack.i.b16 %v936, %v911
        %v965 = vshrl.u32 %v911, 16
        %v966 = vshrl.u32 %v936, 16
        %v967 = vpack.i.b16 %v966, %v965
        %v969 = vcombine.low %v939, %v955
        %v971 = vunpack.c.l.s4 1983009808
        %v972 = vunpack.c.0.s8 %v971
        %v973 = vlaneseq
        %v974 = vshrl.u32 %v973, 7
        %v975 = vsub.s32 %v972, %v974
        %v976 = vrot.slane %v969, %v975
        %v977 = vcombine.low %v947, %v963
        %v979 = vunpack.c.l.s4 1983009808
        %v980 = vunpack.c.0.s8 %v979
        %v981 = vlaneseq
        %v982 = vshrl.u32 %v981, 7
        %v983 = vsub.s32 %v980, %v982
        %v984 = vrot.slane %v977, %v983
        %v985 = vcombine.low %v976, %v984
        %v987 = vunpack.c.l.s4 1934713408
        %v988 = vunpack.c.0.s8 %v987
        %v989 = vlaneseq
        %v990 = vshrl.u32 %v989, 7
        %v991 = vsub.s32 %v988, %v990
        %v992 = vrot.slane %v985, %v991
        %v993 = vcombine.low %v943, %v959
        %v995 = vunpack.c.l.s4 1983009808
        %v996 = vunpack.c.0.s8 %v995
        %v997 = vlaneseq
        %v998 = vshrl.u32 %v997, 7
        %v999 = vsub.s32 %v996, %v998
        %v1000 = vrot.slane %v993, %v999
        %v1001 = vcombine.low %v951, %v967
        %v1003 = vunpack.c.l.s4 1983009808
        %v1004 = vunpack.c.0.s8 %v1003
        %v1005 = vlaneseq
        %v1006 = vshrl.u32 %v1005, 7
        %v1007 = vsub.s32 %v1004, %v1006
        %v1008 = vrot.slane %v1001, %v1007
        %v1009 = vcombine.low %v1000, %v1008
        %v1011 = vunpack.c.l.s4 1934713408
        %v1012 = vunpack.c.0.s8 %v1011
        %v1013 = vlaneseq
        %v1014 = vshrl.u32 %v1013, 7
        %v1015 = vsub.s32 %v1012, %v1014
        %v1016 = vrot.slane %v1009, %v1015
        %v1019 = vpack.i.b16 %v1016, %v992
        %v1020 = vshrl.u32 %v992, 16
        %v1021 = vshrl.u32 %v1016, 16
        %v1022 = vpack.i.b16 %v1021, %v1020
        %1023 = vrot.lane.b32.xlu0 %v744, 64
        %v1024 = vpop.permute.xlu0 %1023
        %1025 = vrot.lane.b32.xlu0 %v747, 64
        %v1026 = vpop.permute.xlu0 %1025
        %v1029 = vunpack.c.l.s4 1983009808
        %v1030 = vunpack.c.0.s8 %v1029
        %v1031 = vlaneseq
        %v1032 = vshrl.u32 %v1031, 7
        %v1033 = vsub.s32 %v1030, %v1032
        %v1034 = vrot.slane %v1024, %v1033
        %v1035 = vcombine.high %v1034, 0
        %v1037 = vunpack.c.l.s4 1934713408
        %v1038 = vunpack.c.0.s8 %v1037
        %v1039 = vlaneseq
        %v1040 = vshrl.u32 %v1039, 7
        %v1041 = vsub.s32 %v1038, %v1040
        %v1042 = vrot.slane %v1034, %v1041
        %v1044 = vunpack.c.l.s4 1934713408
        %v1045 = vunpack.c.0.s8 %v1044
        %v1046 = vlaneseq
        %v1047 = vshrl.u32 %v1046, 7
        %v1048 = vsub.s32 %v1045, %v1047
        %v1049 = vrot.slane %v1035, %v1048
        %v1050 = vcombine.high %v1042, 0
        %v1051 = vcombine.high %v1049, 0
        %v1054 = vunpack.c.l.s4 1983009808
        %v1055 = vunpack.c.0.s8 %v1054
        %v1056 = vlaneseq
        %v1057 = vshrl.u32 %v1056, 7
        %v1058 = vsub.s32 %v1055, %v1057
        %v1059 = vrot.slane %v1026, %v1058
        %v1060 = vcombine.high %v1059, 0
        %v1062 = vunpack.c.l.s4 1934713408
        %v1063 = vunpack.c.0.s8 %v1062
        %v1064 = vlaneseq
        %v1065 = vshrl.u32 %v1064, 7
        %v1066 = vsub.s32 %v1063, %v1065
        %v1067 = vrot.slane %v1059, %v1066
        %v1069 = vunpack.c.l.s4 1934713408
        %v1070 = vunpack.c.0.s8 %v1069
        %v1071 = vlaneseq
        %v1072 = vshrl.u32 %v1071, 7
        %v1073 = vsub.s32 %v1070, %v1072
        %v1074 = vrot.slane %v1060, %v1073
        %v1075 = vcombine.high %v1067, 0
        %v1076 = vcombine.high %v1074, 0
        %v1079 = vpack.i.b16 %v1067, %v1042
        %v1081 = vshrl.u32 %v1042, 16
        %v1082 = vshrl.u32 %v1067, 16
        %v1083 = vpack.i.b16 %v1082, %v1081
        %v1087 = vpack.i.b16 %v1075, %v1050
        %v1089 = vshrl.u32 %v1050, 16
        %v1090 = vshrl.u32 %v1075, 16
        %v1091 = vpack.i.b16 %v1090, %v1089
        %v1095 = vpack.i.b16 %v1074, %v1049
        %v1097 = vshrl.u32 %v1049, 16
        %v1098 = vshrl.u32 %v1074, 16
        %v1099 = vpack.i.b16 %v1098, %v1097
        %v1103 = vpack.i.b16 %v1076, %v1051
        %v1105 = vshrl.u32 %v1051, 16
        %v1106 = vshrl.u32 %v1076, 16
        %v1107 = vpack.i.b16 %v1106, %v1105
        %v1109 = vcombine.low %v1079, %v1095
        %v1111 = vunpack.c.l.s4 1983009808
        %v1112 = vunpack.c.0.s8 %v1111
        %v1113 = vlaneseq
        %v1114 = vshrl.u32 %v1113, 7
        %v1115 = vsub.s32 %v1112, %v1114
        %v1116 = vrot.slane %v1109, %v1115
        %v1117 = vcombine.low %v1087, %v1103
        %v1119 = vunpack.c.l.s4 1983009808
        %v1120 = vunpack.c.0.s8 %v1119
        %v1121 = vlaneseq
        %v1122 = vshrl.u32 %v1121, 7
        %v1123 = vsub.s32 %v1120, %v1122
        %v1124 = vrot.slane %v1117, %v1123
        %v1125 = vcombine.low %v1116, %v1124
        %v1127 = vunpack.c.l.s4 1934713408
        %v1128 = vunpack.c.0.s8 %v1127
        %v1129 = vlaneseq
        %v1130 = vshrl.u32 %v1129, 7
        %v1131 = vsub.s32 %v1128, %v1130
        %v1132 = vrot.slane %v1125, %v1131
        %v1133 = vcombine.low %v1083, %v1099
        %v1135 = vunpack.c.l.s4 1983009808
        %v1136 = vunpack.c.0.s8 %v1135
        %v1137 = vlaneseq
        %v1138 = vshrl.u32 %v1137, 7
        %v1139 = vsub.s32 %v1136, %v1138
        %v1140 = vrot.slane %v1133, %v1139
        %v1141 = vcombine.low %v1091, %v1107
        %v1143 = vunpack.c.l.s4 1983009808
        %v1144 = vunpack.c.0.s8 %v1143
        %v1145 = vlaneseq
        %v1146 = vshrl.u32 %v1145, 7
        %v1147 = vsub.s32 %v1144, %v1146
        %v1148 = vrot.slane %v1141, %v1147
        %v1149 = vcombine.low %v1140, %v1148
        %v1151 = vunpack.c.l.s4 1934713408
        %v1152 = vunpack.c.0.s8 %v1151
        %v1153 = vlaneseq
        %v1154 = vshrl.u32 %v1153, 7
        %v1155 = vsub.s32 %v1152, %v1154
        %v1156 = vrot.slane %v1149, %v1155
        %v1159 = vpack.i.b16 %v1156, %v1132
        %v1160 = vshrl.u32 %v1132, 16
        %v1161 = vshrl.u32 %v1156, 16
        %v1162 = vpack.i.b16 %v1161, %v1160
        %v1164 = vlaneseq
        %v1165 = vshrl.u32 %v1164, 7
        %v1166 = vsub.s32 0, %v1165
        %v1167 = vrot.slane %v676, %v1166
        %vm1169 = vcmask 130048
        %v1171 = vsel %vm1169, %v879, 0
        %v1174 = vsel %vm1169, %v1019, 0
        %1176 = vmatprep.subr.bf16.mxu0 0
        %1177 = vmatpush1.bf16.xpose.msra.mxu0 0
        %1178 = vmatprep.subr.bf16.mxu0 0
        %1179 = vmatpush1.bf16.xpose.msra.mxu0 0
        %1180 = vmatprep.subr.bf16.mxu0 0
        %1181 = vmatpush1.bf16.xpose.msra.mxu0 0
        %1182 = vmatprep.subr.bf16.mxu0 0
        %1183 = vmatpush1.bf16.xpose.msra.mxu0 0
        %1184 = vmatprep.subr.bf16.mxu0 0
        %1185 = vmatpush1.bf16.xpose.msra.mxu0 0
        %1186 = vmatprep.subr.bf16.mxu0 0
        %1187 = vmatpush1.bf16.xpose.msra.mxu0 0
        %1188 = vmatprep.subr.bf16.mxu0 0
        %1189 = vmatpush1.bf16.xpose.msra.mxu0 0
        %1190 = vmatprep.subr.bf16.mxu0 0
        %1191 = vmatpush1.bf16.xpose.msra.mxu0 %v1174
        %1192 = vmatprep.subr.bf16.mxu0 0
        %1193 = vmatpush2.bf16.xpose.msra.mxu0 0
        %1194 = vmatprep.subr.bf16.mxu0 0
        %1195 = vmatpush2.bf16.xpose.msra.mxu0 0
        %1196 = vmatprep.subr.bf16.mxu0 0
        %1197 = vmatpush2.bf16.xpose.msra.mxu0 0
        %1198 = vmatprep.subr.bf16.mxu0 0
        %1199 = vmatpush2.bf16.xpose.msra.mxu0 0
        %1200 = vmatprep.subr.bf16.mxu0 0
        %1201 = vmatpush2.bf16.xpose.msra.mxu0 0
        %1202 = vmatprep.subr.bf16.mxu0 0
        %1203 = vmatpush2.bf16.xpose.msra.mxu0 0
        %1204 = vmatprep.subr.bf16.mxu0 0
        %1205 = vmatpush2.bf16.xpose.msra.mxu0 0
        %1206 = vmatprep.subr.bf16.mxu0 0
        %1207 = vmatpush2.bf16.xpose.msra.mxu0 0
        %1208 = vmatprep.mubr.bf16.mxu0 0
        %1209 = vmatmul.mubr.bf16.gmra.mxu0 %v1171
        %v1210 = vpop.f32.mrf.mxu0
        %v1211 = vadd.f32 %v1167, %v1210
        %v1212 = vpop.f32.mrf.mxu0
        %v1213 = vpop.f32.mrf.mxu0
        %v1214 = vpop.f32.mrf.mxu0
        %1215 = vdwg.mxu0
        %v1217 = vsel %vm1169, %v882, 0
        %v1220 = vsel %vm1169, %v1022, 0
        %1222 = vmatprep.subr.bf16.mxu0 0
        %1223 = vmatpush1.bf16.xpose.msra.mxu0 0
        %1224 = vmatprep.subr.bf16.mxu0 0
        %1225 = vmatpush1.bf16.xpose.msra.mxu0 0
        %1226 = vmatprep.subr.bf16.mxu0 0
        %1227 = vmatpush1.bf16.xpose.msra.mxu0 0
        %1228 = vmatprep.subr.bf16.mxu0 0
        %1229 = vmatpush1.bf16.xpose.msra.mxu0 0
        %1230 = vmatprep.subr.bf16.mxu0 0
        %1231 = vmatpush1.bf16.xpose.msra.mxu0 0
        %1232 = vmatprep.subr.bf16.mxu0 0
        %1233 = vmatpush1.bf16.xpose.msra.mxu0 0
        %1234 = vmatprep.subr.bf16.mxu0 0
        %1235 = vmatpush1.bf16.xpose.msra.mxu0 0
        %1236 = vmatprep.subr.bf16.mxu0 0
        %1237 = vmatpush1.bf16.xpose.msra.mxu0 %v1220
        %1238 = vmatprep.subr.bf16.mxu0 0
        %1239 = vmatpush2.bf16.xpose.msra.mxu0 0
        %1240 = vmatprep.subr.bf16.mxu0 0
        %1241 = vmatpush2.bf16.xpose.msra.mxu0 0
        %1242 = vmatprep.subr.bf16.mxu0 0
        %1243 = vmatpush2.bf16.xpose.msra.mxu0 0
        %1244 = vmatprep.subr.bf16.mxu0 0
        %1245 = vmatpush2.bf16.xpose.msra.mxu0 0
        %1246 = vmatprep.subr.bf16.mxu0 0
        %1247 = vmatpush2.bf16.xpose.msra.mxu0 0
        %1248 = vmatprep.subr.bf16.mxu0 0
        %1249 = vmatpush2.bf16.xpose.msra.mxu0 0
        %1250 = vmatprep.subr.bf16.mxu0 0
        %1251 = vmatpush2.bf16.xpose.msra.mxu0 0
        %1252 = vmatprep.subr.bf16.mxu0 0
        %1253 = vmatpush2.bf16.xpose.msra.mxu0 0
        %1254 = vmatprep.mubr.bf16.mxu0 0
        %1255 = vmatmul.mubr.bf16.gmra.mxu0 %v1217
        %v1256 = vpop.f32.mrf.mxu0
        %v1257 = vadd.f32 %v1167, %v1256
        %v1258 = vpop.f32.mrf.mxu0
        %v1259 = vpop.f32.mrf.mxu0
        %v1260 = vpop.f32.mrf.mxu0
        %1261 = vdwg.mxu0
        %vm1262 = vcmask 64512
        %v1263 = vsel %vm1262, %v1211, -inf
        %1264 = vmax.xlane.f32.xlu0 %v1263
        %v1265 = vpop.xlane.xlu0 %1264
        %v1266 = vsel %vm1262, %v1257, -inf
        %1267 = vmax.xlane.f32.xlu0 %v1266
        %v1268 = vpop.xlane.xlu0 %1267
        %v1269 = vsub.f32 %v1211, %v1265
        %v1270 = vsub.f32 %v1257, %v1268
        %v1271 = vmul.f32 %v1269, 1.442695
        %v1272 = vpow.pop %v1271
        %v1273 = vmul.f32 %v1270, 1.442695
        %v1274 = vpow.pop %v1273
        %v1275 = vsel %vm1262, %v1272, 0.0
        %1276 = vadd.xlane.f32.xlu0 %v1275
        %v1277 = vpop.xlane.xlu0 %1276
        %v1278 = vsel %vm1262, %v1274, 0.0
        %1279 = vadd.xlane.f32.xlu0 %v1278
        %v1280 = vpop.xlane.xlu0 %1279
        %v1281 = vrcp.pop %v1277
        %v1282 = vrcp.pop %v1280
        %v1283 = vmul.f32 %v1272, %v1281
        %v1284 = vmul.f32 %v1274, %v1282
        %v1285 = vpack.c.bf16 %v1283, %v1283
        %v1286 = vpack.c.bf16 %v1284, %v1284
        %v1288 = vsel %vm1262, %v1285, 0
        %vm1290 = vcmask 1043456
        %v1292 = vsel %vm1290, %v1159, 0
        %1294 = vmatprep.subr.bf16.mxu0 0
        %1295 = vmatpush1.bf16.msra.mxu0 0
        %1296 = vmatprep.subr.bf16.mxu0 0
        %1297 = vmatpush1.bf16.msra.mxu0 0
        %1298 = vmatprep.subr.bf16.mxu0 0
        %1299 = vmatpush1.bf16.msra.mxu0 0
        %1300 = vmatprep.subr.bf16.mxu0 0
        %1301 = vmatpush1.bf16.msra.mxu0 0
        %1302 = vmatprep.subr.bf16.mxu0 0
        %1303 = vmatpush1.bf16.msra.mxu0 0
        %1304 = vmatprep.subr.bf16.mxu0 0
        %1305 = vmatpush1.bf16.msra.mxu0 0
        %1306 = vmatprep.subr.bf16.mxu0 0
        %1307 = vmatpush1.bf16.msra.mxu0 0
        %1308 = vmatprep.subr.bf16.mxu0 0
        %1309 = vmatpush1.bf16.msra.mxu0 %v1292
        %1310 = vmatprep.subr.bf16.mxu0 0
        %1311 = vmatpush2.bf16.msra.mxu0 0
        %1312 = vmatprep.subr.bf16.mxu0 0
        %1313 = vmatpush2.bf16.msra.mxu0 0
        %1314 = vmatprep.subr.bf16.mxu0 0
        %1315 = vmatpush2.bf16.msra.mxu0 0
        %1316 = vmatprep.subr.bf16.mxu0 0
        %1317 = vmatpush2.bf16.msra.mxu0 0
        %1318 = vmatprep.subr.bf16.mxu0 0
        %1319 = vmatpush2.bf16.msra.mxu0 0
        %1320 = vmatprep.subr.bf16.mxu0 0
        %1321 = vmatpush2.bf16.msra.mxu0 0
        %1322 = vmatprep.subr.bf16.mxu0 0
        %1323 = vmatpush2.bf16.msra.mxu0 0
        %1324 = vmatprep.subr.bf16.mxu0 0
        %1325 = vmatpush2.bf16.msra.mxu0 0
        %1326 = vmatprep.mubr.bf16.mxu0 0
        %1327 = vmatmul.mubr.bf16.gmra.mxu0 %v1288
        %v1328 = vpop.f32.mrf.mxu0
        %v1329 = vadd.f32 0.0, %v1328
        %v1330 = vpop.f32.mrf.mxu0
        %v1331 = vpop.f32.mrf.mxu0
        %v1332 = vpop.f32.mrf.mxu0
        %1333 = vdwg.mxu0
        %v1335 = vsel %vm1262, %v1286, 0
        %v1338 = vsel %vm1290, %v1162, 0
        %1340 = vmatprep.subr.bf16.mxu0 0
        %1341 = vmatpush1.bf16.msra.mxu0 0
        %1342 = vmatprep.subr.bf16.mxu0 0
        %1343 = vmatpush1.bf16.msra.mxu0 0
        %1344 = vmatprep.subr.bf16.mxu0 0
        %1345 = vmatpush1.bf16.msra.mxu0 0
        %1346 = vmatprep.subr.bf16.mxu0 0
        %1347 = vmatpush1.bf16.msra.mxu0 0
        %1348 = vmatprep.subr.bf16.mxu0 0
        %1349 = vmatpush1.bf16.msra.mxu0 0
        %1350 = vmatprep.subr.bf16.mxu0 0
        %1351 = vmatpush1.bf16.msra.mxu0 0
        %1352 = vmatprep.subr.bf16.mxu0 0
        %1353 = vmatpush1.bf16.msra.mxu0 0
        %1354 = vmatprep.subr.bf16.mxu0 0
        %1355 = vmatpush1.bf16.msra.mxu0 %v1338
        %1356 = vmatprep.subr.bf16.mxu0 0
        %1357 = vmatpush2.bf16.msra.mxu0 0
        %1358 = vmatprep.subr.bf16.mxu0 0
        %1359 = vmatpush2.bf16.msra.mxu0 0
        %1360 = vmatprep.subr.bf16.mxu0 0
        %1361 = vmatpush2.bf16.msra.mxu0 0
        %1362 = vmatprep.subr.bf16.mxu0 0
        %1363 = vmatpush2.bf16.msra.mxu0 0
        %1364 = vmatprep.subr.bf16.mxu0 0
        %1365 = vmatpush2.bf16.msra.mxu0 0
        %1366 = vmatprep.subr.bf16.mxu0 0
        %1367 = vmatpush2.bf16.msra.mxu0 0
        %1368 = vmatprep.subr.bf16.mxu0 0
        %1369 = vmatpush2.bf16.msra.mxu0 0
        %1370 = vmatprep.subr.bf16.mxu0 0
        %1371 = vmatpush2.bf16.msra.mxu0 0
        %1372 = vmatprep.mubr.bf16.mxu0 0
        %1373 = vmatmul.mubr.bf16.gmra.mxu0 %v1335
        %v1374 = vpop.f32.mrf.mxu0
        %v1375 = vadd.f32 0.0, %v1374
        %v1376 = vpop.f32.mrf.mxu0
        %v1377 = vpop.f32.mrf.mxu0
        %v1378 = vpop.f32.mrf.mxu0
        %1379 = vdwg.mxu0
        %v1380 = vcombine.high %v1329, 0.0
        %v1382 = vunpack.c.l.s4 1983009808
        %v1383 = vunpack.c.0.s8 %v1382
        %v1384 = vlaneseq
        %v1385 = vshrl.u32 %v1384, 7
        %v1386 = vsub.s32 %v1383, %v1385
        %v1387 = vrot.slane %v1329, %v1386
        %v1389 = vunpack.c.l.s4 1983009808
        %v1390 = vunpack.c.0.s8 %v1389
        %v1391 = vlaneseq
        %v1392 = vshrl.u32 %v1391, 7
        %v1393 = vsub.s32 %v1390, %v1392
        %v1394 = vrot.slane %v1380, %v1393
        %v1395 = vcombine.high %v1375, 0.0
        %v1397 = vunpack.c.l.s4 1983009808
        %v1398 = vunpack.c.0.s8 %v1397
        %v1399 = vlaneseq
        %v1400 = vshrl.u32 %v1399, 7
        %v1401 = vsub.s32 %v1398, %v1400
        %v1402 = vrot.slane %v1375, %v1401
        %v1404 = vunpack.c.l.s4 1983009808
        %v1405 = vunpack.c.0.s8 %v1404
        %v1406 = vlaneseq
        %v1407 = vshrl.u32 %v1406, 7
        %v1408 = vsub.s32 %v1405, %v1407
        %v1409 = vrot.slane %v1395, %v1408
        %v1410 = vcombine.low %v1387, %v1402
        %v1411 = vcombine.high %v1387, %v1402
        %v1413 = vunpack.c.l.s4 1934713408
        %v1414 = vunpack.c.0.s8 %v1413
        %v1415 = vlaneseq
        %v1416 = vshrl.u32 %v1415, 7
        %v1417 = vsub.s32 %v1414, %v1416
        %v1418 = vrot.slane %v1410, %v1417
        %v1420 = vunpack.c.l.s4 1934713408
        %v1421 = vunpack.c.0.s8 %v1420
        %v1422 = vlaneseq
        %v1423 = vshrl.u32 %v1422, 7
        %v1424 = vsub.s32 %v1421, %v1423
        %v1425 = vrot.slane %v1411, %v1424
        %v1426 = vcombine.low %v1394, %v1409
        %v1427 = vcombine.high %v1394, %v1409
        %v1429 = vunpack.c.l.s4 1934713408
        %v1430 = vunpack.c.0.s8 %v1429
        %v1431 = vlaneseq
        %v1432 = vshrl.u32 %v1431, 7
        %v1433 = vsub.s32 %v1430, %v1432
        %v1434 = vrot.slane %v1426, %v1433
        %v1436 = vunpack.c.l.s4 1934713408
        %v1437 = vunpack.c.0.s8 %v1436
        %v1438 = vlaneseq
        %v1439 = vshrl.u32 %v1438, 7
        %v1440 = vsub.s32 %v1437, %v1439
        %v1441 = vrot.slane %v1427, %v1440
        %v1442 = vcombine.high %v1418, 0.0
        %v1443 = vcombine.high %v1425, 0.0
        %v1444 = vcombine.high %v1434, 0.0
        %v1445 = vcombine.high %v1441, 0.0
        %v1446 = vcombine.low %v1418, %v1425
        %v1448 = vunpack.c.l.s4 1983009808
        %v1449 = vunpack.c.0.s8 %v1448
        %v1450 = vlaneseq
        %v1451 = vshrl.u32 %v1450, 7
        %v1452 = vsub.s32 %v1449, %v1451
        %v1453 = vrot.slane %v1446, %v1452
        %v1454 = vcombine.low %v1442, %v1443
        %v1456 = vunpack.c.l.s4 1983009808
        %v1457 = vunpack.c.0.s8 %v1456
        %v1458 = vlaneseq
        %v1459 = vshrl.u32 %v1458, 7
        %v1460 = vsub.s32 %v1457, %v1459
        %v1461 = vrot.slane %v1454, %v1460
        %v1462 = vcombine.low %v1434, %v1441
        %v1464 = vunpack.c.l.s4 1983009808
        %v1465 = vunpack.c.0.s8 %v1464
        %v1466 = vlaneseq
        %v1467 = vshrl.u32 %v1466, 7
        %v1468 = vsub.s32 %v1465, %v1467
        %v1469 = vrot.slane %v1462, %v1468
        %v1470 = vcombine.low %v1444, %v1445
        %v1472 = vunpack.c.l.s4 1983009808
        %v1473 = vunpack.c.0.s8 %v1472
        %v1474 = vlaneseq
        %v1475 = vshrl.u32 %v1474, 7
        %v1476 = vsub.s32 %v1473, %v1475
        %v1477 = vrot.slane %v1470, %v1476
        %v1478 = vcombine.low %v1453, %v1461
        %v1480 = vunpack.c.l.s4 1934713408
        %v1481 = vunpack.c.0.s8 %v1480
        %v1482 = vlaneseq
        %v1483 = vshrl.u32 %v1482, 7
        %v1484 = vsub.s32 %v1481, %v1483
        %v1485 = vrot.slane %v1478, %v1484
        %v1486 = vcombine.low %v1469, %v1477
        %v1488 = vunpack.c.l.s4 1934713408
        %v1489 = vunpack.c.0.s8 %v1488
        %v1490 = vlaneseq
        %v1491 = vshrl.u32 %v1490, 7
        %v1492 = vsub.s32 %v1489, %v1491
        %v1493 = vrot.slane %v1486, %v1492
        %v1494 = vcombine.low %v1485, %v1493
        %v1495 = vcombine.high %v1485, %v1493
        %1497 = vrot.lane.b32.xlu0 %v1495, 16
        %v1498 = vpop.permute.xlu0 %1497
        %v1500 = vsel %vm1169, %v1494, %v1498
        %v1501 = vpack.c.bf16 %v1500, %v1500
        %v1502 = vld [vmem:[%s6] sm:$0xf]
        %v1503 = vld [vmem:[%s6 + $0x4] sm:$0xf]
        %v1504 = vld [vmem:[%s6 + $0x8] sm:$0xf]
        %v1505 = vld [vmem:[%s6 + $0xc] sm:$0xf]
        %v1506 = vld [vmem:[%s7] sm:$0x1]
        %v1508 = vlaneseq
        %v1509 = vshrl.u32 %v1508, 7
        %v1510 = vsub.s32 0, %v1509
        %v1511 = vrot.slane %v1506, %v1510
        %v1517 = vunpack.c.l.b16 %v1502
        %v1518 = vunpack.c.l.b16 %v1503
        %v1519 = vunpack.c.l.b16 %v1504
        %v1520 = vunpack.c.l.b16 %v1505
        %v1521 = vpack.c.b16 %v1518, %v1517
        %v1522 = vpack.c.b16 %v1520, %v1519
        %v1526 = vsel %vm642, %v1501, 0
        %1528 = vmatprep.subr.bf16.mxu0 0
        %1529 = vmatpush1.bf16.msra.mxu0 0
        %1530 = vmatprep.subr.bf16.mxu0 0
        %1531 = vmatpush1.bf16.msra.mxu0 0
        %1532 = vmatprep.subr.bf16.mxu0 0
        %1533 = vmatpush1.bf16.msra.mxu0 0
        %1534 = vmatprep.subr.bf16.mxu0 0
        %1535 = vmatpush1.bf16.msra.mxu0 0
        %1536 = vmatprep.subr.bf16.mxu0 0
        %1537 = vmatpush1.bf16.msra.mxu0 0
        %1538 = vmatprep.subr.bf16.mxu0 0
        %1539 = vmatpush1.bf16.msra.mxu0 0
        %1540 = vmatprep.subr.bf16.mxu0 0
        %1541 = vmatpush1.bf16.msra.mxu0 %v1522
        %1542 = vmatprep.subr.bf16.mxu0 0
        %1543 = vmatpush1.bf16.msra.mxu0 %v1521
        %1544 = vmatprep.subr.bf16.mxu0 0
        %1545 = vmatpush2.bf16.msra.mxu0 0
        %1546 = vmatprep.subr.bf16.mxu0 0
        %1547 = vmatpush2.bf16.msra.mxu0 0
        %1548 = vmatprep.subr.bf16.mxu0 0
        %1549 = vmatpush2.bf16.msra.mxu0 0
        %1550 = vmatprep.subr.bf16.mxu0 0
        %1551 = vmatpush2.bf16.msra.mxu0 0
        %1552 = vmatprep.subr.bf16.mxu0 0
        %1553 = vmatpush2.bf16.msra.mxu0 0
        %1554 = vmatprep.subr.bf16.mxu0 0
        %1555 = vmatpush2.bf16.msra.mxu0 0
        %1556 = vmatprep.subr.bf16.mxu0 0
        %1557 = vmatpush2.bf16.msra.mxu0 0
        %1558 = vmatprep.subr.bf16.mxu0 0
        %1559 = vmatpush2.bf16.msra.mxu0 0
        %1560 = vmatprep.mubr.bf16.mxu0 0
        %1561 = vmatmul.mubr.bf16.gmra.mxu0 %v1526
        %v1562 = vpop.f32.mrf.mxu0
        %v1563 = vadd.f32 %v1511, %v1562
        %v1564 = vpop.f32.mrf.mxu0
        %v1565 = vpop.f32.mrf.mxu0
        %v1566 = vpop.f32.mrf.mxu0
        %1567 = vdwg.mxu0
        %v1568 = vadd.f32 %v673, %v1563
        %v1569 = vld [vmem:[%s8] sm:$0x1]
        %v1570 = vld [vmem:[%s9] sm:$0x1]
        %v1571 = vsel %vm642, %v1568, 0.0
        %1572 = vadd.xlane.f32.xlu0 %v1571
        %v1573 = vpop.xlane.xlu0 %1572
        %v1574 = vmul.f32 %v1573, %v646
        %v1575 = vmul.f32 %v1568, %v1568
        %v1576 = vsel %vm642, %v1575, 0.0
        %1577 = vadd.xlane.f32.xlu0 %v1576
        %v1578 = vpop.xlane.xlu0 %1577
        %v1579 = vmul.f32 %v1578, %v646
        %v1580 = vmul.f32 %v1574, %v1574
        %v1581 = vsub.f32 %v1579, %v1580
        %v1582 = vmax.f32 %v1581, 0.0
        %v1583 = vsub.f32 %v1568, %v1574
        %v1584 = vadd.f32 %v1582, 1e-12
        %v1585 = vrsqrt.pop %v1584
        %v1586 = vmul.f32 %v1583, %v1585
        %v1588 = vlaneseq
        %v1589 = vshrl.u32 %v1588, 7
        %v1590 = vsub.s32 0, %v1589
        %v1591 = vrot.slane %v1569, %v1590
        %v1593 = vmul.f32 %v1586, %v1591
        %v1595 = vlaneseq
        %v1596 = vshrl.u32 %v1595, 7
        %v1597 = vsub.s32 0, %v1596
        %v1598 = vrot.slane %v1570, %v1597
        %v1600 = vadd.f32 %v1593, %v1598
        %v1601 = vpack.c.bf16 %v1600, %v1600
        %v1602 = vld [vmem:[%s10] sm:$0xf]
        %v1603 = vld [vmem:[%s10 + $0x4] sm:$0xf]
        %v1604 = vld [vmem:[%s10 + $0x8] sm:$0xf]
        %v1605 = vld [vmem:[%s10 + $0xc] sm:$0xf]
        %v1606 = vld [vmem:[%s11] sm:$0x1]
        %v1608 = vlaneseq
        %v1609 = vshrl.u32 %v1608, 7
        %v1610 = vsub.s32 0, %v1609
        %v1611 = vrot.slane %v1606, %v1610
        %v1617 = vunpack.c.l.b16 %v1602
        %v1618 = vunpack.c.l.b16 %v1603
        %v1619 = vunpack.c.l.b16 %v1604
        %v1620 = vunpack.c.l.b16 %v1605
        %v1621 = vpack.c.b16 %v1618, %v1617
        %v1622 = vpack.c.b16 %v1620, %v1619
        %v1626 = vsel %vm642, %v1601, 0
        %1628 = vmatprep.subr.bf16.mxu0 0
        %1629 = vmatpush1.bf16.msra.mxu0 0
        %1630 = vmatprep.subr.bf16.mxu0 0
        %1631 = vmatpush1.bf16.msra.mxu0 0
        %1632 = vmatprep.subr.bf16.mxu0 0
        %1633 = vmatpush1.bf16.msra.mxu0 0
        %1634 = vmatprep.subr.bf16.mxu0 0
        %1635 = vmatpush1.bf16.msra.mxu0 0
        %1636 = vmatprep.subr.bf16.mxu0 0
        %1637 = vmatpush1.bf16.msra.mxu0 0
        %1638 = vmatprep.subr.bf16.mxu0 0
        %1639 = vmatpush1.bf16.msra.mxu0 0
        %1640 = vmatprep.subr.bf16.mxu0 0
        %1641 = vmatpush1.bf16.msra.mxu0 %v1622
        %1642 = vmatprep.subr.bf16.mxu0 0
        %1643 = vmatpush1.bf16.msra.mxu0 %v1621
        %1644 = vmatprep.subr.bf16.mxu0 0
        %1645 = vmatpush2.bf16.msra.mxu0 0
        %1646 = vmatprep.subr.bf16.mxu0 0
        %1647 = vmatpush2.bf16.msra.mxu0 0
        %1648 = vmatprep.subr.bf16.mxu0 0
        %1649 = vmatpush2.bf16.msra.mxu0 0
        %1650 = vmatprep.subr.bf16.mxu0 0
        %1651 = vmatpush2.bf16.msra.mxu0 0
        %1652 = vmatprep.subr.bf16.mxu0 0
        %1653 = vmatpush2.bf16.msra.mxu0 0
        %1654 = vmatprep.subr.bf16.mxu0 0
        %1655 = vmatpush2.bf16.msra.mxu0 0
        %1656 = vmatprep.subr.bf16.mxu0 0
        %1657 = vmatpush2.bf16.msra.mxu0 0
        %1658 = vmatprep.subr.bf16.mxu0 0
        %1659 = vmatpush2.bf16.msra.mxu0 0
        %1660 = vmatprep.mubr.bf16.mxu0 0
        %1661 = vmatmul.mubr.bf16.gmra.mxu0 %v1626
        %v1662 = vpop.f32.mrf.mxu0
        %v1663 = vadd.f32 %v1611, %v1662
        %v1664 = vpop.f32.mrf.mxu0
        %v1665 = vpop.f32.mrf.mxu0
        %v1666 = vpop.f32.mrf.mxu0
        %1667 = vdwg.mxu0
        %v1668 = vmul.f32 %v1663, %v1663
        %v1669 = vmul.f32 %v1663, %v1668
        %v1670 = vmul.f32 %v1669, 0.044715
        %v1671 = vadd.f32 %v1663, %v1670
        %v1672 = vmul.f32 %v1671, 0.7978846
        %v1673 = vtanh.pop %v1672
        %v1674 = vadd.f32 %v1673, 1.0
        %v1675 = vmul.f32 %v1674, 0.5
        %v1676 = vmul.f32 %v1663, %v1675
        %v1677 = vpack.c.bf16 %v1676, %v1676
        %v1678 = vld [vmem:[%s12] sm:$0xf]
        %v1679 = vld [vmem:[%s12 + $0x4] sm:$0xf]
        %v1680 = vld [vmem:[%s12 + $0x8] sm:$0xf]
        %v1681 = vld [vmem:[%s12 + $0xc] sm:$0xf]
        %v1682 = vld [vmem:[%s12 + $0x10] sm:$0xf]
        %v1683 = vld [vmem:[%s12 + $0x14] sm:$0xf]
        %v1684 = vld [vmem:[%s12 + $0x18] sm:$0xf]
        %v1685 = vld [vmem:[%s12 + $0x1c] sm:$0xf]
        %v1686 = vld [vmem:[%s13] sm:$0x1]
        %v1688 = vlaneseq
        %v1689 = vshrl.u32 %v1688, 7
        %v1690 = vsub.s32 0, %v1689
        %v1691 = vrot.slane %v1686, %v1690
        %v1701 = vunpack.c.l.b16 %v1678
        %v1702 = vunpack.c.l.b16 %v1679
        %v1703 = vunpack.c.l.b16 %v1680
        %v1704 = vunpack.c.l.b16 %v1681
        %v1705 = vunpack.c.l.b16 %v1682
        %v1706 = vunpack.c.l.b16 %v1683
        %v1707 = vunpack.c.l.b16 %v1684
        %v1708 = vunpack.c.l.b16 %v1685
        %v1709 = vpack.c.b16 %v1702, %v1701
        %v1710 = vpack.c.b16 %v1704, %v1703
        %v1711 = vpack.c.b16 %v1706, %v1705
        %v1712 = vpack.c.b16 %v1708, %v1707
        %vm1717 = vcmask 523264
        %v1719 = vsel %vm1717, %v1677, 0
        %1721 = vmatprep.subr.bf16.mxu0 0
        %1722 = vmatpush1.bf16.msra.mxu0 0
        %1723 = vmatprep.subr.bf16.mxu0 0
        %1724 = vmatpush1.bf16.msra.mxu0 0
        %1725 = vmatprep.subr.bf16.mxu0 0
        %1726 = vmatpush1.bf16.msra.mxu0 0
        %1727 = vmatprep.subr.bf16.mxu0 0
        %1728 = vmatpush1.bf16.msra.mxu0 0
        %1729 = vmatprep.subr.bf16.mxu0 0
        %1730 = vmatpush1.bf16.msra.mxu0 %v1712
        %1731 = vmatprep.subr.bf16.mxu0 0
        %1732 = vmatpush1.bf16.msra.mxu0 %v1711
        %1733 = vmatprep.subr.bf16.mxu0 0
        %1734 = vmatpush1.bf16.msra.mxu0 %v1710
        %1735 = vmatprep.subr.bf16.mxu0 0
        %1736 = vmatpush1.bf16.msra.mxu0 %v1709
        %1737 = vmatprep.subr.bf16.mxu0 0
        %1738 = vmatpush2.bf16.msra.mxu0 0
        %1739 = vmatprep.subr.bf16.mxu0 0
        %1740 = vmatpush2.bf16.msra.mxu0 0
        %1741 = vmatprep.subr.bf16.mxu0 0
        %1742 = vmatpush2.bf16.msra.mxu0 0
        %1743 = vmatprep.subr.bf16.mxu0 0
        %1744 = vmatpush2.bf16.msra.mxu0 0
        %1745 = vmatprep.subr.bf16.mxu0 0
        %1746 = vmatpush2.bf16.msra.mxu0 0
        %1747 = vmatprep.subr.bf16.mxu0 0
        %1748 = vmatpush2.bf16.msra.mxu0 0
        %1749 = vmatprep.subr.bf16.mxu0 0
        %1750 = vmatpush2.bf16.msra.mxu0 0
        %1751 = vmatprep.subr.bf16.mxu0 0
        %1752 = vmatpush2.bf16.msra.mxu0 0
        %1753 = vmatprep.mubr.bf16.mxu0 0
        %1754 = vmatmul.mubr.bf16.gmra.mxu0 %v1719
        %v1755 = vpop.f32.mrf.mxu0
        %v1756 = vadd.f32 %v1691, %v1755
        %v1757 = vpop.f32.mrf.mxu0
        %v1758 = vpop.f32.mrf.mxu0
        %v1759 = vpop.f32.mrf.mxu0
        %1760 = vdwg.mxu0
        %v1761 = vadd.f32 %v1600, %v1756
        %v1762 = vld [vmem:[%s14] sm:$0x1]
        %v1763 = vld [vmem:[%s15] sm:$0x1]
        %v1764 = vsel %vm642, %v1761, 0.0
        %1765 = vadd.xlane.f32.xlu0 %v1764
        %v1766 = vpop.xlane.xlu0 %1765
        %v1767 = vmul.f32 %v1766, %v646
        %v1768 = vmul.f32 %v1761, %v1761
        %v1769 = vsel %vm642, %v1768, 0.0
        %1770 = vadd.xlane.f32.xlu0 %v1769
        %v1771 = vpop.xlane.xlu0 %1770
        %v1772 = vmul.f32 %v1771, %v646
        %v1773 = vmul.f32 %v1767, %v1767
        %v1774 = vsub.f32 %v1772, %v1773
        %v1775 = vmax.f32 %v1774, 0.0
        %v1776 = vsub.f32 %v1761, %v1767
        %v1777 = vadd.f32 %v1775, 1e-12
        %v1778 = vrsqrt.pop %v1777
        %v1779 = vmul.f32 %v1776, %v1778
        %v1781 = vlaneseq
        %v1782 = vshrl.u32 %v1781, 7
        %v1783 = vsub.s32 0, %v1782
        %v1784 = vrot.slane %v1762, %v1783
        %v1786 = vmul.f32 %v1779, %v1784
        %v1788 = vlaneseq
        %v1789 = vshrl.u32 %v1788, 7
        %v1790 = vsub.s32 0, %v1789
        %v1791 = vrot.slane %v1763, %v1790
        %v1793 = vadd.f32 %v1786, %v1791
        %v1794 = vpack.c.bf16 %v1793, %v1793
        %s1795 = scalar_lea.vmem %s4, 16
        %v1796 = vld [vmem:[%s1795] sm:$0xf]
        %v1797 = vld [vmem:[%s1795 + $0x4] sm:$0xf]
        %v1798 = vld [vmem:[%s1795 + $0x8] sm:$0xf]
        %v1799 = vld [vmem:[%s1795 + $0xc] sm:$0xf]
        %s1800 = scalar_lea.vmem %s5, 1
        %v1801 = vld [vmem:[%s1800] sm:$0x1]
        %v1803 = vlaneseq
        %v1804 = vshrl.u32 %v1803, 7
        %v1805 = vsub.s32 0, %v1804
        %v1806 = vrot.slane %v1801, %v1805
        %v1812 = vunpack.c.l.b16 %v1796
        %v1813 = vunpack.c.l.b16 %v1797
        %v1814 = vunpack.c.l.b16 %v1798
        %v1815 = vunpack.c.l.b16 %v1799
        %v1816 = vpack.c.b16 %v1813, %v1812
        %v1817 = vpack.c.b16 %v1815, %v1814
        %v1821 = vsel %vm642, %v1794, 0
        %1823 = vmatprep.subr.bf16.mxu0 0
        %1824 = vmatpush1.bf16.msra.mxu0 0
        %1825 = vmatprep.subr.bf16.mxu0 0
        %1826 = vmatpush1.bf16.msra.mxu0 0
        %1827 = vmatprep.subr.bf16.mxu0 0
        %1828 = vmatpush1.bf16.msra.mxu0 0
        %1829 = vmatprep.subr.bf16.mxu0 0
        %1830 = vmatpush1.bf16.msra.mxu0 0
        %1831 = vmatprep.subr.bf16.mxu0 0
        %1832 = vmatpush1.bf16.msra.mxu0 0
        %1833 = vmatprep.subr.bf16.mxu0 0
        %1834 = vmatpush1.bf16.msra.mxu0 0
        %1835 = vmatprep.subr.bf16.mxu0 0
        %1836 = vmatpush1.bf16.msra.mxu0 %v1817
        %1837 = vmatprep.subr.bf16.mxu0 0
        %1838 = vmatpush1.bf16.msra.mxu0 %v1816
        %1839 = vmatprep.subr.bf16.mxu0 0
        %1840 = vmatpush2.bf16.msra.mxu0 0
        %1841 = vmatprep.subr.bf16.mxu0 0
        %1842 = vmatpush2.bf16.msra.mxu0 0
        %1843 = vmatprep.subr.bf16.mxu0 0
        %1844 = vmatpush2.bf16.msra.mxu0 0
        %1845 = vmatprep.subr.bf16.mxu0 0
        %1846 = vmatpush2.bf16.msra.mxu0 0
        %1847 = vmatprep.subr.bf16.mxu0 0
        %1848 = vmatpush2.bf16.msra.mxu0 0
        %1849 = vmatprep.subr.bf16.mxu0 0
        %1850 = vmatpush2.bf16.msra.mxu0 0
        %1851 = vmatprep.subr.bf16.mxu0 0
        %1852 = vmatpush2.bf16.msra.mxu0 0
        %1853 = vmatprep.subr.bf16.mxu0 0
        %1854 = vmatpush2.bf16.msra.mxu0 0
        %1855 = vmatprep.mubr.bf16.mxu0 0
        %1856 = vmatmul.mubr.bf16.gmra.mxu0 %v1821
        %v1857 = vpop.f32.mrf.mxu0
        %v1858 = vadd.f32 %v1806, %v1857
        %v1859 = vpop.f32.mrf.mxu0
        %v1860 = vpop.f32.mrf.mxu0
        %v1861 = vpop.f32.mrf.mxu0
        %1862 = vdwg.mxu0
        %v1863 = vpack.c.bf16 %v1858, %v1858
        %1865 = vrot.lane.b32.xlu0 %v1863, 112
        %v1866 = vpop.permute.xlu0 %1865
        %v1868 = vunpack.c.l.s4 1983009808
        %v1869 = vunpack.c.0.s8 %v1868
        %v1870 = vlaneseq
        %v1871 = vshrl.u32 %v1870, 7
        %v1872 = vsub.s32 %v1869, %v1871
        %v1873 = vrot.slane %v1863, %v1872
        %v1874 = vcombine.high %v1873, 0
        %v1876 = vunpack.c.l.s4 1934713408
        %v1877 = vunpack.c.0.s8 %v1876
        %v1878 = vlaneseq
        %v1879 = vshrl.u32 %v1878, 7
        %v1880 = vsub.s32 %v1877, %v1879
        %v1881 = vrot.slane %v1873, %v1880
        %v1883 = vunpack.c.l.s4 1934713408
        %v1884 = vunpack.c.0.s8 %v1883
        %v1885 = vlaneseq
        %v1886 = vshrl.u32 %v1885, 7
        %v1887 = vsub.s32 %v1884, %v1886
        %v1888 = vrot.slane %v1874, %v1887
        %v1889 = vcombine.high %v1881, 0
        %v1890 = vcombine.high %v1888, 0
        %v1893 = vunpack.c.l.s4 1983009808
        %v1894 = vunpack.c.0.s8 %v1893
        %v1895 = vlaneseq
        %v1896 = vshrl.u32 %v1895, 7
        %v1897 = vsub.s32 %v1894, %v1896
        %v1898 = vrot.slane %v1866, %v1897
        %v1899 = vcombine.high %v1898, 0
        %v1901 = vunpack.c.l.s4 1934713408
        %v1902 = vunpack.c.0.s8 %v1901
        %v1903 = vlaneseq
        %v1904 = vshrl.u32 %v1903, 7
        %v1905 = vsub.s32 %v1902, %v1904
        %v1906 = vrot.slane %v1898, %v1905
        %v1908 = vunpack.c.l.s4 1934713408
        %v1909 = vunpack.c.0.s8 %v1908
        %v1910 = vlaneseq
        %v1911 = vshrl.u32 %v1910, 7
        %v1912 = vsub.s32 %v1909, %v1911
        %v1913 = vrot.slane %v1899, %v1912
        %v1914 = vcombine.high %v1906, 0
        %v1915 = vcombine.high %v1913, 0
        %v1918 = vpack.i.b16 %v1906, %v1881
        %v1920 = vshrl.u32 %v1881, 16
        %v1921 = vshrl.u32 %v1906, 16
        %v1922 = vpack.i.b16 %v1921, %v1920
        %v1926 = vpack.i.b16 %v1914, %v1889
        %v1928 = vshrl.u32 %v1889, 16
        %v1929 = vshrl.u32 %v1914, 16
        %v1930 = vpack.i.b16 %v1929, %v1928
        %v1934 = vpack.i.b16 %v1913, %v1888
        %v1936 = vshrl.u32 %v1888, 16
        %v1937 = vshrl.u32 %v1913, 16
        %v1938 = vpack.i.b16 %v1937, %v1936
        %v1942 = vpack.i.b16 %v1915, %v1890
        %v1944 = vshrl.u32 %v1890, 16
        %v1945 = vshrl.u32 %v1915, 16
        %v1946 = vpack.i.b16 %v1945, %v1944
        %v1948 = vcombine.low %v1918, %v1934
        %v1950 = vunpack.c.l.s4 1983009808
        %v1951 = vunpack.c.0.s8 %v1950
        %v1952 = vlaneseq
        %v1953 = vshrl.u32 %v1952, 7
        %v1954 = vsub.s32 %v1951, %v1953
        %v1955 = vrot.slane %v1948, %v1954
        %v1956 = vcombine.low %v1926, %v1942
        %v1958 = vunpack.c.l.s4 1983009808
        %v1959 = vunpack.c.0.s8 %v1958
        %v1960 = vlaneseq
        %v1961 = vshrl.u32 %v1960, 7
        %v1962 = vsub.s32 %v1959, %v1961
        %v1963 = vrot.slane %v1956, %v1962
        %v1964 = vcombine.low %v1955, %v1963
        %v1966 = vunpack.c.l.s4 1934713408
        %v1967 = vunpack.c.0.s8 %v1966
        %v1968 = vlaneseq
        %v1969 = vshrl.u32 %v1968, 7
        %v1970 = vsub.s32 %v1967, %v1969
        %v1971 = vrot.slane %v1964, %v1970
        %v1972 = vcombine.low %v1922, %v1938
        %v1974 = vunpack.c.l.s4 1983009808
        %v1975 = vunpack.c.0.s8 %v1974
        %v1976 = vlaneseq
        %v1977 = vshrl.u32 %v1976, 7
        %v1978 = vsub.s32 %v1975, %v1977
        %v1979 = vrot.slane %v1972, %v1978
        %v1980 = vcombine.low %v1930, %v1946
        %v1982 = vunpack.c.l.s4 1983009808
        %v1983 = vunpack.c.0.s8 %v1982
        %v1984 = vlaneseq
        %v1985 = vshrl.u32 %v1984, 7
        %v1986 = vsub.s32 %v1983, %v1985
        %v1987 = vrot.slane %v1980, %v1986
        %v1988 = vcombine.low %v1979, %v1987
        %v1990 = vunpack.c.l.s4 1934713408
        %v1991 = vunpack.c.0.s8 %v1990
        %v1992 = vlaneseq
        %v1993 = vshrl.u32 %v1992, 7
        %v1994 = vsub.s32 %v1991, %v1993
        %v1995 = vrot.slane %v1988, %v1994
        %v1998 = vpack.i.b16 %v1995, %v1971
        %v1999 = vshrl.u32 %v1971, 16
        %v2000 = vshrl.u32 %v1995, 16
        %v2001 = vpack.i.b16 %v2000, %v1999
        %2002 = vrot.lane.b32.xlu0 %v1863, 96
        %v2003 = vpop.permute.xlu0 %2002
        %2004 = vrot.lane.b32.xlu0 %v1866, 96
        %v2005 = vpop.permute.xlu0 %2004
        %v2008 = vunpack.c.l.s4 1983009808
        %v2009 = vunpack.c.0.s8 %v2008
        %v2010 = vlaneseq
        %v2011 = vshrl.u32 %v2010, 7
        %v2012 = vsub.s32 %v2009, %v2011
        %v2013 = vrot.slane %v2003, %v2012
        %v2014 = vcombine.high %v2013, 0
        %v2016 = vunpack.c.l.s4 1934713408
        %v2017 = vunpack.c.0.s8 %v2016
        %v2018 = vlaneseq
        %v2019 = vshrl.u32 %v2018, 7
        %v2020 = vsub.s32 %v2017, %v2019
        %v2021 = vrot.slane %v2013, %v2020
        %v2023 = vunpack.c.l.s4 1934713408
        %v2024 = vunpack.c.0.s8 %v2023
        %v2025 = vlaneseq
        %v2026 = vshrl.u32 %v2025, 7
        %v2027 = vsub.s32 %v2024, %v2026
        %v2028 = vrot.slane %v2014, %v2027
        %v2029 = vcombine.high %v2021, 0
        %v2030 = vcombine.high %v2028, 0
        %v2033 = vunpack.c.l.s4 1983009808
        %v2034 = vunpack.c.0.s8 %v2033
        %v2035 = vlaneseq
        %v2036 = vshrl.u32 %v2035, 7
        %v2037 = vsub.s32 %v2034, %v2036
        %v2038 = vrot.slane %v2005, %v2037
        %v2039 = vcombine.high %v2038, 0
        %v2041 = vunpack.c.l.s4 1934713408
        %v2042 = vunpack.c.0.s8 %v2041
        %v2043 = vlaneseq
        %v2044 = vshrl.u32 %v2043, 7
        %v2045 = vsub.s32 %v2042, %v2044
        %v2046 = vrot.slane %v2038, %v2045
        %v2048 = vunpack.c.l.s4 1934713408
        %v2049 = vunpack.c.0.s8 %v2048
        %v2050 = vlaneseq
        %v2051 = vshrl.u32 %v2050, 7
        %v2052 = vsub.s32 %v2049, %v2051
        %v2053 = vrot.slane %v2039, %v2052
        %v2054 = vcombine.high %v2046, 0
        %v2055 = vcombine.high %v2053, 0
        %v2058 = vpack.i.b16 %v2046, %v2021
        %v2060 = vshrl.u32 %v2021, 16
        %v2061 = vshrl.u32 %v2046, 16
        %v2062 = vpack.i.b16 %v2061, %v2060
        %v2066 = vpack.i.b16 %v2054, %v2029
        %v2068 = vshrl.u32 %v2029, 16
        %v2069 = vshrl.u32 %v2054, 16
        %v2070 = vpack.i.b16 %v2069, %v2068
        %v2074 = vpack.i.b16 %v2053, %v2028
        %v2076 = vshrl.u32 %v2028, 16
        %v2077 = vshrl.u32 %v2053, 16
        %v2078 = vpack.i.b16 %v2077, %v2076
        %v2082 = vpack.i.b16 %v2055, %v2030
        %v2084 = vshrl.u32 %v2030, 16
        %v2085 = vshrl.u32 %v2055, 16
        %v2086 = vpack.i.b16 %v2085, %v2084
        %v2088 = vcombine.low %v2058, %v2074
        %v2090 = vunpack.c.l.s4 1983009808
        %v2091 = vunpack.c.0.s8 %v2090
        %v2092 = vlaneseq
        %v2093 = vshrl.u32 %v2092, 7
        %v2094 = vsub.s32 %v2091, %v2093
        %v2095 = vrot.slane %v2088, %v2094
        %v2096 = vcombine.low %v2066, %v2082
        %v2098 = vunpack.c.l.s4 1983009808
        %v2099 = vunpack.c.0.s8 %v2098
        %v2100 = vlaneseq
        %v2101 = vshrl.u32 %v2100, 7
        %v2102 = vsub.s32 %v2099, %v2101
        %v2103 = vrot.slane %v2096, %v2102
        %v2104 = vcombine.low %v2095, %v2103
        %v2106 = vunpack.c.l.s4 1934713408
        %v2107 = vunpack.c.0.s8 %v2106
        %v2108 = vlaneseq
        %v2109 = vshrl.u32 %v2108, 7
        %v2110 = vsub.s32 %v2107, %v2109
        %v2111 = vrot.slane %v2104, %v2110
        %v2112 = vcombine.low %v2062, %v2078
        %v2114 = vunpack.c.l.s4 1983009808
        %v2115 = vunpack.c.0.s8 %v2114
        %v2116 = vlaneseq
        %v2117 = vshrl.u32 %v2116, 7
        %v2118 = vsub.s32 %v2115, %v2117
        %v2119 = vrot.slane %v2112, %v2118
        %v2120 = vcombine.low %v2070, %v2086
        %v2122 = vunpack.c.l.s4 1983009808
        %v2123 = vunpack.c.0.s8 %v2122
        %v2124 = vlaneseq
        %v2125 = vshrl.u32 %v2124, 7
        %v2126 = vsub.s32 %v2123, %v2125
        %v2127 = vrot.slane %v2120, %v2126
        %v2128 = vcombine.low %v2119, %v2127
        %v2130 = vunpack.c.l.s4 1934713408
        %v2131 = vunpack.c.0.s8 %v2130
        %v2132 = vlaneseq
        %v2133 = vshrl.u32 %v2132, 7
        %v2134 = vsub.s32 %v2131, %v2133
        %v2135 = vrot.slane %v2128, %v2134
        %v2138 = vpack.i.b16 %v2135, %v2111
        %v2139 = vshrl.u32 %v2111, 16
        %v2140 = vshrl.u32 %v2135, 16
        %v2141 = vpack.i.b16 %v2140, %v2139
        %2142 = vrot.lane.b32.xlu0 %v1863, 64
        %v2143 = vpop.permute.xlu0 %2142
        %2144 = vrot.lane.b32.xlu0 %v1866, 64
        %v2145 = vpop.permute.xlu0 %2144
        %v2148 = vunpack.c.l.s4 1983009808
        %v2149 = vunpack.c.0.s8 %v2148
        %v2150 = vlaneseq
        %v2151 = vshrl.u32 %v2150, 7
        %v2152 = vsub.s32 %v2149, %v2151
        %v2153 = vrot.slane %v2143, %v2152
        %v2154 = vcombine.high %v2153, 0
        %v2156 = vunpack.c.l.s4 1934713408
        %v2157 = vunpack.c.0.s8 %v2156
        %v2158 = vlaneseq
        %v2159 = vshrl.u32 %v2158, 7
        %v2160 = vsub.s32 %v2157, %v2159
        %v2161 = vrot.slane %v2153, %v2160
        %v2163 = vunpack.c.l.s4 1934713408
        %v2164 = vunpack.c.0.s8 %v2163
        %v2165 = vlaneseq
        %v2166 = vshrl.u32 %v2165, 7
        %v2167 = vsub.s32 %v2164, %v2166
        %v2168 = vrot.slane %v2154, %v2167
        %v2169 = vcombine.high %v2161, 0
        %v2170 = vcombine.high %v2168, 0
        %v2173 = vunpack.c.l.s4 1983009808
        %v2174 = vunpack.c.0.s8 %v2173
        %v2175 = vlaneseq
        %v2176 = vshrl.u32 %v2175, 7
        %v2177 = vsub.s32 %v2174, %v2176
        %v2178 = vrot.slane %v2145, %v2177
        %v2179 = vcombine.high %v2178, 0
        %v2181 = vunpack.c.l.s4 1934713408
        %v2182 = vunpack.c.0.s8 %v2181
        %v2183 = vlaneseq
        %v2184 = vshrl.u32 %v2183, 7
        %v2185 = vsub.s32 %v2182, %v2184
        %v2186 = vrot.slane %v2178, %v2185
        %v2188 = vunpack.c.l.s4 1934713408
        %v2189 = vunpack.c.0.s8 %v2188
        %v2190 = vlaneseq
        %v2191 = vshrl.u32 %v2190, 7
        %v2192 = vsub.s32 %v2189, %v2191
        %v2193 = vrot.slane %v2179, %v2192
        %v2194 = vcombine.high %v2186, 0
        %v2195 = vcombine.high %v2193, 0
        %v2198 = vpack.i.b16 %v2186, %v2161
        %v2200 = vshrl.u32 %v2161, 16
        %v2201 = vshrl.u32 %v2186, 16
        %v2202 = vpack.i.b16 %v2201, %v2200
        %v2206 = vpack.i.b16 %v2194, %v2169
        %v2208 = vshrl.u32 %v2169, 16
        %v2209 = vshrl.u32 %v2194, 16
        %v2210 = vpack.i.b16 %v2209, %v2208
        %v2214 = vpack.i.b16 %v2193, %v2168
        %v2216 = vshrl.u32 %v2168, 16
        %v2217 = vshrl.u32 %v2193, 16
        %v2218 = vpack.i.b16 %v2217, %v2216
        %v2222 = vpack.i.b16 %v2195, %v2170
        %v2224 = vshrl.u32 %v2170, 16
        %v2225 = vshrl.u32 %v2195, 16
        %v2226 = vpack.i.b16 %v2225, %v2224
        %v2228 = vcombine.low %v2198, %v2214
        %v2230 = vunpack.c.l.s4 1983009808
        %v2231 = vunpack.c.0.s8 %v2230
        %v2232 = vlaneseq
        %v2233 = vshrl.u32 %v2232, 7
        %v2234 = vsub.s32 %v2231, %v2233
        %v2235 = vrot.slane %v2228, %v2234
        %v2236 = vcombine.low %v2206, %v2222
        %v2238 = vunpack.c.l.s4 1983009808
        %v2239 = vunpack.c.0.s8 %v2238
        %v2240 = vlaneseq
        %v2241 = vshrl.u32 %v2240, 7
        %v2242 = vsub.s32 %v2239, %v2241
        %v2243 = vrot.slane %v2236, %v2242
        %v2244 = vcombine.low %v2235, %v2243
        %v2246 = vunpack.c.l.s4 1934713408
        %v2247 = vunpack.c.0.s8 %v2246
        %v2248 = vlaneseq
        %v2249 = vshrl.u32 %v2248, 7
        %v2250 = vsub.s32 %v2247, %v2249
        %v2251 = vrot.slane %v2244, %v2250
        %v2252 = vcombine.low %v2202, %v2218
        %v2254 = vunpack.c.l.s4 1983009808
        %v2255 = vunpack.c.0.s8 %v2254
        %v2256 = vlaneseq
        %v2257 = vshrl.u32 %v2256, 7
        %v2258 = vsub.s32 %v2255, %v2257
        %v2259 = vrot.slane %v2252, %v2258
        %v2260 = vcombine.low %v2210, %v2226
        %v2262 = vunpack.c.l.s4 1983009808
        %v2263 = vunpack.c.0.s8 %v2262
        %v2264 = vlaneseq
        %v2265 = vshrl.u32 %v2264, 7
        %v2266 = vsub.s32 %v2263, %v2265
        %v2267 = vrot.slane %v2260, %v2266
        %v2268 = vcombine.low %v2259, %v2267
        %v2270 = vunpack.c.l.s4 1934713408
        %v2271 = vunpack.c.0.s8 %v2270
        %v2272 = vlaneseq
        %v2273 = vshrl.u32 %v2272, 7
        %v2274 = vsub.s32 %v2271, %v2273
        %v2275 = vrot.slane %v2268, %v2274
        %v2278 = vpack.i.b16 %v2275, %v2251
        %v2279 = vshrl.u32 %v2251, 16
        %v2280 = vshrl.u32 %v2275, 16
        %v2281 = vpack.i.b16 %v2280, %v2279
        %v2283 = vsel %vm1169, %v1998, 0
        %v2286 = vsel %vm1169, %v2138, 0
        %2288 = vmatprep.subr.bf16.mxu0 0
        %2289 = vmatpush1.bf16.xpose.msra.mxu0 0
        %2290 = vmatprep.subr.bf16.mxu0 0
        %2291 = vmatpush1.bf16.xpose.msra.mxu0 0
        %2292 = vmatprep.subr.bf16.mxu0 0
        %2293 = vmatpush1.bf16.xpose.msra.mxu0 0
        %2294 = vmatprep.subr.bf16.mxu0 0
        %2295 = vmatpush1.bf16.xpose.msra.mxu0 0
        %2296 = vmatprep.subr.bf16.mxu0 0
        %2297 = vmatpush1.bf16.xpose.msra.mxu0 0
        %2298 = vmatprep.subr.bf16.mxu0 0
        %2299 = vmatpush1.bf16.xpose.msra.mxu0 0
        %2300 = vmatprep.subr.bf16.mxu0 0
        %2301 = vmatpush1.bf16.xpose.msra.mxu0 0
        %2302 = vmatprep.subr.bf16.mxu0 0
        %2303 = vmatpush1.bf16.xpose.msra.mxu0 %v2286
        %2304 = vmatprep.subr.bf16.mxu0 0
        %2305 = vmatpush2.bf16.xpose.msra.mxu0 0
        %2306 = vmatprep.subr.bf16.mxu0 0
        %2307 = vmatpush2.bf16.xpose.msra.mxu0 0
        %2308 = vmatprep.subr.bf16.mxu0 0
        %2309 = vmatpush2.bf16.xpose.msra.mxu0 0
        %2310 = vmatprep.subr.bf16.mxu0 0
        %2311 = vmatpush2.bf16.xpose.msra.mxu0 0
        %2312 = vmatprep.subr.bf16.mxu0 0
        %2313 = vmatpush2.bf16.xpose.msra.mxu0 0
        %2314 = vmatprep.subr.bf16.mxu0 0
        %2315 = vmatpush2.bf16.xpose.msra.mxu0 0
        %2316 = vmatprep.subr.bf16.mxu0 0
        %2317 = vmatpush2.bf16.xpose.msra.mxu0 0
        %2318 = vmatprep.subr.bf16.mxu0 0
        %2319 = vmatpush2.bf16.xpose.msra.mxu0 0
        %2320 = vmatprep.mubr.bf16.mxu0 0
        %2321 = vmatmul.mubr.bf16.gmra.mxu0 %v2283
        %v2322 = vpop.f32.mrf.mxu0
        %v2323 = vadd.f32 %v1167, %v2322
        %v2324 = vpop.f32.mrf.mxu0
        %v2325 = vpop.f32.mrf.mxu0
        %v2326 = vpop.f32.mrf.mxu0
        %2327 = vdwg.mxu0
        %v2329 = vsel %vm1169, %v2001, 0
        %v2332 = vsel %vm1169, %v2141, 0
        %2334 = vmatprep.subr.bf16.mxu0 0
        %2335 = vmatpush1.bf16.xpose.msra.mxu0 0
        %2336 = vmatprep.subr.bf16.mxu0 0
        %2337 = vmatpush1.bf16.xpose.msra.mxu0 0
        %2338 = vmatprep.subr.bf16.mxu0 0
        %2339 = vmatpush1.bf16.xpose.msra.mxu0 0
        %2340 = vmatprep.subr.bf16.mxu0 0
        %2341 = vmatpush1.bf16.xpose.msra.mxu0 0
        %2342 = vmatprep.subr.bf16.mxu0 0
        %2343 = vmatpush1.bf16.xpose.msra.mxu0 0
        %2344 = vmatprep.subr.bf16.mxu0 0
        %2345 = vmatpush1.bf16.xpose.msra.mxu0 0
        %2346 = vmatprep.subr.bf16.mxu0 0
        %2347 = vmatpush1.bf16.xpose.msra.mxu0 0
        %2348 = vmatprep.subr.bf16.mxu0 0
        %2349 = vmatpush1.bf16.xpose.msra.mxu0 %v2332
        %2350 = vmatprep.subr.bf16.mxu0 0
        %2351 = vmatpush2.bf16.xpose.msra.mxu0 0
        %2352 = vmatprep.subr.bf16.mxu0 0
        %2353 = vmatpush2.bf16.xpose.msra.mxu0 0
        %2354 = vmatprep.subr.bf16.mxu0 0
        %2355 = vmatpush2.bf16.xpose.msra.mxu0 0
        %2356 = vmatprep.subr.bf16.mxu0 0
        %2357 = vmatpush2.bf16.xpose.msra.mxu0 0
        %2358 = vmatprep.subr.bf16.mxu0 0
        %2359 = vmatpush2.bf16.xpose.msra.mxu0 0
        %2360 = vmatprep.subr.bf16.mxu0 0
        %2361 = vmatpush2.bf16.xpose.msra.mxu0 0
        %2362 = vmatprep.subr.bf16.mxu0 0
        %2363 = vmatpush2.bf16.xpose.msra.mxu0 0
        %2364 = vmatprep.subr.bf16.mxu0 0
        %2365 = vmatpush2.bf16.xpose.msra.mxu0 0
        %2366 = vmatprep.mubr.bf16.mxu0 0
        %2367 = vmatmul.mubr.bf16.gmra.mxu0 %v2329
        %v2368 = vpop.f32.mrf.mxu0
        %v2369 = vadd.f32 %v1167, %v2368
        %v2370 = vpop.f32.mrf.mxu0
        %v2371 = vpop.f32.mrf.mxu0
        %v2372 = vpop.f32.mrf.mxu0
        %2373 = vdwg.mxu0
        %v2374 = vsel %vm1262, %v2323, -inf
        %2375 = vmax.xlane.f32.xlu0 %v2374
        %v2376 = vpop.xlane.xlu0 %2375
        %v2377 = vsel %vm1262, %v2369, -inf
        %2378 = vmax.xlane.f32.xlu0 %v2377
        %v2379 = vpop.xlane.xlu0 %2378
        %v2380 = vsub.f32 %v2323, %v2376
        %v2381 = vsub.f32 %v2369, %v2379
        %v2382 = vmul.f32 %v2380, 1.442695
        %v2383 = vpow.pop %v2382
        %v2384 = vmul.f32 %v2381, 1.442695
        %v2385 = vpow.pop %v2384
        %v2386 = vsel %vm1262, %v2383, 0.0
        %2387 = vadd.xlane.f32.xlu0 %v2386
        %v2388 = vpop.xlane.xlu0 %2387
        %v2389 = vsel %vm1262, %v2385, 0.0
        %2390 = vadd.xlane.f32.xlu0 %v2389
        %v2391 = vpop.xlane.xlu0 %2390
        %v2392 = vrcp.pop %v2388
        %v2393 = vrcp.pop %v2391
        %v2394 = vmul.f32 %v2383, %v2392
        %v2395 = vmul.f32 %v2385, %v2393
        %v2396 = vpack.c.bf16 %v2394, %v2394
        %v2397 = vpack.c.bf16 %v2395, %v2395
        %v2399 = vsel %vm1262, %v2396, 0
        %v2402 = vsel %vm1290, %v2278, 0
        %2404 = vmatprep.subr.bf16.mxu0 0
        %2405 = vmatpush1.bf16.msra.mxu0 0
        %2406 = vmatprep.subr.bf16.mxu0 0
        %2407 = vmatpush1.bf16.msra.mxu0 0
        %2408 = vmatprep.subr.bf16.mxu0 0
        %2409 = vmatpush1.bf16.msra.mxu0 0
        %2410 = vmatprep.subr.bf16.mxu0 0
        %2411 = vmatpush1.bf16.msra.mxu0 0
        %2412 = vmatprep.subr.bf16.mxu0 0
        %2413 = vmatpush1.bf16.msra.mxu0 0
        %2414 = vmatprep.subr.bf16.mxu0 0
        %2415 = vmatpush1.bf16.msra.mxu0 0
        %2416 = vmatprep.subr.bf16.mxu0 0
        %2417 = vmatpush1.bf16.msra.mxu0 0
        %2418 = vmatprep.subr.bf16.mxu0 0
        %2419 = vmatpush1.bf16.msra.mxu0 %v2402
        %2420 = vmatprep.subr.bf16.mxu0 0
        %2421 = vmatpush2.bf16.msra.mxu0 0
        %2422 = vmatprep.subr.bf16.mxu0 0
        %2423 = vmatpush2.bf16.msra.mxu0 0
        %2424 = vmatprep.subr.bf16.mxu0 0
        %2425 = vmatpush2.bf16.msra.mxu0 0
        %2426 = vmatprep.subr.bf16.mxu0 0
        %2427 = vmatpush2.bf16.msra.mxu0 0
        %2428 = vmatprep.subr.bf16.mxu0 0
        %2429 = vmatpush2.bf16.msra.mxu0 0
        %2430 = vmatprep.subr.bf16.mxu0 0
        %2431 = vmatpush2.bf16.msra.mxu0 0
        %2432 = vmatprep.subr.bf16.mxu0 0
        %2433 = vmatpush2.bf16.msra.mxu0 0
        %2434 = vmatprep.subr.bf16.mxu0 0
        %2435 = vmatpush2.bf16.msra.mxu0 0
        %2436 = vmatprep.mubr.bf16.mxu0 0
        %2437 = vmatmul.mubr.bf16.gmra.mxu0 %v2399
        %v2438 = vpop.f32.mrf.mxu0
        %v2439 = vadd.f32 0.0, %v2438
        %v2440 = vpop.f32.mrf.mxu0
        %v2441 = vpop.f32.mrf.mxu0
        %v2442 = vpop.f32.mrf.mxu0
        %2443 = vdwg.mxu0
        %v2445 = vsel %vm1262, %v2397, 0
        %v2448 = vsel %vm1290, %v2281, 0
        %2450 = vmatprep.subr.bf16.mxu0 0
        %2451 = vmatpush1.bf16.msra.mxu0 0
        %2452 = vmatprep.subr.bf16.mxu0 0
        %2453 = vmatpush1.bf16.msra.mxu0 0
        %2454 = vmatprep.subr.bf16.mxu0 0
        %2455 = vmatpush1.bf16.msra.mxu0 0
        %2456 = vmatprep.subr.bf16.mxu0 0
        %2457 = vmatpush1.bf16.msra.mxu0 0
        %2458 = vmatprep.subr.bf16.mxu0 0
        %2459 = vmatpush1.bf16.msra.mxu0 0
        %2460 = vmatprep.subr.bf16.mxu0 0
        %2461 = vmatpush1.bf16.msra.mxu0 0
        %2462 = vmatprep.subr.bf16.mxu0 0
        %2463 = vmatpush1.bf16.msra.mxu0 0
        %2464 = vmatprep.subr.bf16.mxu0 0
        %2465 = vmatpush1.bf16.msra.mxu0 %v2448
        %2466 = vmatprep.subr.bf16.mxu0 0
        %2467 = vmatpush2.bf16.msra.mxu0 0
        %2468 = vmatprep.subr.bf16.mxu0 0
        %2469 = vmatpush2.bf16.msra.mxu0 0
        %2470 = vmatprep.subr.bf16.mxu0 0
        %2471 = vmatpush2.bf16.msra.mxu0 0
        %2472 = vmatprep.subr.bf16.mxu0 0
        %2473 = vmatpush2.bf16.msra.mxu0 0
        %2474 = vmatprep.subr.bf16.mxu0 0
        %2475 = vmatpush2.bf16.msra.mxu0 0
        %2476 = vmatprep.subr.bf16.mxu0 0
        %2477 = vmatpush2.bf16.msra.mxu0 0
        %2478 = vmatprep.subr.bf16.mxu0 0
        %2479 = vmatpush2.bf16.msra.mxu0 0
        %2480 = vmatprep.subr.bf16.mxu0 0
        %2481 = vmatpush2.bf16.msra.mxu0 0
        %2482 = vmatprep.mubr.bf16.mxu0 0
        %2483 = vmatmul.mubr.bf16.gmra.mxu0 %v2445
        %v2484 = vpop.f32.mrf.mxu0
        %v2485 = vadd.f32 0.0, %v2484
        %v2486 = vpop.f32.mrf.mxu0
        %v2487 = vpop.f32.mrf.mxu0
        %v2488 = vpop.f32.mrf.mxu0
        %2489 = vdwg.mxu0
        %v2490 = vcombine.high %v2439, 0.0
        %v2492 = vunpack.c.l.s4 1983009808
        %v2493 = vunpack.c.0.s8 %v2492
        %v2494 = vlaneseq
        %v2495 = vshrl.u32 %v2494, 7
        %v2496 = vsub.s32 %v2493, %v2495
        %v2497 = vrot.slane %v2439, %v2496
        %v2499 = vunpack.c.l.s4 1983009808
        %v2500 = vunpack.c.0.s8 %v2499
        %v2501 = vlaneseq
        %v2502 = vshrl.u32 %v2501, 7
        %v2503 = vsub.s32 %v2500, %v2502
        %v2504 = vrot.slane %v2490, %v2503
        %v2505 = vcombine.high %v2485, 0.0
        %v2507 = vunpack.c.l.s4 1983009808
        %v2508 = vunpack.c.0.s8 %v2507
        %v2509 = vlaneseq
        %v2510 = vshrl.u32 %v2509, 7
        %v2511 = vsub.s32 %v2508, %v2510
        %v2512 = vrot.slane %v2485, %v2511
        %v2514 = vunpack.c.l.s4 1983009808
        %v2515 = vunpack.c.0.s8 %v2514
        %v2516 = vlaneseq
        %v2517 = vshrl.u32 %v2516, 7
        %v2518 = vsub.s32 %v2515, %v2517
        %v2519 = vrot.slane %v2505, %v2518
        %v2520 = vcombine.low %v2497, %v2512
        %v2521 = vcombine.high %v2497, %v2512
        %v2523 = vunpack.c.l.s4 1934713408
        %v2524 = vunpack.c.0.s8 %v2523
        %v2525 = vlaneseq
        %v2526 = vshrl.u32 %v2525, 7
        %v2527 = vsub.s32 %v2524, %v2526
        %v2528 = vrot.slane %v2520, %v2527
        %v2530 = vunpack.c.l.s4 1934713408
        %v2531 = vunpack.c.0.s8 %v2530
        %v2532 = vlaneseq
        %v2533 = vshrl.u32 %v2532, 7
        %v2534 = vsub.s32 %v2531, %v2533
        %v2535 = vrot.slane %v2521, %v2534
        %v2536 = vcombine.low %v2504, %v2519
        %v2537 = vcombine.high %v2504, %v2519
        %v2539 = vunpack.c.l.s4 1934713408
        %v2540 = vunpack.c.0.s8 %v2539
        %v2541 = vlaneseq
        %v2542 = vshrl.u32 %v2541, 7
        %v2543 = vsub.s32 %v2540, %v2542
        %v2544 = vrot.slane %v2536, %v2543
        %v2546 = vunpack.c.l.s4 1934713408
        %v2547 = vunpack.c.0.s8 %v2546
        %v2548 = vlaneseq
        %v2549 = vshrl.u32 %v2548, 7
        %v2550 = vsub.s32 %v2547, %v2549
        %v2551 = vrot.slane %v2537, %v2550
        %v2552 = vcombine.high %v2528, 0.0
        %v2553 = vcombine.high %v2535, 0.0
        %v2554 = vcombine.high %v2544, 0.0
        %v2555 = vcombine.high %v2551, 0.0
        %v2556 = vcombine.low %v2528, %v2535
        %v2558 = vunpack.c.l.s4 1983009808
        %v2559 = vunpack.c.0.s8 %v2558
        %v2560 = vlaneseq
        %v2561 = vshrl.u32 %v2560, 7
        %v2562 = vsub.s32 %v2559, %v2561
        %v2563 = vrot.slane %v2556, %v2562
        %v2564 = vcombine.low %v2552, %v2553
        %v2566 = vunpack.c.l.s4 1983009808
        %v2567 = vunpack.c.0.s8 %v2566
        %v2568 = vlaneseq
        %v2569 = vshrl.u32 %v2568, 7
        %v2570 = vsub.s32 %v2567, %v2569
        %v2571 = vrot.slane %v2564, %v2570
        %v2572 = vcombine.low %v2544, %v2551
        %v2574 = vunpack.c.l.s4 1983009808
        %v2575 = vunpack.c.0.s8 %v2574
        %v2576 = vlaneseq
        %v2577 = vshrl.u32 %v2576, 7
        %v2578 = vsub.s32 %v2575, %v2577
        %v2579 = vrot.slane %v2572, %v2578
        %v2580 = vcombine.low %v2554, %v2555
        %v2582 = vunpack.c.l.s4 1983009808
        %v2583 = vunpack.c.0.s8 %v2582
        %v2584 = vlaneseq
        %v2585 = vshrl.u32 %v2584, 7
        %v2586 = vsub.s32 %v2583, %v2585
        %v2587 = vrot.slane %v2580, %v2586
        %v2588 = vcombine.low %v2563, %v2571
        %v2590 = vunpack.c.l.s4 1934713408
        %v2591 = vunpack.c.0.s8 %v2590
        %v2592 = vlaneseq
        %v2593 = vshrl.u32 %v2592, 7
        %v2594 = vsub.s32 %v2591, %v2593
        %v2595 = vrot.slane %v2588, %v2594
        %v2596 = vcombine.low %v2579, %v2587
        %v2598 = vunpack.c.l.s4 1934713408
        %v2599 = vunpack.c.0.s8 %v2598
        %v2600 = vlaneseq
        %v2601 = vshrl.u32 %v2600, 7
        %v2602 = vsub.s32 %v2599, %v2601
        %v2603 = vrot.slane %v2596, %v2602
        %v2604 = vcombine.low %v2595, %v2603
        %v2605 = vcombine.high %v2595, %v2603
        %2607 = vrot.lane.b32.xlu0 %v2605, 16
        %v2608 = vpop.permute.xlu0 %2607
        %v2610 = vsel %vm1169, %v2604, %v2608
        %v2611 = vpack.c.bf16 %v2610, %v2610
        %s2612 = scalar_lea.vmem %s6, 16
        %v2613 = vld [vmem:[%s2612] sm:$0xf]
        %v2614 = vld [vmem:[%s2612 + $0x4] sm:$0xf]
        %v2615 = vld [vmem:[%s2612 + $0x8] sm:$0xf]
        %v2616 = vld [vmem:[%s2612 + $0xc] sm:$0xf]
        %s2617 = scalar_lea.vmem %s7, 1
        %v2618 = vld [vmem:[%s2617] sm:$0x1]
        %v2620 = vlaneseq
        %v2621 = vshrl.u32 %v2620, 7
        %v2622 = vsub.s32 0, %v2621
        %v2623 = vrot.slane %v2618, %v2622
        %v2629 = vunpack.c.l.b16 %v2613
        %v2630 = vunpack.c.l.b16 %v2614
        %v2631 = vunpack.c.l.b16 %v2615
        %v2632 = vunpack.c.l.b16 %v2616
        %v2633 = vpack.c.b16 %v2630, %v2629
        %v2634 = vpack.c.b16 %v2632, %v2631
        %v2638 = vsel %vm642, %v2611, 0
        %2640 = vmatprep.subr.bf16.mxu0 0
        %2641 = vmatpush1.bf16.msra.mxu0 0
        %2642 = vmatprep.subr.bf16.mxu0 0
        %2643 = vmatpush1.bf16.msra.mxu0 0
        %2644 = vmatprep.subr.bf16.mxu0 0
        %2645 = vmatpush1.bf16.msra.mxu0 0
        %2646 = vmatprep.subr.bf16.mxu0 0
        %2647 = vmatpush1.bf16.msra.mxu0 0
        %2648 = vmatprep.subr.bf16.mxu0 0
        %2649 = vmatpush1.bf16.msra.mxu0 0
        %2650 = vmatprep.subr.bf16.mxu0 0
        %2651 = vmatpush1.bf16.msra.mxu0 0
        %2652 = vmatprep.subr.bf16.mxu0 0
        %2653 = vmatpush1.bf16.msra.mxu0 %v2634
        %2654 = vmatprep.subr.bf16.mxu0 0
        %2655 = vmatpush1.bf16.msra.mxu0 %v2633
        %2656 = vmatprep.subr.bf16.mxu0 0
        %2657 = vmatpush2.bf16.msra.mxu0 0
        %2658 = vmatprep.subr.bf16.mxu0 0
        %2659 = vmatpush2.bf16.msra.mxu0 0
        %2660 = vmatprep.subr.bf16.mxu0 0
        %2661 = vmatpush2.bf16.msra.mxu0 0
        %2662 = vmatprep.subr.bf16.mxu0 0
        %2663 = vmatpush2.bf16.msra.mxu0 0
        %2664 = vmatprep.subr.bf16.mxu0 0
        %2665 = vmatpush2.bf16.msra.mxu0 0
        %2666 = vmatprep.subr.bf16.mxu0 0
        %2667 = vmatpush2.bf16.msra.mxu0 0
        %2668 = vmatprep.subr.bf16.mxu0 0
        %2669 = vmatpush2.bf16.msra.mxu0 0
        %2670 = vmatprep.subr.bf16.mxu0 0
        %2671 = vmatpush2.bf16.msra.mxu0 0
        %2672 = vmatprep.mubr.bf16.mxu0 0
        %2673 = vmatmul.mubr.bf16.gmra.mxu0 %v2638
        %v2674 = vpop.f32.mrf.mxu0
        %v2675 = vadd.f32 %v2623, %v2674
        %v2676 = vpop.f32.mrf.mxu0
        %v2677 = vpop.f32.mrf.mxu0
        %v2678 = vpop.f32.mrf.mxu0
        %2679 = vdwg.mxu0
        %v2680 = vadd.f32 %v1793, %v2675
        %s2681 = scalar_lea.vmem %s8, 1
        %v2682 = vld [vmem:[%s2681] sm:$0x1]
        %s2683 = scalar_lea.vmem %s9, 1
        %v2684 = vld [vmem:[%s2683] sm:$0x1]
        %v2685 = vsel %vm642, %v2680, 0.0
        %2686 = vadd.xlane.f32.xlu0 %v2685
        %v2687 = vpop.xlane.xlu0 %2686
        %v2688 = vmul.f32 %v2687, %v646
        %v2689 = vmul.f32 %v2680, %v2680
        %v2690 = vsel %vm642, %v2689, 0.0
        %2691 = vadd.xlane.f32.xlu0 %v2690
        %v2692 = vpop.xlane.xlu0 %2691
        %v2693 = vmul.f32 %v2692, %v646
        %v2694 = vmul.f32 %v2688, %v2688
        %v2695 = vsub.f32 %v2693, %v2694
        %v2696 = vmax.f32 %v2695, 0.0
        %v2697 = vsub.f32 %v2680, %v2688
        %v2698 = vadd.f32 %v2696, 1e-12
        %v2699 = vrsqrt.pop %v2698
        %v2700 = vmul.f32 %v2697, %v2699
        %v2702 = vlaneseq
        %v2703 = vshrl.u32 %v2702, 7
        %v2704 = vsub.s32 0, %v2703
        %v2705 = vrot.slane %v2682, %v2704
        %v2707 = vmul.f32 %v2700, %v2705
        %v2709 = vlaneseq
        %v2710 = vshrl.u32 %v2709, 7
        %v2711 = vsub.s32 0, %v2710
        %v2712 = vrot.slane %v2684, %v2711
        %v2714 = vadd.f32 %v2707, %v2712
        %v2715 = vpack.c.bf16 %v2714, %v2714
        %s2716 = scalar_lea.vmem %s10, 16
        %v2717 = vld [vmem:[%s2716] sm:$0xf]
        %v2718 = vld [vmem:[%s2716 + $0x4] sm:$0xf]
        %v2719 = vld [vmem:[%s2716 + $0x8] sm:$0xf]
        %v2720 = vld [vmem:[%s2716 + $0xc] sm:$0xf]
        %s2721 = scalar_lea.vmem %s11, 1
        %v2722 = vld [vmem:[%s2721] sm:$0x1]
        %v2724 = vlaneseq
        %v2725 = vshrl.u32 %v2724, 7
        %v2726 = vsub.s32 0, %v2725
        %v2727 = vrot.slane %v2722, %v2726
        %v2733 = vunpack.c.l.b16 %v2717
        %v2734 = vunpack.c.l.b16 %v2718
        %v2735 = vunpack.c.l.b16 %v2719
        %v2736 = vunpack.c.l.b16 %v2720
        %v2737 = vpack.c.b16 %v2734, %v2733
        %v2738 = vpack.c.b16 %v2736, %v2735
        %v2742 = vsel %vm642, %v2715, 0
        %2744 = vmatprep.subr.bf16.mxu0 0
        %2745 = vmatpush1.bf16.msra.mxu0 0
        %2746 = vmatprep.subr.bf16.mxu0 0
        %2747 = vmatpush1.bf16.msra.mxu0 0
        %2748 = vmatprep.subr.bf16.mxu0 0
        %2749 = vmatpush1.bf16.msra.mxu0 0
        %2750 = vmatprep.subr.bf16.mxu0 0
        %2751 = vmatpush1.bf16.msra.mxu0 0
        %2752 = vmatprep.subr.bf16.mxu0 0
        %2753 = vmatpush1.bf16.msra.mxu0 0
        %2754 = vmatprep.subr.bf16.mxu0 0
        %2755 = vmatpush1.bf16.msra.mxu0 0
        %2756 = vmatprep.subr.bf16.mxu0 0
        %2757 = vmatpush1.bf16.msra.mxu0 %v2738
        %2758 = vmatprep.subr.bf16.mxu0 0
        %2759 = vmatpush1.bf16.msra.mxu0 %v2737
        %2760 = vmatprep.subr.bf16.mxu0 0
        %2761 = vmatpush2.bf16.msra.mxu0 0
        %2762 = vmatprep.subr.bf16.mxu0 0
        %2763 = vmatpush2.bf16.msra.mxu0 0
        %2764 = vmatprep.subr.bf16.mxu0 0
        %2765 = vmatpush2.bf16.msra.mxu0 0
        %2766 = vmatprep.subr.bf16.mxu0 0
        %2767 = vmatpush2.bf16.msra.mxu0 0
        %2768 = vmatprep.subr.bf16.mxu0 0
        %2769 = vmatpush2.bf16.msra.mxu0 0
        %2770 = vmatprep.subr.bf16.mxu0 0
        %2771 = vmatpush2.bf16.msra.mxu0 0
        %2772 = vmatprep.subr.bf16.mxu0 0
        %2773 = vmatpush2.bf16.msra.mxu0 0
        %2774 = vmatprep.subr.bf16.mxu0 0
        %2775 = vmatpush2.bf16.msra.mxu0 0
        %2776 = vmatprep.mubr.bf16.mxu0 0
        %2777 = vmatmul.mubr.bf16.gmra.mxu0 %v2742
        %v2778 = vpop.f32.mrf.mxu0
        %v2779 = vadd.f32 %v2727, %v2778
        %v2780 = vpop.f32.mrf.mxu0
        %v2781 = vpop.f32.mrf.mxu0
        %v2782 = vpop.f32.mrf.mxu0
        %2783 = vdwg.mxu0
        %v2784 = vmul.f32 %v2779, %v2779
        %v2785 = vmul.f32 %v2779, %v2784
        %v2786 = vmul.f32 %v2785, 0.044715
        %v2787 = vadd.f32 %v2779, %v2786
        %v2788 = vmul.f32 %v2787, 0.7978846
        %v2789 = vtanh.pop %v2788
        %v2790 = vadd.f32 %v2789, 1.0
        %v2791 = vmul.f32 %v2790, 0.5
        %v2792 = vmul.f32 %v2779, %v2791
        %v2793 = vpack.c.bf16 %v2792, %v2792
        %s2794 = scalar_lea.vmem %s12, 32
        %v2795 = vld [vmem:[%s2794] sm:$0xf]
        %v2796 = vld [vmem:[%s2794 + $0x4] sm:$0xf]
        %v2797 = vld [vmem:[%s2794 + $0x8] sm:$0xf]
        %v2798 = vld [vmem:[%s2794 + $0xc] sm:$0xf]
        %v2799 = vld [vmem:[%s2794 + $0x10] sm:$0xf]
        %v2800 = vld [vmem:[%s2794 + $0x14] sm:$0xf]
        %v2801 = vld [vmem:[%s2794 + $0x18] sm:$0xf]
        %v2802 = vld [vmem:[%s2794 + $0x1c] sm:$0xf]
        %s2803 = scalar_lea.vmem %s13, 1
        %v2804 = vld [vmem:[%s2803] sm:$0x1]
        %v2806 = vlaneseq
        %v2807 = vshrl.u32 %v2806, 7
        %v2808 = vsub.s32 0, %v2807
        %v2809 = vrot.slane %v2804, %v2808
        %v2819 = vunpack.c.l.b16 %v2795
        %v2820 = vunpack.c.l.b16 %v2796
        %v2821 = vunpack.c.l.b16 %v2797
        %v2822 = vunpack.c.l.b16 %v2798
        %v2823 = vunpack.c.l.b16 %v2799
        %v2824 = vunpack.c.l.b16 %v2800
        %v2825 = vunpack.c.l.b16 %v2801
        %v2826 = vunpack.c.l.b16 %v2802
        %v2827 = vpack.c.b16 %v2820, %v2819
        %v2828 = vpack.c.b16 %v2822, %v2821
        %v2829 = vpack.c.b16 %v2824, %v2823
        %v2830 = vpack.c.b16 %v2826, %v2825
        %v2836 = vsel %vm1717, %v2793, 0
        %2838 = vmatprep.subr.bf16.mxu0 0
        %2839 = vmatpush1.bf16.msra.mxu0 0
        %2840 = vmatprep.subr.bf16.mxu0 0
        %2841 = vmatpush1.bf16.msra.mxu0 0
        %2842 = vmatprep.subr.bf16.mxu0 0
        %2843 = vmatpush1.bf16.msra.mxu0 0
        %2844 = vmatprep.subr.bf16.mxu0 0
        %2845 = vmatpush1.bf16.msra.mxu0 0
        %2846 = vmatprep.subr.bf16.mxu0 0
        %2847 = vmatpush1.bf16.msra.mxu0 %v2830
        %2848 = vmatprep.subr.bf16.mxu0 0
        %2849 = vmatpush1.bf16.msra.mxu0 %v2829
        %2850 = vmatprep.subr.bf16.mxu0 0
        %2851 = vmatpush1.bf16.msra.mxu0 %v2828
        %2852 = vmatprep.subr.bf16.mxu0 0
        %2853 = vmatpush1.bf16.msra.mxu0 %v2827
        %2854 = vmatprep.subr.bf16.mxu0 0
        %2855 = vmatpush2.bf16.msra.mxu0 0
        %2856 = vmatprep.subr.bf16.mxu0 0
        %2857 = vmatpush2.bf16.msra.mxu0 0
        %2858 = vmatprep.subr.bf16.mxu0 0
        %2859 = vmatpush2.bf16.msra.mxu0 0
        %2860 = vmatprep.subr.bf16.mxu0 0
        %2861 = vmatpush2.bf16.msra.mxu0 0
        %2862 = vmatprep.subr.bf16.mxu0 0
        %2863 = vmatpush2.bf16.msra.mxu0 0
        %2864 = vmatprep.subr.bf16.mxu0 0
        %2865 = vmatpush2.bf16.msra.mxu0 0
        %2866 = vmatprep.subr.bf16.mxu0 0
        %2867 = vmatpush2.bf16.msra.mxu0 0
        %2868 = vmatprep.subr.bf16.mxu0 0
        %2869 = vmatpush2.bf16.msra.mxu0 0
        %2870 = vmatprep.mubr.bf16.mxu0 0
        %2871 = vmatmul.mubr.bf16.gmra.mxu0 %v2836
        %v2872 = vpop.f32.mrf.mxu0
        %v2873 = vadd.f32 %v2809, %v2872
        %v2874 = vpop.f32.mrf.mxu0
        %v2875 = vpop.f32.mrf.mxu0
        %v2876 = vpop.f32.mrf.mxu0
        %2877 = vdwg.mxu0
        %v2878 = vadd.f32 %v2714, %v2873
        %s2879 = scalar_lea.vmem %s14, 1
        %v2880 = vld [vmem:[%s2879] sm:$0x1]
        %s2881 = scalar_lea.vmem %s15, 1
        %v2882 = vld [vmem:[%s2881] sm:$0x1]
        %v2883 = vsel %vm642, %v2878, 0.0
        %2884 = vadd.xlane.f32.xlu0 %v2883
        %v2885 = vpop.xlane.xlu0 %2884
        %v2886 = vmul.f32 %v2885, %v646
        %v2887 = vmul.f32 %v2878, %v2878
        %v2888 = vsel %vm642, %v2887, 0.0
        %2889 = vadd.xlane.f32.xlu0 %v2888
        %v2890 = vpop.xlane.xlu0 %2889
        %v2891 = vmul.f32 %v2890, %v646
        %v2892 = vmul.f32 %v2886, %v2886
        %v2893 = vsub.f32 %v2891, %v2892
        %v2894 = vmax.f32 %v2893, 0.0
        %v2895 = vsub.f32 %v2878, %v2886
        %v2896 = vadd.f32 %v2894, 1e-12
        %v2897 = vrsqrt.pop %v2896
        %v2898 = vmul.f32 %v2895, %v2897
        %v2900 = vlaneseq
        %v2901 = vshrl.u32 %v2900, 7
        %v2902 = vsub.s32 0, %v2901
        %v2903 = vrot.slane %v2880, %v2902
        %v2905 = vmul.f32 %v2898, %v2903
        %v2907 = vlaneseq
        %v2908 = vshrl.u32 %v2907, 7
        %v2909 = vsub.s32 0, %v2908
        %v2910 = vrot.slane %v2882, %v2909
        %v2912 = vadd.f32 %v2905, %v2910
        %v2913 = vpack.c.bf16 %v2912, %v2912
        %v2914 = vld [vmem:[%s16] sm:$0xf]
        %v2915 = vld [vmem:[%s16 + $0x4] sm:$0xf]
        %v2916 = vld [vmem:[%s16 + $0x8] sm:$0xf]
        %v2917 = vld [vmem:[%s16 + $0xc] sm:$0xf]
        %v2918 = vld [vmem:[%s17] sm:$0x1]
        %v2923 = vunpack.c.l.b16 %v2914
        %v2924 = vunpack.c.l.b16 %v2915
        %v2925 = vunpack.c.l.b16 %v2916
        %v2926 = vunpack.c.l.b16 %v2917
        %v2927 = vpack.c.b16 %v2924, %v2923
        %v2928 = vpack.c.b16 %v2926, %v2925
        %v2932 = vsel %vm642, %v2913, 0
        %2934 = vmatprep.subr.bf16.mxu0 0
        %2935 = vmatpush1.bf16.msra.mxu0 0
        %2936 = vmatprep.subr.bf16.mxu0 0
        %2937 = vmatpush1.bf16.msra.mxu0 0
        %2938 = vmatprep.subr.bf16.mxu0 0
        %2939 = vmatpush1.bf16.msra.mxu0 0
        %2940 = vmatprep.subr.bf16.mxu0 0
        %2941 = vmatpush1.bf16.msra.mxu0 0
        %2942 = vmatprep.subr.bf16.mxu0 0
        %2943 = vmatpush1.bf16.msra.mxu0 0
        %2944 = vmatprep.subr.bf16.mxu0 0
        %2945 = vmatpush1.bf16.msra.mxu0 0
        %2946 = vmatprep.subr.bf16.mxu0 0
        %2947 = vmatpush1.bf16.msra.mxu0 %v2928
        %2948 = vmatprep.subr.bf16.mxu0 0
        %2949 = vmatpush1.bf16.msra.mxu0 %v2927
        %2950 = vmatprep.subr.bf16.mxu0 0
        %2951 = vmatpush2.bf16.msra.mxu0 0
        %2952 = vmatprep.subr.bf16.mxu0 0
        %2953 = vmatpush2.bf16.msra.mxu0 0
        %2954 = vmatprep.subr.bf16.mxu0 0
        %2955 = vmatpush2.bf16.msra.mxu0 0
        %2956 = vmatprep.subr.bf16.mxu0 0
        %2957 = vmatpush2.bf16.msra.mxu0 0
        %2958 = vmatprep.subr.bf16.mxu0 0
        %2959 = vmatpush2.bf16.msra.mxu0 0
        %2960 = vmatprep.subr.bf16.mxu0 0
        %2961 = vmatpush2.bf16.msra.mxu0 0
        %2962 = vmatprep.subr.bf16.mxu0 0
        %2963 = vmatpush2.bf16.msra.mxu0 0
        %2964 = vmatprep.subr.bf16.mxu0 0
        %2965 = vmatpush2.bf16.msra.mxu0 0
        %2966 = vmatprep.mubr.bf16.mxu0 0
        %2967 = vmatmul.mubr.bf16.gmra.mxu0 %v2932
        %v2968 = vpop.f32.mrf.mxu0
        %v2969 = vadd.f32 %v2918, %v2968
        %v2970 = vpop.f32.mrf.mxu0
        %v2971 = vpop.f32.mrf.mxu0
        %v2972 = vpop.f32.mrf.mxu0
        %2973 = vdwg.mxu0
        %v2974 = vtanh.pop %v2969
        %v2975 = vpack.c.bf16 %v2974, %v2974
        %v2976 = vld [vmem:[%s18] sm:$0xf]
        %v2977 = vld [vmem:[%s18 + $0x4] sm:$0xf]
        %v2978 = vld [vmem:[%s18 + $0x8] sm:$0xf]
        %v2979 = vld [vmem:[%s18 + $0xc] sm:$0xf]
        %v2980 = vld [vmem:[%s19] sm:$0x1]
        %v2985 = vunpack.c.l.b16 %v2976
        %v2986 = vunpack.c.l.b16 %v2977
        %v2987 = vunpack.c.l.b16 %v2978
        %v2988 = vunpack.c.l.b16 %v2979
        %v2989 = vpack.c.b16 %v2986, %v2985
        %v2990 = vpack.c.b16 %v2988, %v2987
        %v2994 = vsel %vm642, %v2975, 0
        %2996 = vmatprep.subr.bf16.mxu0 0
        %2997 = vmatpush1.bf16.msra.mxu0 0
        %2998 = vmatprep.subr.bf16.mxu0 0
        %2999 = vmatpush1.bf16.msra.mxu0 0
        %3000 = vmatprep.subr.bf16.mxu0 0
        %3001 = vmatpush1.bf16.msra.mxu0 0
        %3002 = vmatprep.subr.bf16.mxu0 0
        %3003 = vmatpush1.bf16.msra.mxu0 0
        %3004 = vmatprep.subr.bf16.mxu0 0
        %3005 = vmatpush1.bf16.msra.mxu0 0
        %3006 = vmatprep.subr.bf16.mxu0 0
        %3007 = vmatpush1.bf16.msra.mxu0 0
        %3008 = vmatprep.subr.bf16.mxu0 0
        %3009 = vmatpush1.bf16.msra.mxu0 %v2990
        %3010 = vmatprep.subr.bf16.mxu0 0
        %3011 = vmatpush1.bf16.msra.mxu0 %v2989
        %3012 = vmatprep.subr.bf16.mxu0 0
        %3013 = vmatpush2.bf16.msra.mxu0 0
        %3014 = vmatprep.subr.bf16.mxu0 0
        %3015 = vmatpush2.bf16.msra.mxu0 0
        %3016 = vmatprep.subr.bf16.mxu0 0
        %3017 = vmatpush2.bf16.msra.mxu0 0
        %3018 = vmatprep.subr.bf16.mxu0 0
        %3019 = vmatpush2.bf16.msra.mxu0 0
        %3020 = vmatprep.subr.bf16.mxu0 0
        %3021 = vmatpush2.bf16.msra.mxu0 0
        %3022 = vmatprep.subr.bf16.mxu0 0
        %3023 = vmatpush2.bf16.msra.mxu0 0
        %3024 = vmatprep.subr.bf16.mxu0 0
        %3025 = vmatpush2.bf16.msra.mxu0 0
        %3026 = vmatprep.subr.bf16.mxu0 0
        %3027 = vmatpush2.bf16.msra.mxu0 0
        %3028 = vmatprep.mubr.bf16.mxu0 0
        %3029 = vmatmul.mubr.bf16.gmra.mxu0 %v2994
        %v3030 = vpop.f32.mrf.mxu0
        %v3031 = vadd.f32 %v2980, %v3030
        %v3032 = vpop.f32.mrf.mxu0
        %v3033 = vpop.f32.mrf.mxu0
        %v3034 = vpop.f32.mrf.mxu0
        %3035 = vdwg.mxu0
        %3036 = vst [vmem:[%s630] sm:$0x1] %v3031
        %s3037 = sand.u32 %s472, 1
        %s3038 = scalar_lea.sflag [#allocation3], %s3037
        %s3039 = sand.u32 %s472, 1
        %s3040 = scalar_lea.vmem [#allocation2], %s3039
        // Predicated region
        $region101: #{kobert_forward.1} parent=99 // pred_check
          %p3041 = pneg %p482
        $region102: #{kobert_forward.1} parent=99 // pred_check_branch
          %3043 = sbr.rel (%p3041) target = $region104
        $region103: #{kobert_forward.1} parent=99 // pred_region
          %s3045 = ssub.s32 16, 16
          %3046 = vsyncadd %s3038, %s3045
          %s3047 = smul.addr %s34, 16
          %s3048 = scalar_lea.hbm %s20, %s3047
          %s3050 = sshll.u32 %s3040, 4
          %s3051 = int_to_ptr.vmem [resolvable:$true] %s3050
          %3053 = dma.vmem_to_hbm [thread:$0]  %s3051, 16, %s3048, %s3038
        $region104: #{kobert_forward.1} parent=99 // pred_fallthru
          _
      $region100: #{kobert_forward.1} parent=5 // pred_fallthru
        _
      %p3054 = scmp.le.s32.totalorder 2, %s29
      // Predicated region
      $region105: #{kobert_forward.1} parent=5 // pred_check
        %p3055 = pneg %p3054
      $region106: #{kobert_forward.1} parent=5 // pred_check_branch
        %3057 = sbr.rel (%p3055) target = $region108
      $region107: #{kobert_forward.1} parent=5 // pred_region
        %s3058 = ssub.s32 %s29, 2
        // Predicated region
        $region109: #{kobert_forward.1} parent=107 // pred_check
          %p3059 = pneg %p488
        $region110: #{kobert_forward.1} parent=107 // pred_check_branch
          %3061 = sbr.rel (%p3059) target = $region112
        $region111: #{kobert_forward.1} parent=107 // pred_region
          %s3062 = sand.u32 %s473, 1
          %s3063 = scalar_lea.sflag [#allocation3], %s3062
          %s3064 = sand.u32 %s473, 1
          %s3065 = scalar_lea.vmem [#allocation2], %s3064
          %3066 = dma.done %s3063, 16
        $region112: #{kobert_forward.1} parent=107 // pred_fallthru
          _
      $region108: #{kobert_forward.1} parent=5 // pred_fallthru
        _
    $region6: #{kobert_forward.1} parent=1 // loop_footer
      %s33 = sadd.s32 1, %s29
    $region7: #{kobert_forward.1} parent=1 // loop_footer_branch
      %28 = sbr.rel target = $region3
    $region8: #{kobert_forward.1} parent=1 // loop_exit
      _
    %3067 = vsyncpa [#allocation3], 1
    %s3068 = scalar_lea.sflag [#allocation3], 1
    %3069 = vsyncpa %s3068, 1

</llo_original>
